<compile_context>
chip_gen: v7x
topology: tpu7x:2x2x1
jax: 0.10.0
libtpu: 0.0.40
codegen_flags: <defaults>
</compile_context>

<pallas_src>
import functools

import jax
import jax.numpy as jnp
from jax.experimental import pallas as pl
from jax.experimental.pallas import tpu as pltpu

ALPHA = 0.9          # InvLeakyRelu alpha
LRELU_SLOPE = 0.01   # nn.LeakyReLU default negative_slope


def flow_stack_kernel(an_ld_ref, x_ref, xc_ref, loc_ref, scale_ref,
                      w_in_x_ref, w_in_c_ref, b_in_ref,
                      w_hid_ref, b_hid_ref, w_out_ref, b_out_ref,
                      perm_a_ref, perm_b_ref,
                      xo_ref, ld_ref, *, n_flows, depth, half):
    x = x_ref[...]            # (Bp, C)
    xc = xc_ref[...]          # (Bp, E)
    ld = jnp.zeros((x.shape[0], 1), jnp.float32)

    def fused_mlp(xh, f, k):
        # Fused (s,t) BasicFullyConnectedNet: split input matmul avoids the
        # lane-axis concat([x_half, emb]); hidden/output layers are
        # block-diagonal so one matmul drives both nets.
        a = (jnp.dot(xh, w_in_x_ref[f, k], preferred_element_type=jnp.float32)
             + jnp.dot(xc, w_in_c_ref[f, k], preferred_element_type=jnp.float32)
             + b_in_ref[f, k])
        a = jnp.where(a >= 0.0, a, LRELU_SLOPE * a)
        for d in range(depth):  # static unrolled loop
            a = (jnp.dot(a, w_hid_ref[f, k, d],
                         preferred_element_type=jnp.float32)
                 + b_hid_ref[f, k, d])
            a = jnp.where(a >= 0.0, a, LRELU_SLOPE * a)
        o = (jnp.dot(a, w_out_ref[f, k], preferred_element_type=jnp.float32)
             + b_out_ref[f, k])
        return o[:, :half], o[:, half:]   # s, t

    for f in range(n_flows):  # static unrolled loop over flow blocks
        # --- ActNorm (logdet constant handled via an_ld_ref) ---
        h = scale_ref[f] * (x + loc_ref[f])

        # --- InvLeakyRelu: h * ((h>=0) + (h<0)*alpha); logdet contribution 0 ---
        h = h * jnp.where(h >= 0.0, 1.0, ALPHA)

        # --- ConditionalDoubleVectorCouplingBlock, mode='normal' ---
        x0 = h[:, :half]
        x1 = h[:, half:]

        s, t = fused_mlp(x0, f, 0)
        x1 = x1 * jnp.exp(s) + t
        ld = ld + jnp.sum(s, axis=1, keepdims=True)

        s, t = fused_mlp(x1, f, 1)
        x0 = x0 * jnp.exp(s) + t
        ld = ld + jnp.sum(s, axis=1, keepdims=True)

        # --- Shuffle (half-swap pre-composed into the permutation matrix);
        #     split into two matmuls so no lane-axis concat is needed. ---
        x = (jnp.dot(x0, perm_a_ref[f], preferred_element_type=jnp.float32)
             + jnp.dot(x1, perm_b_ref[f], preferred_element_type=jnp.float32))

    xo_ref[...] = x
    ld_ref[...] = ld + an_ld_ref[0, 0]   # host-precomputed sum(log|scale|)


def conditional_flow_forward(x4d, emb, kparams):
    """x4d: (B, C, 1, 1) float32, emb: (B, E) float32 -> ((B,C,1,1), (B,))."""
    B, C = x4d.shape[0], x4d.shape[1]
    E = emb.shape[1]
    n_flows = kparams["loc"].shape[0]
    half = C // 2
    H2 = kparams["w_in_x"].shape[-1]            # fused hidden width = 2*H
    depth = kparams["w_hid"].shape[2]

    # Pad batch to a multiple of 8 (f32 sublanes) for full vreg / MXU occupancy.
    Bp = max(8, ((B + 7) // 8) * 8)
    x = jnp.zeros((Bp, C), jnp.float32).at[:B].set(
        x4d.reshape(B, C).astype(jnp.float32))
    xc = jnp.zeros((Bp, E), jnp.float32).at[:B].set(emb.astype(jnp.float32))

    kernel = functools.partial(flow_stack_kernel, n_flows=n_flows,
                               depth=depth, half=half)

    # Single grid step; all parameters VMEM-resident for the whole flow stack
    # (a few hundred KB at these sizes -- far below VMEM on v5e/v6e/v7x).
    # TODO(synk): for large production batches on v7x, add a leading "parallel"
    # batch grid axis so both TensorCores are used.
    in_specs = [
        pl.BlockSpec(memory_space=pltpu.MemorySpace.SMEM),            # actnorm logdet const
        pl.BlockSpec((Bp, C), lambda i: (0, 0)),                      # x
        pl.BlockSpec((Bp, E), lambda i: (0, 0)),                      # embedding
        pl.BlockSpec((n_flows, 1, C), lambda i: (0, 0, 0)),           # actnorm loc
        pl.BlockSpec((n_flows, 1, C), lambda i: (0, 0, 0)),           # actnorm scale
        pl.BlockSpec((n_flows, 2, half, H2), lambda i: (0, 0, 0, 0)),         # W_in (x half)
        pl.BlockSpec((n_flows, 2, E, H2), lambda i: (0, 0, 0, 0)),            # W_in (emb)
        pl.BlockSpec((n_flows, 2, 1, H2), lambda i: (0, 0, 0, 0)),            # b_in
        pl.BlockSpec((n_flows, 2, depth, H2, H2), lambda i: (0, 0, 0, 0, 0)), # W_hid
        pl.BlockSpec((n_flows, 2, depth, 1, H2), lambda i: (0, 0, 0, 0, 0)),  # b_hid
        pl.BlockSpec((n_flows, 2, H2, C), lambda i: (0, 0, 0, 0)),            # W_out
        pl.BlockSpec((n_flows, 2, 1, C), lambda i: (0, 0, 0, 0)),             # b_out
        pl.BlockSpec((n_flows, half, C), lambda i: (0, 0, 0)),        # perm rows for x0
        pl.BlockSpec((n_flows, half, C), lambda i: (0, 0, 0)),        # perm rows for x1
    ]

    x_out, ld = pl.pallas_call(
        kernel,
        out_shape=(jax.ShapeDtypeStruct((Bp, C), jnp.float32),
                   jax.ShapeDtypeStruct((Bp, 1), jnp.float32)),
        grid=(1,),
        in_specs=in_specs,
        out_specs=(pl.BlockSpec((Bp, C), lambda i: (0, 0)),
                   pl.BlockSpec((Bp, 1), lambda i: (0, 0))),
        compiler_params=pltpu.CompilerParams(
            dimension_semantics=("arbitrary",)),
    )(kparams["an_ld"], x, xc, kparams["loc"], kparams["scale"],
      kparams["w_in_x"], kparams["w_in_c"], kparams["b_in"],
      kparams["w_hid"], kparams["b_hid"], kparams["w_out"], kparams["b_out"],
      kparams["perm_a"], kparams["perm_b"])

    return x_out[:B].reshape(B, C, 1, 1), ld[:B, 0]


def init_params(key, C, E, H, depth, n_flows):
    """Raw (unfused) parameters, matching the PyTorch module layout."""
    half = C // 2
    dim_in = half + E
    ks = jax.random.split(key, 8 + n_flows)

    def w(k, shape, fan_in):
        return 0.5 * jax.random.normal(k, shape, jnp.float32) / jnp.sqrt(fan_in)

    raw = dict(
        loc=0.1 * jax.random.normal(ks[0], (n_flows, 1, C), jnp.float32),
        scale=1.0 + 0.1 * jax.random.normal(ks[1], (n_flows, 1, C), jnp.float32),
        # 4 nets per flow, stacked in order [s0, s1, t0, t1]
        w_in=w(ks[2], (n_flows, 4, dim_in, H), dim_in),
        b_in=0.01 * jax.random.normal(ks[3], (n_flows, 4, 1, H), jnp.float32),
        w_hid=w(ks[4], (n_flows, 4, depth, H, H), H),
        b_hid=0.01 * jax.random.normal(ks[5], (n_flows, 4, depth, 1, H), jnp.float32),
        w_out=w(ks[6], (n_flows, 4, H, half), H),
        b_out=0.01 * jax.random.normal(ks[7], (n_flows, 4, 1, half), jnp.float32),
    )
    perm_idx = jnp.stack(
        [jax.random.permutation(ks[8 + f], C) for f in range(n_flows)])
    return raw, perm_idx


def fuse_params(raw, perm_idx, C, E, H, depth, n_flows):
    """Build kernel-ready fused parameters (block-diagonal s/t nets, split
    input weights, swap-composed permutation, host-side ActNorm logdet)."""
    half = C // 2
    w_in_x, w_in_c, b_in = [], [], []
    w_hid, b_hid, w_out, b_out = [], [], [], []
    for k in range(2):  # inner coupling step k pairs s-net k with t-net k+2
        ws, wt = raw["w_in"][:, k], raw["w_in"][:, k + 2]        # (F, dim_in, H)
        w_cat = jnp.concatenate([ws, wt], axis=-1)               # (F, dim_in, 2H)
        w_in_x.append(w_cat[:, :half, :])                        # (F, half, 2H)
        w_in_c.append(w_cat[:, half:, :])                        # (F, E, 2H)
        b_in.append(jnp.concatenate(
            [raw["b_in"][:, k], raw["b_in"][:, k + 2]], axis=-1))

        hs, ht = raw["w_hid"][:, k], raw["w_hid"][:, k + 2]      # (F, depth, H, H)
        z = jnp.zeros_like(hs)
        w_hid.append(jnp.concatenate(
            [jnp.concatenate([hs, z], axis=-1),
             jnp.concatenate([z, ht], axis=-1)], axis=-2))       # (F, depth, 2H, 2H)
        b_hid.append(jnp.concatenate(
            [raw["b_hid"][:, k], raw["b_hid"][:, k + 2]], axis=-1))

        os_, ot = raw["w_out"][:, k], raw["w_out"][:, k + 2]     # (F, H, half)
        zo = jnp.zeros_like(os_)
        w_out.append(jnp.concatenate(
            [jnp.concatenate([os_, zo], axis=-1),
             jnp.concatenate([zo, ot], axis=-1)], axis=-2))      # (F, 2H, 2*half)
        b_out.append(jnp.concatenate(
            [raw["b_out"][:, k], raw["b_out"][:, k + 2]], axis=-1))

    # Permutation composed with the [x1, x0] half swap:
    #   result[:, k] = [x0|x1][:, (perm_idx[k] + half) % C]
    comb_idx = (perm_idx + half) % C
    eye = jnp.eye(C, dtype=jnp.float32)
    M = jnp.stack([eye[comb_idx[f]].T for f in range(n_flows)])  # (F, C, C)

    return dict(
        an_ld=jnp.sum(jnp.log(jnp.abs(raw["scale"]))).reshape(1, 1)
              .astype(jnp.float32),
        loc=raw["loc"], scale=raw["scale"],
        w_in_x=jnp.stack(w_in_x, axis=1),   # (F, 2, half, 2H)
        w_in_c=jnp.stack(w_in_c, axis=1),   # (F, 2, E, 2H)
        b_in=jnp.stack(b_in, axis=1),       # (F, 2, 1, 2H)
        w_hid=jnp.stack(w_hid, axis=1),     # (F, 2, depth, 2H, 2H)
        b_hid=jnp.stack(b_hid, axis=1),     # (F, 2, depth, 1, 2H)
        w_out=jnp.stack(w_out, axis=1),     # (F, 2, 2H, C)
        b_out=jnp.stack(b_out, axis=1),     # (F, 2, 1, C)
        perm_a=M[:, :half, :],              # (F, half, C)
        perm_b=M[:, half:, :],              # (F, half, C)
    )


def reference_forward(x4d, emb, raw, perm_idx, depth):
    """Pure-JAX reference of the PyTorch forward pass (for validation)."""
    B, C = x4d.shape[0], x4d.shape[1]
    half = C // 2
    n_flows = raw["loc"].shape[0]
    x = x4d.reshape(B, C).astype(jnp.float32)
    xc = emb.astype(jnp.float32)
    logdet = jnp.zeros((B,), jnp.float32)

    def mlp(ci, f, nid):
        a = ci @ raw["w_in"][f, nid] + raw["b_in"][f, nid]
        a = jnp.where(a >= 0, a, LRELU_SLOPE * a)
        for d in range(depth):
            a = a @ raw["w_hid"][f, nid, d] + raw["b_hid"][f, nid, d]
            a = jnp.where(a >= 0, a, LRELU_SLOPE * a)
        return a @ raw["w_out"][f, nid] + raw["b_out"][f, nid]

    for f in range(n_flows):
        scale, loc = raw["scale"][f], raw["loc"][f]
        h = scale * (x + loc)
        logdet = logdet + jnp.sum(jnp.log(jnp.abs(scale)))
        # InvLeakyRelu forward: scaling = (h>=0) + (h<0)*alpha; logdet += 0
        h = h * jnp.where(h >= 0, 1.0, ALPHA)
        x0, x1 = h[:, :half], h[:, half:]
        ci = jnp.concatenate([x0, xc], axis=1)
        s, t = mlp(ci, f, 0), mlp(ci, f, 2)
        x1 = x1 * jnp.exp(s) + t
        logdet = logdet + jnp.sum(s, axis=1)
        ci = jnp.concatenate([x1, xc], axis=1)
        s, t = mlp(ci, f, 1), mlp(ci, f, 3)
        x0 = x0 * jnp.exp(s) + t
        logdet = logdet + jnp.sum(s, axis=1)
        x = jnp.concatenate([x1, x0], axis=1)
        x = x[:, perm_idx[f]]
    return x.reshape(B, C, 1, 1), logdet


if __name__ == "__main__":
    # Small config: in_channels=16, embedding_dim=8, hidden_dim=32,
    # hidden_depth=2, n_flows=2, batch=2.
    B, C, E, H, depth, n_flows = 2, 16, 8, 32, 2, 2

    key = jax.random.PRNGKey(0)
    kp, kx, ke = jax.random.split(key, 3)
    raw, perm_idx = init_params(kp, C, E, H, depth, n_flows)
    kparams = fuse_params(raw, perm_idx, C, E, H, depth, n_flows)

    x = jax.random.normal(kx, (B, C, 1, 1), jnp.float32)
    emb = jax.random.normal(ke, (B, E), jnp.float32)

    out, logdet = conditional_flow_forward(x, emb, kparams)
    out, logdet = jax.block_until_ready((out, logdet))

    ref_out, ref_ld = reference_forward(x, emb, raw, perm_idx, depth)
    assert out.shape == (B, C, 1, 1) and logdet.shape == (B,)
    assert jnp.allclose(out, ref_out, rtol=1e-4, atol=1e-4), "output mismatch"
    assert jnp.allclose(logdet, ref_ld, rtol=1e-4, atol=1e-4), "logdet mismatch"

    print("KERNEL_OK")
</pallas_src>

<mosaic_0001>
module attributes {stable_mosaic.version = 11 : i64} {
  func.func @flow_stack_kernel(%arg0: i32, %arg1: memref<1x1xf32, #tpu.memory_space<smem>>, %arg2: memref<8x16xf32, #tpu.memory_space<vmem>>, %arg3: memref<8x8xf32, #tpu.memory_space<vmem>>, %arg4: memref<2x1x16xf32, #tpu.memory_space<vmem>>, %arg5: memref<2x1x16xf32, #tpu.memory_space<vmem>>, %arg6: memref<2x2x8x64xf32, #tpu.memory_space<vmem>>, %arg7: memref<2x2x8x64xf32, #tpu.memory_space<vmem>>, %arg8: memref<2x2x1x64xf32, #tpu.memory_space<vmem>>, %arg9: memref<2x2x2x64x64xf32, #tpu.memory_space<vmem>>, %arg10: memref<2x2x2x1x64xf32, #tpu.memory_space<vmem>>, %arg11: memref<2x2x64x16xf32, #tpu.memory_space<vmem>>, %arg12: memref<2x2x1x16xf32, #tpu.memory_space<vmem>>, %arg13: memref<2x8x16xf32, #tpu.memory_space<vmem>>, %arg14: memref<2x8x16xf32, #tpu.memory_space<vmem>>, %arg15: memref<8x16xf32, #tpu.memory_space<vmem>>, %arg16: memref<8x1xf32, #tpu.memory_space<vmem>>) attributes {dimension_semantics = [#tpu.dimension_semantics<arbitrary>], iteration_bounds = array<i64: 1>, scalar_prefetch = 0 : i64, scratch_operands = 0 : i64, tpu.core_type = #tpu.core_type<tc>, window_params = [{transform_indices = @transform_0, window_bounds = array<i64: 1, 1>}, {pipeline_mode = #tpu.pipeline_mode<synchronous>, transform_indices = @transform_1, window_bounds = array<i64: 8, 16>}, {pipeline_mode = #tpu.pipeline_mode<synchronous>, transform_indices = @transform_2, window_bounds = array<i64: 8, 8>}, {pipeline_mode = #tpu.pipeline_mode<synchronous>, transform_indices = @transform_3, window_bounds = array<i64: 2, 1, 16>}, {pipeline_mode = #tpu.pipeline_mode<synchronous>, transform_indices = @transform_4, window_bounds = array<i64: 2, 1, 16>}, {pipeline_mode = #tpu.pipeline_mode<synchronous>, transform_indices = @transform_5, window_bounds = array<i64: 2, 2, 8, 64>}, {pipeline_mode = #tpu.pipeline_mode<synchronous>, transform_indices = @transform_6, window_bounds = array<i64: 2, 2, 8, 64>}, {pipeline_mode = #tpu.pipeline_mode<synchronous>, transform_indices = @transform_7, window_bounds = array<i64: 2, 2, 1, 64>}, {pipeline_mode = #tpu.pipeline_mode<synchronous>, transform_indices = @transform_8, window_bounds = array<i64: 2, 2, 2, 64, 64>}, {pipeline_mode = #tpu.pipeline_mode<synchronous>, transform_indices = @transform_9, window_bounds = array<i64: 2, 2, 2, 1, 64>}, {pipeline_mode = #tpu.pipeline_mode<synchronous>, transform_indices = @transform_10, window_bounds = array<i64: 2, 2, 64, 16>}, {pipeline_mode = #tpu.pipeline_mode<synchronous>, transform_indices = @transform_11, window_bounds = array<i64: 2, 2, 1, 16>}, {pipeline_mode = #tpu.pipeline_mode<synchronous>, transform_indices = @transform_12, window_bounds = array<i64: 2, 8, 16>}, {pipeline_mode = #tpu.pipeline_mode<synchronous>, transform_indices = @transform_13, window_bounds = array<i64: 2, 8, 16>}, {pipeline_mode = #tpu.pipeline_mode<synchronous>, transform_indices = @transform_14, window_bounds = array<i64: 8, 16>}, {pipeline_mode = #tpu.pipeline_mode<synchronous>, transform_indices = @transform_15, window_bounds = array<i64: 8, 1>}]} {
    %c0 = arith.constant 0 : index
    %c0_0 = arith.constant 0 : index
    %0 = vector.load %arg2[%c0, %c0_0] : memref<8x16xf32, #tpu.memory_space<vmem>>, vector<8x16xf32>
    %c0_1 = arith.constant 0 : index
    %c0_2 = arith.constant 0 : index
    %1 = vector.load %arg3[%c0_1, %c0_2] : memref<8x8xf32, #tpu.memory_space<vmem>>, vector<8x8xf32>
    %cst = arith.constant 0.000000e+00 : f32
    %2 = vector.broadcast %cst : f32 to vector<8x1xf32>
    %c0_3 = arith.constant 0 : index
    %c0_4 = arith.constant 0 : index
    %c0_5 = arith.constant 0 : index
    %3 = vector.load %arg5[%c0_3, %c0_4, %c0_5] : memref<2x1x16xf32, #tpu.memory_space<vmem>>, vector<1x1x16xf32>
    %4 = vector.shape_cast %3 : vector<1x1x16xf32> to vector<1x16xf32>
    %c0_6 = arith.constant 0 : index
    %c0_7 = arith.constant 0 : index
    %c0_8 = arith.constant 0 : index
    %5 = vector.load %arg4[%c0_6, %c0_7, %c0_8] : memref<2x1x16xf32, #tpu.memory_space<vmem>>, vector<1x1x16xf32>
    %6 = vector.shape_cast %5 : vector<1x1x16xf32> to vector<1x16xf32>
    %7 = vector.broadcast %6 : vector<1x16xf32> to vector<8x16xf32>
    %8 = arith.addf %0, %7 : vector<8x16xf32>
    %9 = vector.broadcast %4 : vector<1x16xf32> to vector<8x16xf32>
    %10 = arith.mulf %9, %8 : vector<8x16xf32>
    %cst_9 = arith.constant 0.000000e+00 : f32
    %11 = vector.broadcast %cst_9 : f32 to vector<8x16xf32>
    %12 = arith.cmpf oge, %10, %11 : vector<8x16xf32>
    %cst_10 = arith.constant 1.000000e+00 : f32
    %cst_11 = arith.constant 0.899999976 : f32
    %13 = vector.broadcast %cst_10 : f32 to vector<8x16xf32>
    %14 = vector.broadcast %cst_11 : f32 to vector<8x16xf32>
    %15 = arith.select %12, %13, %14 : vector<8x16xi1>, vector<8x16xf32>
    %16 = arith.mulf %10, %15 : vector<8x16xf32>
    %17 = vector.extract_strided_slice %16 {offsets = [0, 0], sizes = [8, 8], strides = [1, 1]} : vector<8x16xf32> to vector<8x8xf32>
    %18 = vector.extract_strided_slice %16 {offsets = [0, 8], sizes = [8, 8], strides = [1, 1]} : vector<8x16xf32> to vector<8x8xf32>
    %c0_12 = arith.constant 0 : index
    %c0_13 = arith.constant 0 : index
    %c0_14 = arith.constant 0 : index
    %c0_15 = arith.constant 0 : index
    %19 = vector.load %arg6[%c0_12, %c0_13, %c0_14, %c0_15] : memref<2x2x8x64xf32, #tpu.memory_space<vmem>>, vector<1x1x8x64xf32>
    %20 = vector.shape_cast %19 : vector<1x1x8x64xf32> to vector<8x64xf32>
    %cst_16 = arith.constant dense<0.000000e+00> : vector<8x64xf32>
    %21 = tpu.matmul %17, %20, %cst_16 {dimension_numbers = #tpu.dot_dimension_numbers<[1], [0], [0], [1], [0, 0, 1, 1], [], []>} : vector<8x8xf32>, vector<8x64xf32>, vector<8x64xf32> -> vector<8x64xf32>
    %c0_17 = arith.constant 0 : index
    %c0_18 = arith.constant 0 : index
    %c0_19 = arith.constant 0 : index
    %c0_20 = arith.constant 0 : index
    %22 = vector.load %arg7[%c0_17, %c0_18, %c0_19, %c0_20] : memref<2x2x8x64xf32, #tpu.memory_space<vmem>>, vector<1x1x8x64xf32>
    %23 = vector.shape_cast %22 : vector<1x1x8x64xf32> to vector<8x64xf32>
    %cst_21 = arith.constant dense<0.000000e+00> : vector<8x64xf32>
    %24 = tpu.matmul %1, %23, %cst_21 {dimension_numbers = #tpu.dot_dimension_numbers<[1], [0], [0], [1], [0, 0, 1, 1], [], []>} : vector<8x8xf32>, vector<8x64xf32>, vector<8x64xf32> -> vector<8x64xf32>
    %25 = arith.addf %21, %24 : vector<8x64xf32>
    %c0_22 = arith.constant 0 : index
    %c0_23 = arith.constant 0 : index
    %c0_24 = arith.constant 0 : index
    %c0_25 = arith.constant 0 : index
    %26 = vector.load %arg8[%c0_22, %c0_23, %c0_24, %c0_25] : memref<2x2x1x64xf32, #tpu.memory_space<vmem>>, vector<1x1x1x64xf32>
    %27 = vector.shape_cast %26 : vector<1x1x1x64xf32> to vector<1x64xf32>
    %28 = vector.broadcast %27 : vector<1x64xf32> to vector<8x64xf32>
    %29 = arith.addf %25, %28 : vector<8x64xf32>
    %cst_26 = arith.constant 0.000000e+00 : f32
    %30 = vector.broadcast %cst_26 : f32 to vector<8x64xf32>
    %31 = arith.cmpf oge, %29, %30 : vector<8x64xf32>
    %cst_27 = arith.constant 0.00999999977 : f32
    %32 = vector.broadcast %cst_27 : f32 to vector<8x64xf32>
    %33 = arith.mulf %32, %29 : vector<8x64xf32>
    %34 = arith.select %31, %29, %33 : vector<8x64xi1>, vector<8x64xf32>
    %c0_28 = arith.constant 0 : index
    %c0_29 = arith.constant 0 : index
    %c0_30 = arith.constant 0 : index
    %c0_31 = arith.constant 0 : index
    %c0_32 = arith.constant 0 : index
    %35 = vector.load %arg9[%c0_28, %c0_29, %c0_30, %c0_31, %c0_32] : memref<2x2x2x64x64xf32, #tpu.memory_space<vmem>>, vector<1x1x1x64x64xf32>
    %36 = vector.shape_cast %35 : vector<1x1x1x64x64xf32> to vector<64x64xf32>
    %cst_33 = arith.constant dense<0.000000e+00> : vector<8x64xf32>
    %37 = tpu.matmul %34, %36, %cst_33 {dimension_numbers = #tpu.dot_dimension_numbers<[1], [0], [0], [1], [0, 0, 1, 1], [], []>} : vector<8x64xf32>, vector<64x64xf32>, vector<8x64xf32> -> vector<8x64xf32>
    %c0_34 = arith.constant 0 : index
    %c0_35 = arith.constant 0 : index
    %c0_36 = arith.constant 0 : index
    %c0_37 = arith.constant 0 : index
    %c0_38 = arith.constant 0 : index
    %38 = vector.load %arg10[%c0_34, %c0_35, %c0_36, %c0_37, %c0_38] : memref<2x2x2x1x64xf32, #tpu.memory_space<vmem>>, vector<1x1x1x1x64xf32>
    %39 = vector.shape_cast %38 : vector<1x1x1x1x64xf32> to vector<1x64xf32>
    %40 = vector.broadcast %39 : vector<1x64xf32> to vector<8x64xf32>
    %41 = arith.addf %37, %40 : vector<8x64xf32>
    %cst_39 = arith.constant 0.000000e+00 : f32
    %42 = vector.broadcast %cst_39 : f32 to vector<8x64xf32>
    %43 = arith.cmpf oge, %41, %42 : vector<8x64xf32>
    %cst_40 = arith.constant 0.00999999977 : f32
    %44 = vector.broadcast %cst_40 : f32 to vector<8x64xf32>
    %45 = arith.mulf %44, %41 : vector<8x64xf32>
    %46 = arith.select %43, %41, %45 : vector<8x64xi1>, vector<8x64xf32>
    %c0_41 = arith.constant 0 : index
    %c0_42 = arith.constant 0 : index
    %c1 = arith.constant 1 : index
    %c0_43 = arith.constant 0 : index
    %c0_44 = arith.constant 0 : index
    %47 = vector.load %arg9[%c0_41, %c0_42, %c1, %c0_43, %c0_44] : memref<2x2x2x64x64xf32, #tpu.memory_space<vmem>>, vector<1x1x1x64x64xf32>
    %48 = vector.shape_cast %47 : vector<1x1x1x64x64xf32> to vector<64x64xf32>
    %cst_45 = arith.constant dense<0.000000e+00> : vector<8x64xf32>
    %49 = tpu.matmul %46, %48, %cst_45 {dimension_numbers = #tpu.dot_dimension_numbers<[1], [0], [0], [1], [0, 0, 1, 1], [], []>} : vector<8x64xf32>, vector<64x64xf32>, vector<8x64xf32> -> vector<8x64xf32>
    %c0_46 = arith.constant 0 : index
    %c0_47 = arith.constant 0 : index
    %c1_48 = arith.constant 1 : index
    %c0_49 = arith.constant 0 : index
    %c0_50 = arith.constant 0 : index
    %50 = vector.load %arg10[%c0_46, %c0_47, %c1_48, %c0_49, %c0_50] : memref<2x2x2x1x64xf32, #tpu.memory_space<vmem>>, vector<1x1x1x1x64xf32>
    %51 = vector.shape_cast %50 : vector<1x1x1x1x64xf32> to vector<1x64xf32>
    %52 = vector.broadcast %51 : vector<1x64xf32> to vector<8x64xf32>
    %53 = arith.addf %49, %52 : vector<8x64xf32>
    %cst_51 = arith.constant 0.000000e+00 : f32
    %54 = vector.broadcast %cst_51 : f32 to vector<8x64xf32>
    %55 = arith.cmpf oge, %53, %54 : vector<8x64xf32>
    %cst_52 = arith.constant 0.00999999977 : f32
    %56 = vector.broadcast %cst_52 : f32 to vector<8x64xf32>
    %57 = arith.mulf %56, %53 : vector<8x64xf32>
    %58 = arith.select %55, %53, %57 : vector<8x64xi1>, vector<8x64xf32>
    %c0_53 = arith.constant 0 : index
    %c0_54 = arith.constant 0 : index
    %c0_55 = arith.constant 0 : index
    %c0_56 = arith.constant 0 : index
    %59 = vector.load %arg11[%c0_53, %c0_54, %c0_55, %c0_56] : memref<2x2x64x16xf32, #tpu.memory_space<vmem>>, vector<1x1x64x16xf32>
    %60 = vector.shape_cast %59 : vector<1x1x64x16xf32> to vector<64x16xf32>
    %cst_57 = arith.constant dense<0.000000e+00> : vector<8x16xf32>
    %61 = tpu.matmul %58, %60, %cst_57 {dimension_numbers = #tpu.dot_dimension_numbers<[1], [0], [0], [1], [0, 0, 1, 1], [], []>} : vector<8x64xf32>, vector<64x16xf32>, vector<8x16xf32> -> vector<8x16xf32>
    %c0_58 = arith.constant 0 : index
    %c0_59 = arith.constant 0 : index
    %c0_60 = arith.constant 0 : index
    %c0_61 = arith.constant 0 : index
    %62 = vector.load %arg12[%c0_58, %c0_59, %c0_60, %c0_61] : memref<2x2x1x16xf32, #tpu.memory_space<vmem>>, vector<1x1x1x16xf32>
    %63 = vector.shape_cast %62 : vector<1x1x1x16xf32> to vector<1x16xf32>
    %64 = vector.broadcast %63 : vector<1x16xf32> to vector<8x16xf32>
    %65 = arith.addf %61, %64 : vector<8x16xf32>
    %66 = vector.extract_strided_slice %65 {offsets = [0, 0], sizes = [8, 8], strides = [1, 1]} : vector<8x16xf32> to vector<8x8xf32>
    %67 = vector.extract_strided_slice %65 {offsets = [0, 8], sizes = [8, 8], strides = [1, 1]} : vector<8x16xf32> to vector<8x8xf32>
    %68 = math.exp %66 : vector<8x8xf32>
    %69 = arith.mulf %18, %68 : vector<8x8xf32>
    %70 = arith.addf %69, %67 : vector<8x8xf32>
    %cst_62 = arith.constant dense<0.000000e+00> : vector<8xf32>
    %71 = vector.multi_reduction <add>, %66, %cst_62 [1] : vector<8x8xf32> to vector<8xf32>
    %72 = vector.shape_cast %71 : vector<8xf32> to vector<8x1xf32>
    %73 = arith.addf %2, %72 : vector<8x1xf32>
    %c0_63 = arith.constant 0 : index
    %c1_64 = arith.constant 1 : index
    %c0_65 = arith.constant 0 : index
    %c0_66 = arith.constant 0 : index
    %74 = vector.load %arg6[%c0_63, %c1_64, %c0_65, %c0_66] : memref<2x2x8x64xf32, #tpu.memory_space<vmem>>, vector<1x1x8x64xf32>
    %75 = vector.shape_cast %74 : vector<1x1x8x64xf32> to vector<8x64xf32>
    %cst_67 = arith.constant dense<0.000000e+00> : vector<8x64xf32>
    %76 = tpu.matmul %70, %75, %cst_67 {dimension_numbers = #tpu.dot_dimension_numbers<[1], [0], [0], [1], [0, 0, 1, 1], [], []>} : vector<8x8xf32>, vector<8x64xf32>, vector<8x64xf32> -> vector<8x64xf32>
    %c0_68 = arith.constant 0 : index
    %c1_69 = arith.constant 1 : index
    %c0_70 = arith.constant 0 : index
    %c0_71 = arith.constant 0 : index
    %77 = vector.load %arg7[%c0_68, %c1_69, %c0_70, %c0_71] : memref<2x2x8x64xf32, #tpu.memory_space<vmem>>, vector<1x1x8x64xf32>
    %78 = vector.shape_cast %77 : vector<1x1x8x64xf32> to vector<8x64xf32>
    %cst_72 = arith.constant dense<0.000000e+00> : vector<8x64xf32>
    %79 = tpu.matmul %1, %78, %cst_72 {dimension_numbers = #tpu.dot_dimension_numbers<[1], [0], [0], [1], [0, 0, 1, 1], [], []>} : vector<8x8xf32>, vector<8x64xf32>, vector<8x64xf32> -> vector<8x64xf32>
    %80 = arith.addf %76, %79 : vector<8x64xf32>
    %c0_73 = arith.constant 0 : index
    %c1_74 = arith.constant 1 : index
    %c0_75 = arith.constant 0 : index
    %c0_76 = arith.constant 0 : index
    %81 = vector.load %arg8[%c0_73, %c1_74, %c0_75, %c0_76] : memref<2x2x1x64xf32, #tpu.memory_space<vmem>>, vector<1x1x1x64xf32>
    %82 = vector.shape_cast %81 : vector<1x1x1x64xf32> to vector<1x64xf32>
    %83 = vector.broadcast %82 : vector<1x64xf32> to vector<8x64xf32>
    %84 = arith.addf %80, %83 : vector<8x64xf32>
    %cst_77 = arith.constant 0.000000e+00 : f32
    %85 = vector.broadcast %cst_77 : f32 to vector<8x64xf32>
    %86 = arith.cmpf oge, %84, %85 : vector<8x64xf32>
    %cst_78 = arith.constant 0.00999999977 : f32
    %87 = vector.broadcast %cst_78 : f32 to vector<8x64xf32>
    %88 = arith.mulf %87, %84 : vector<8x64xf32>
    %89 = arith.select %86, %84, %88 : vector<8x64xi1>, vector<8x64xf32>
    %c0_79 = arith.constant 0 : index
    %c1_80 = arith.constant 1 : index
    %c0_81 = arith.constant 0 : index
    %c0_82 = arith.constant 0 : index
    %c0_83 = arith.constant 0 : index
    %90 = vector.load %arg9[%c0_79, %c1_80, %c0_81, %c0_82, %c0_83] : memref<2x2x2x64x64xf32, #tpu.memory_space<vmem>>, vector<1x1x1x64x64xf32>
    %91 = vector.shape_cast %90 : vector<1x1x1x64x64xf32> to vector<64x64xf32>
    %cst_84 = arith.constant dense<0.000000e+00> : vector<8x64xf32>
    %92 = tpu.matmul %89, %91, %cst_84 {dimension_numbers = #tpu.dot_dimension_numbers<[1], [0], [0], [1], [0, 0, 1, 1], [], []>} : vector<8x64xf32>, vector<64x64xf32>, vector<8x64xf32> -> vector<8x64xf32>
    %c0_85 = arith.constant 0 : index
    %c1_86 = arith.constant 1 : index
    %c0_87 = arith.constant 0 : index
    %c0_88 = arith.constant 0 : index
    %c0_89 = arith.constant 0 : index
    %93 = vector.load %arg10[%c0_85, %c1_86, %c0_87, %c0_88, %c0_89] : memref<2x2x2x1x64xf32, #tpu.memory_space<vmem>>, vector<1x1x1x1x64xf32>
    %94 = vector.shape_cast %93 : vector<1x1x1x1x64xf32> to vector<1x64xf32>
    %95 = vector.broadcast %94 : vector<1x64xf32> to vector<8x64xf32>
    %96 = arith.addf %92, %95 : vector<8x64xf32>
    %cst_90 = arith.constant 0.000000e+00 : f32
    %97 = vector.broadcast %cst_90 : f32 to vector<8x64xf32>
    %98 = arith.cmpf oge, %96, %97 : vector<8x64xf32>
    %cst_91 = arith.constant 0.00999999977 : f32
    %99 = vector.broadcast %cst_91 : f32 to vector<8x64xf32>
    %100 = arith.mulf %99, %96 : vector<8x64xf32>
    %101 = arith.select %98, %96, %100 : vector<8x64xi1>, vector<8x64xf32>
    %c0_92 = arith.constant 0 : index
    %c1_93 = arith.constant 1 : index
    %c1_94 = arith.constant 1 : index
    %c0_95 = arith.constant 0 : index
    %c0_96 = arith.constant 0 : index
    %102 = vector.load %arg9[%c0_92, %c1_93, %c1_94, %c0_95, %c0_96] : memref<2x2x2x64x64xf32, #tpu.memory_space<vmem>>, vector<1x1x1x64x64xf32>
    %103 = vector.shape_cast %102 : vector<1x1x1x64x64xf32> to vector<64x64xf32>
    %cst_97 = arith.constant dense<0.000000e+00> : vector<8x64xf32>
    %104 = tpu.matmul %101, %103, %cst_97 {dimension_numbers = #tpu.dot_dimension_numbers<[1], [0], [0], [1], [0, 0, 1, 1], [], []>} : vector<8x64xf32>, vector<64x64xf32>, vector<8x64xf32> -> vector<8x64xf32>
    %c0_98 = arith.constant 0 : index
    %c1_99 = arith.constant 1 : index
    %c1_100 = arith.constant 1 : index
    %c0_101 = arith.constant 0 : index
    %c0_102 = arith.constant 0 : index
    %105 = vector.load %arg10[%c0_98, %c1_99, %c1_100, %c0_101, %c0_102] : memref<2x2x2x1x64xf32, #tpu.memory_space<vmem>>, vector<1x1x1x1x64xf32>
    %106 = vector.shape_cast %105 : vector<1x1x1x1x64xf32> to vector<1x64xf32>
    %107 = vector.broadcast %106 : vector<1x64xf32> to vector<8x64xf32>
    %108 = arith.addf %104, %107 : vector<8x64xf32>
    %cst_103 = arith.constant 0.000000e+00 : f32
    %109 = vector.broadcast %cst_103 : f32 to vector<8x64xf32>
    %110 = arith.cmpf oge, %108, %109 : vector<8x64xf32>
    %cst_104 = arith.constant 0.00999999977 : f32
    %111 = vector.broadcast %cst_104 : f32 to vector<8x64xf32>
    %112 = arith.mulf %111, %108 : vector<8x64xf32>
    %113 = arith.select %110, %108, %112 : vector<8x64xi1>, vector<8x64xf32>
    %c0_105 = arith.constant 0 : index
    %c1_106 = arith.constant 1 : index
    %c0_107 = arith.constant 0 : index
    %c0_108 = arith.constant 0 : index
    %114 = vector.load %arg11[%c0_105, %c1_106, %c0_107, %c0_108] : memref<2x2x64x16xf32, #tpu.memory_space<vmem>>, vector<1x1x64x16xf32>
    %115 = vector.shape_cast %114 : vector<1x1x64x16xf32> to vector<64x16xf32>
    %cst_109 = arith.constant dense<0.000000e+00> : vector<8x16xf32>
    %116 = tpu.matmul %113, %115, %cst_109 {dimension_numbers = #tpu.dot_dimension_numbers<[1], [0], [0], [1], [0, 0, 1, 1], [], []>} : vector<8x64xf32>, vector<64x16xf32>, vector<8x16xf32> -> vector<8x16xf32>
    %c0_110 = arith.constant 0 : index
    %c1_111 = arith.constant 1 : index
    %c0_112 = arith.constant 0 : index
    %c0_113 = arith.constant 0 : index
    %117 = vector.load %arg12[%c0_110, %c1_111, %c0_112, %c0_113] : memref<2x2x1x16xf32, #tpu.memory_space<vmem>>, vector<1x1x1x16xf32>
    %118 = vector.shape_cast %117 : vector<1x1x1x16xf32> to vector<1x16xf32>
    %119 = vector.broadcast %118 : vector<1x16xf32> to vector<8x16xf32>
    %120 = arith.addf %116, %119 : vector<8x16xf32>
    %121 = vector.extract_strided_slice %120 {offsets = [0, 0], sizes = [8, 8], strides = [1, 1]} : vector<8x16xf32> to vector<8x8xf32>
    %122 = vector.extract_strided_slice %120 {offsets = [0, 8], sizes = [8, 8], strides = [1, 1]} : vector<8x16xf32> to vector<8x8xf32>
    %123 = math.exp %121 : vector<8x8xf32>
    %124 = arith.mulf %17, %123 : vector<8x8xf32>
    %125 = arith.addf %124, %122 : vector<8x8xf32>
    %cst_114 = arith.constant dense<0.000000e+00> : vector<8xf32>
    %126 = vector.multi_reduction <add>, %121, %cst_114 [1] : vector<8x8xf32> to vector<8xf32>
    %127 = vector.shape_cast %126 : vector<8xf32> to vector<8x1xf32>
    %128 = arith.addf %73, %127 : vector<8x1xf32>
    %c0_115 = arith.constant 0 : index
    %c0_116 = arith.constant 0 : index
    %c0_117 = arith.constant 0 : index
    %129 = vector.load %arg13[%c0_115, %c0_116, %c0_117] : memref<2x8x16xf32, #tpu.memory_space<vmem>>, vector<1x8x16xf32>
    %130 = vector.shape_cast %129 : vector<1x8x16xf32> to vector<8x16xf32>
    %cst_118 = arith.constant dense<0.000000e+00> : vector<8x16xf32>
    %131 = tpu.matmul %125, %130, %cst_118 {dimension_numbers = #tpu.dot_dimension_numbers<[1], [0], [0], [1], [0, 0, 1, 1], [], []>} : vector<8x8xf32>, vector<8x16xf32>, vector<8x16xf32> -> vector<8x16xf32>
    %c0_119 = arith.constant 0 : index
    %c0_120 = arith.constant 0 : index
    %c0_121 = arith.constant 0 : index
    %132 = vector.load %arg14[%c0_119, %c0_120, %c0_121] : memref<2x8x16xf32, #tpu.memory_space<vmem>>, vector<1x8x16xf32>
    %133 = vector.shape_cast %132 : vector<1x8x16xf32> to vector<8x16xf32>
    %cst_122 = arith.constant dense<0.000000e+00> : vector<8x16xf32>
    %134 = tpu.matmul %70, %133, %cst_122 {dimension_numbers = #tpu.dot_dimension_numbers<[1], [0], [0], [1], [0, 0, 1, 1], [], []>} : vector<8x8xf32>, vector<8x16xf32>, vector<8x16xf32> -> vector<8x16xf32>
    %135 = arith.addf %131, %134 : vector<8x16xf32>
    %c1_123 = arith.constant 1 : index
    %c0_124 = arith.constant 0 : index
    %c0_125 = arith.constant 0 : index
    %136 = vector.load %arg5[%c1_123, %c0_124, %c0_125] : memref<2x1x16xf32, #tpu.memory_space<vmem>>, vector<1x1x16xf32>
    %137 = vector.shape_cast %136 : vector<1x1x16xf32> to vector<1x16xf32>
    %c1_126 = arith.constant 1 : index
    %c0_127 = arith.constant 0 : index
    %c0_128 = arith.constant 0 : index
    %138 = vector.load %arg4[%c1_126, %c0_127, %c0_128] : memref<2x1x16xf32, #tpu.memory_space<vmem>>, vector<1x1x16xf32>
    %139 = vector.shape_cast %138 : vector<1x1x16xf32> to vector<1x16xf32>
    %140 = vector.broadcast %139 : vector<1x16xf32> to vector<8x16xf32>
    %141 = arith.addf %135, %140 : vector<8x16xf32>
    %142 = vector.broadcast %137 : vector<1x16xf32> to vector<8x16xf32>
    %143 = arith.mulf %142, %141 : vector<8x16xf32>
    %cst_129 = arith.constant 0.000000e+00 : f32
    %144 = vector.broadcast %cst_129 : f32 to vector<8x16xf32>
    %145 = arith.cmpf oge, %143, %144 : vector<8x16xf32>
    %cst_130 = arith.constant 1.000000e+00 : f32
    %cst_131 = arith.constant 0.899999976 : f32
    %146 = vector.broadcast %cst_130 : f32 to vector<8x16xf32>
    %147 = vector.broadcast %cst_131 : f32 to vector<8x16xf32>
    %148 = arith.select %145, %146, %147 : vector<8x16xi1>, vector<8x16xf32>
    %149 = arith.mulf %143, %148 : vector<8x16xf32>
    %150 = vector.extract_strided_slice %149 {offsets = [0, 0], sizes = [8, 8], strides = [1, 1]} : vector<8x16xf32> to vector<8x8xf32>
    %151 = vector.extract_strided_slice %149 {offsets = [0, 8], sizes = [8, 8], strides = [1, 1]} : vector<8x16xf32> to vector<8x8xf32>
    %c1_132 = arith.constant 1 : index
    %c0_133 = arith.constant 0 : index
    %c0_134 = arith.constant 0 : index
    %c0_135 = arith.constant 0 : index
    %152 = vector.load %arg6[%c1_132, %c0_133, %c0_134, %c0_135] : memref<2x2x8x64xf32, #tpu.memory_space<vmem>>, vector<1x1x8x64xf32>
    %153 = vector.shape_cast %152 : vector<1x1x8x64xf32> to vector<8x64xf32>
    %cst_136 = arith.constant dense<0.000000e+00> : vector<8x64xf32>
    %154 = tpu.matmul %150, %153, %cst_136 {dimension_numbers = #tpu.dot_dimension_numbers<[1], [0], [0], [1], [0, 0, 1, 1], [], []>} : vector<8x8xf32>, vector<8x64xf32>, vector<8x64xf32> -> vector<8x64xf32>
    %c1_137 = arith.constant 1 : index
    %c0_138 = arith.constant 0 : index
    %c0_139 = arith.constant 0 : index
    %c0_140 = arith.constant 0 : index
    %155 = vector.load %arg7[%c1_137, %c0_138, %c0_139, %c0_140] : memref<2x2x8x64xf32, #tpu.memory_space<vmem>>, vector<1x1x8x64xf32>
    %156 = vector.shape_cast %155 : vector<1x1x8x64xf32> to vector<8x64xf32>
    %cst_141 = arith.constant dense<0.000000e+00> : vector<8x64xf32>
    %157 = tpu.matmul %1, %156, %cst_141 {dimension_numbers = #tpu.dot_dimension_numbers<[1], [0], [0], [1], [0, 0, 1, 1], [], []>} : vector<8x8xf32>, vector<8x64xf32>, vector<8x64xf32> -> vector<8x64xf32>
    %158 = arith.addf %154, %157 : vector<8x64xf32>
    %c1_142 = arith.constant 1 : index
    %c0_143 = arith.constant 0 : index
    %c0_144 = arith.constant 0 : index
    %c0_145 = arith.constant 0 : index
    %159 = vector.load %arg8[%c1_142, %c0_143, %c0_144, %c0_145] : memref<2x2x1x64xf32, #tpu.memory_space<vmem>>, vector<1x1x1x64xf32>
    %160 = vector.shape_cast %159 : vector<1x1x1x64xf32> to vector<1x64xf32>
    %161 = vector.broadcast %160 : vector<1x64xf32> to vector<8x64xf32>
    %162 = arith.addf %158, %161 : vector<8x64xf32>
    %cst_146 = arith.constant 0.000000e+00 : f32
    %163 = vector.broadcast %cst_146 : f32 to vector<8x64xf32>
    %164 = arith.cmpf oge, %162, %163 : vector<8x64xf32>
    %cst_147 = arith.constant 0.00999999977 : f32
    %165 = vector.broadcast %cst_147 : f32 to vector<8x64xf32>
    %166 = arith.mulf %165, %162 : vector<8x64xf32>
    %167 = arith.select %164, %162, %166 : vector<8x64xi1>, vector<8x64xf32>
    %c1_148 = arith.constant 1 : index
    %c0_149 = arith.constant 0 : index
    %c0_150 = arith.constant 0 : index
    %c0_151 = arith.constant 0 : index
    %c0_152 = arith.constant 0 : index
    %168 = vector.load %arg9[%c1_148, %c0_149, %c0_150, %c0_151, %c0_152] : memref<2x2x2x64x64xf32, #tpu.memory_space<vmem>>, vector<1x1x1x64x64xf32>
    %169 = vector.shape_cast %168 : vector<1x1x1x64x64xf32> to vector<64x64xf32>
    %cst_153 = arith.constant dense<0.000000e+00> : vector<8x64xf32>
    %170 = tpu.matmul %167, %169, %cst_153 {dimension_numbers = #tpu.dot_dimension_numbers<[1], [0], [0], [1], [0, 0, 1, 1], [], []>} : vector<8x64xf32>, vector<64x64xf32>, vector<8x64xf32> -> vector<8x64xf32>
    %c1_154 = arith.constant 1 : index
    %c0_155 = arith.constant 0 : index
    %c0_156 = arith.constant 0 : index
    %c0_157 = arith.constant 0 : index
    %c0_158 = arith.constant 0 : index
    %171 = vector.load %arg10[%c1_154, %c0_155, %c0_156, %c0_157, %c0_158] : memref<2x2x2x1x64xf32, #tpu.memory_space<vmem>>, vector<1x1x1x1x64xf32>
    %172 = vector.shape_cast %171 : vector<1x1x1x1x64xf32> to vector<1x64xf32>
    %173 = vector.broadcast %172 : vector<1x64xf32> to vector<8x64xf32>
    %174 = arith.addf %170, %173 : vector<8x64xf32>
    %cst_159 = arith.constant 0.000000e+00 : f32
    %175 = vector.broadcast %cst_159 : f32 to vector<8x64xf32>
    %176 = arith.cmpf oge, %174, %175 : vector<8x64xf32>
    %cst_160 = arith.constant 0.00999999977 : f32
    %177 = vector.broadcast %cst_160 : f32 to vector<8x64xf32>
    %178 = arith.mulf %177, %174 : vector<8x64xf32>
    %179 = arith.select %176, %174, %178 : vector<8x64xi1>, vector<8x64xf32>
    %c1_161 = arith.constant 1 : index
    %c0_162 = arith.constant 0 : index
    %c1_163 = arith.constant 1 : index
    %c0_164 = arith.constant 0 : index
    %c0_165 = arith.constant 0 : index
    %180 = vector.load %arg9[%c1_161, %c0_162, %c1_163, %c0_164, %c0_165] : memref<2x2x2x64x64xf32, #tpu.memory_space<vmem>>, vector<1x1x1x64x64xf32>
    %181 = vector.shape_cast %180 : vector<1x1x1x64x64xf32> to vector<64x64xf32>
    %cst_166 = arith.constant dense<0.000000e+00> : vector<8x64xf32>
    %182 = tpu.matmul %179, %181, %cst_166 {dimension_numbers = #tpu.dot_dimension_numbers<[1], [0], [0], [1], [0, 0, 1, 1], [], []>} : vector<8x64xf32>, vector<64x64xf32>, vector<8x64xf32> -> vector<8x64xf32>
    %c1_167 = arith.constant 1 : index
    %c0_168 = arith.constant 0 : index
    %c1_169 = arith.constant 1 : index
    %c0_170 = arith.constant 0 : index
    %c0_171 = arith.constant 0 : index
    %183 = vector.load %arg10[%c1_167, %c0_168, %c1_169, %c0_170, %c0_171] : memref<2x2x2x1x64xf32, #tpu.memory_space<vmem>>, vector<1x1x1x1x64xf32>
    %184 = vector.shape_cast %183 : vector<1x1x1x1x64xf32> to vector<1x64xf32>
    %185 = vector.broadcast %184 : vector<1x64xf32> to vector<8x64xf32>
    %186 = arith.addf %182, %185 : vector<8x64xf32>
    %cst_172 = arith.constant 0.000000e+00 : f32
    %187 = vector.broadcast %cst_172 : f32 to vector<8x64xf32>
    %188 = arith.cmpf oge, %186, %187 : vector<8x64xf32>
    %cst_173 = arith.constant 0.00999999977 : f32
    %189 = vector.broadcast %cst_173 : f32 to vector<8x64xf32>
    %190 = arith.mulf %189, %186 : vector<8x64xf32>
    %191 = arith.select %188, %186, %190 : vector<8x64xi1>, vector<8x64xf32>
    %c1_174 = arith.constant 1 : index
    %c0_175 = arith.constant 0 : index
    %c0_176 = arith.constant 0 : index
    %c0_177 = arith.constant 0 : index
    %192 = vector.load %arg11[%c1_174, %c0_175, %c0_176, %c0_177] : memref<2x2x64x16xf32, #tpu.memory_space<vmem>>, vector<1x1x64x16xf32>
    %193 = vector.shape_cast %192 : vector<1x1x64x16xf32> to vector<64x16xf32>
    %cst_178 = arith.constant dense<0.000000e+00> : vector<8x16xf32>
    %194 = tpu.matmul %191, %193, %cst_178 {dimension_numbers = #tpu.dot_dimension_numbers<[1], [0], [0], [1], [0, 0, 1, 1], [], []>} : vector<8x64xf32>, vector<64x16xf32>, vector<8x16xf32> -> vector<8x16xf32>
    %c1_179 = arith.constant 1 : index
    %c0_180 = arith.constant 0 : index
    %c0_181 = arith.constant 0 : index
    %c0_182 = arith.constant 0 : index
    %195 = vector.load %arg12[%c1_179, %c0_180, %c0_181, %c0_182] : memref<2x2x1x16xf32, #tpu.memory_space<vmem>>, vector<1x1x1x16xf32>
    %196 = vector.shape_cast %195 : vector<1x1x1x16xf32> to vector<1x16xf32>
    %197 = vector.broadcast %196 : vector<1x16xf32> to vector<8x16xf32>
    %198 = arith.addf %194, %197 : vector<8x16xf32>
    %199 = vector.extract_strided_slice %198 {offsets = [0, 0], sizes = [8, 8], strides = [1, 1]} : vector<8x16xf32> to vector<8x8xf32>
    %200 = vector.extract_strided_slice %198 {offsets = [0, 8], sizes = [8, 8], strides = [1, 1]} : vector<8x16xf32> to vector<8x8xf32>
    %201 = math.exp %199 : vector<8x8xf32>
    %202 = arith.mulf %151, %201 : vector<8x8xf32>
    %203 = arith.addf %202, %200 : vector<8x8xf32>
    %cst_183 = arith.constant dense<0.000000e+00> : vector<8xf32>
    %204 = vector.multi_reduction <add>, %199, %cst_183 [1] : vector<8x8xf32> to vector<8xf32>
    %205 = vector.shape_cast %204 : vector<8xf32> to vector<8x1xf32>
    %206 = arith.addf %128, %205 : vector<8x1xf32>
    %c1_184 = arith.constant 1 : index
    %c1_185 = arith.constant 1 : index
    %c0_186 = arith.constant 0 : index
    %c0_187 = arith.constant 0 : index
    %207 = vector.load %arg6[%c1_184, %c1_185, %c0_186, %c0_187] : memref<2x2x8x64xf32, #tpu.memory_space<vmem>>, vector<1x1x8x64xf32>
    %208 = vector.shape_cast %207 : vector<1x1x8x64xf32> to vector<8x64xf32>
    %cst_188 = arith.constant dense<0.000000e+00> : vector<8x64xf32>
    %209 = tpu.matmul %203, %208, %cst_188 {dimension_numbers = #tpu.dot_dimension_numbers<[1], [0], [0], [1], [0, 0, 1, 1], [], []>} : vector<8x8xf32>, vector<8x64xf32>, vector<8x64xf32> -> vector<8x64xf32>
    %c1_189 = arith.constant 1 : index
    %c1_190 = arith.constant 1 : index
    %c0_191 = arith.constant 0 : index
    %c0_192 = arith.constant 0 : index
    %210 = vector.load %arg7[%c1_189, %c1_190, %c0_191, %c0_192] : memref<2x2x8x64xf32, #tpu.memory_space<vmem>>, vector<1x1x8x64xf32>
    %211 = vector.shape_cast %210 : vector<1x1x8x64xf32> to vector<8x64xf32>
    %cst_193 = arith.constant dense<0.000000e+00> : vector<8x64xf32>
    %212 = tpu.matmul %1, %211, %cst_193 {dimension_numbers = #tpu.dot_dimension_numbers<[1], [0], [0], [1], [0, 0, 1, 1], [], []>} : vector<8x8xf32>, vector<8x64xf32>, vector<8x64xf32> -> vector<8x64xf32>
    %213 = arith.addf %209, %212 : vector<8x64xf32>
    %c1_194 = arith.constant 1 : index
    %c1_195 = arith.constant 1 : index
    %c0_196 = arith.constant 0 : index
    %c0_197 = arith.constant 0 : index
    %214 = vector.load %arg8[%c1_194, %c1_195, %c0_196, %c0_197] : memref<2x2x1x64xf32, #tpu.memory_space<vmem>>, vector<1x1x1x64xf32>
    %215 = vector.shape_cast %214 : vector<1x1x1x64xf32> to vector<1x64xf32>
    %216 = vector.broadcast %215 : vector<1x64xf32> to vector<8x64xf32>
    %217 = arith.addf %213, %216 : vector<8x64xf32>
    %cst_198 = arith.constant 0.000000e+00 : f32
    %218 = vector.broadcast %cst_198 : f32 to vector<8x64xf32>
    %219 = arith.cmpf oge, %217, %218 : vector<8x64xf32>
    %cst_199 = arith.constant 0.00999999977 : f32
    %220 = vector.broadcast %cst_199 : f32 to vector<8x64xf32>
    %221 = arith.mulf %220, %217 : vector<8x64xf32>
    %222 = arith.select %219, %217, %221 : vector<8x64xi1>, vector<8x64xf32>
    %c1_200 = arith.constant 1 : index
    %c1_201 = arith.constant 1 : index
    %c0_202 = arith.constant 0 : index
    %c0_203 = arith.constant 0 : index
    %c0_204 = arith.constant 0 : index
    %223 = vector.load %arg9[%c1_200, %c1_201, %c0_202, %c0_203, %c0_204] : memref<2x2x2x64x64xf32, #tpu.memory_space<vmem>>, vector<1x1x1x64x64xf32>
    %224 = vector.shape_cast %223 : vector<1x1x1x64x64xf32> to vector<64x64xf32>
    %cst_205 = arith.constant dense<0.000000e+00> : vector<8x64xf32>
    %225 = tpu.matmul %222, %224, %cst_205 {dimension_numbers = #tpu.dot_dimension_numbers<[1], [0], [0], [1], [0, 0, 1, 1], [], []>} : vector<8x64xf32>, vector<64x64xf32>, vector<8x64xf32> -> vector<8x64xf32>
    %c1_206 = arith.constant 1 : index
    %c1_207 = arith.constant 1 : index
    %c0_208 = arith.constant 0 : index
    %c0_209 = arith.constant 0 : index
    %c0_210 = arith.constant 0 : index
    %226 = vector.load %arg10[%c1_206, %c1_207, %c0_208, %c0_209, %c0_210] : memref<2x2x2x1x64xf32, #tpu.memory_space<vmem>>, vector<1x1x1x1x64xf32>
    %227 = vector.shape_cast %226 : vector<1x1x1x1x64xf32> to vector<1x64xf32>
    %228 = vector.broadcast %227 : vector<1x64xf32> to vector<8x64xf32>
    %229 = arith.addf %225, %228 : vector<8x64xf32>
    %cst_211 = arith.constant 0.000000e+00 : f32
    %230 = vector.broadcast %cst_211 : f32 to vector<8x64xf32>
    %231 = arith.cmpf oge, %229, %230 : vector<8x64xf32>
    %cst_212 = arith.constant 0.00999999977 : f32
    %232 = vector.broadcast %cst_212 : f32 to vector<8x64xf32>
    %233 = arith.mulf %232, %229 : vector<8x64xf32>
    %234 = arith.select %231, %229, %233 : vector<8x64xi1>, vector<8x64xf32>
    %c1_213 = arith.constant 1 : index
    %c1_214 = arith.constant 1 : index
    %c1_215 = arith.constant 1 : index
    %c0_216 = arith.constant 0 : index
    %c0_217 = arith.constant 0 : index
    %235 = vector.load %arg9[%c1_213, %c1_214, %c1_215, %c0_216, %c0_217] : memref<2x2x2x64x64xf32, #tpu.memory_space<vmem>>, vector<1x1x1x64x64xf32>
    %236 = vector.shape_cast %235 : vector<1x1x1x64x64xf32> to vector<64x64xf32>
    %cst_218 = arith.constant dense<0.000000e+00> : vector<8x64xf32>
    %237 = tpu.matmul %234, %236, %cst_218 {dimension_numbers = #tpu.dot_dimension_numbers<[1], [0], [0], [1], [0, 0, 1, 1], [], []>} : vector<8x64xf32>, vector<64x64xf32>, vector<8x64xf32> -> vector<8x64xf32>
    %c1_219 = arith.constant 1 : index
    %c1_220 = arith.constant 1 : index
    %c1_221 = arith.constant 1 : index
    %c0_222 = arith.constant 0 : index
    %c0_223 = arith.constant 0 : index
    %238 = vector.load %arg10[%c1_219, %c1_220, %c1_221, %c0_222, %c0_223] : memref<2x2x2x1x64xf32, #tpu.memory_space<vmem>>, vector<1x1x1x1x64xf32>
    %239 = vector.shape_cast %238 : vector<1x1x1x1x64xf32> to vector<1x64xf32>
    %240 = vector.broadcast %239 : vector<1x64xf32> to vector<8x64xf32>
    %241 = arith.addf %237, %240 : vector<8x64xf32>
    %cst_224 = arith.constant 0.000000e+00 : f32
    %242 = vector.broadcast %cst_224 : f32 to vector<8x64xf32>
    %243 = arith.cmpf oge, %241, %242 : vector<8x64xf32>
    %cst_225 = arith.constant 0.00999999977 : f32
    %244 = vector.broadcast %cst_225 : f32 to vector<8x64xf32>
    %245 = arith.mulf %244, %241 : vector<8x64xf32>
    %246 = arith.select %243, %241, %245 : vector<8x64xi1>, vector<8x64xf32>
    %c1_226 = arith.constant 1 : index
    %c1_227 = arith.constant 1 : index
    %c0_228 = arith.constant 0 : index
    %c0_229 = arith.constant 0 : index
    %247 = vector.load %arg11[%c1_226, %c1_227, %c0_228, %c0_229] : memref<2x2x64x16xf32, #tpu.memory_space<vmem>>, vector<1x1x64x16xf32>
    %248 = vector.shape_cast %247 : vector<1x1x64x16xf32> to vector<64x16xf32>
    %cst_230 = arith.constant dense<0.000000e+00> : vector<8x16xf32>
    %249 = tpu.matmul %246, %248, %cst_230 {dimension_numbers = #tpu.dot_dimension_numbers<[1], [0], [0], [1], [0, 0, 1, 1], [], []>} : vector<8x64xf32>, vector<64x16xf32>, vector<8x16xf32> -> vector<8x16xf32>
    %c1_231 = arith.constant 1 : index
    %c1_232 = arith.constant 1 : index
    %c0_233 = arith.constant 0 : index
    %c0_234 = arith.constant 0 : index
    %250 = vector.load %arg12[%c1_231, %c1_232, %c0_233, %c0_234] : memref<2x2x1x16xf32, #tpu.memory_space<vmem>>, vector<1x1x1x16xf32>
    %251 = vector.shape_cast %250 : vector<1x1x1x16xf32> to vector<1x16xf32>
    %252 = vector.broadcast %251 : vector<1x16xf32> to vector<8x16xf32>
    %253 = arith.addf %249, %252 : vector<8x16xf32>
    %254 = vector.extract_strided_slice %253 {offsets = [0, 0], sizes = [8, 8], strides = [1, 1]} : vector<8x16xf32> to vector<8x8xf32>
    %255 = vector.extract_strided_slice %253 {offsets = [0, 8], sizes = [8, 8], strides = [1, 1]} : vector<8x16xf32> to vector<8x8xf32>
    %256 = math.exp %254 : vector<8x8xf32>
    %257 = arith.mulf %150, %256 : vector<8x8xf32>
    %258 = arith.addf %257, %255 : vector<8x8xf32>
    %cst_235 = arith.constant dense<0.000000e+00> : vector<8xf32>
    %259 = vector.multi_reduction <add>, %254, %cst_235 [1] : vector<8x8xf32> to vector<8xf32>
    %260 = vector.shape_cast %259 : vector<8xf32> to vector<8x1xf32>
    %261 = arith.addf %206, %260 : vector<8x1xf32>
    %c1_236 = arith.constant 1 : index
    %c0_237 = arith.constant 0 : index
    %c0_238 = arith.constant 0 : index
    %262 = vector.load %arg13[%c1_236, %c0_237, %c0_238] : memref<2x8x16xf32, #tpu.memory_space<vmem>>, vector<1x8x16xf32>
    %263 = vector.shape_cast %262 : vector<1x8x16xf32> to vector<8x16xf32>
    %cst_239 = arith.constant dense<0.000000e+00> : vector<8x16xf32>
    %264 = tpu.matmul %258, %263, %cst_239 {dimension_numbers = #tpu.dot_dimension_numbers<[1], [0], [0], [1], [0, 0, 1, 1], [], []>} : vector<8x8xf32>, vector<8x16xf32>, vector<8x16xf32> -> vector<8x16xf32>
    %c1_240 = arith.constant 1 : index
    %c0_241 = arith.constant 0 : index
    %c0_242 = arith.constant 0 : index
    %265 = vector.load %arg14[%c1_240, %c0_241, %c0_242] : memref<2x8x16xf32, #tpu.memory_space<vmem>>, vector<1x8x16xf32>
    %266 = vector.shape_cast %265 : vector<1x8x16xf32> to vector<8x16xf32>
    %cst_243 = arith.constant dense<0.000000e+00> : vector<8x16xf32>
    %267 = tpu.matmul %203, %266, %cst_243 {dimension_numbers = #tpu.dot_dimension_numbers<[1], [0], [0], [1], [0, 0, 1, 1], [], []>} : vector<8x8xf32>, vector<8x16xf32>, vector<8x16xf32> -> vector<8x16xf32>
    %268 = arith.addf %264, %267 : vector<8x16xf32>
    %c0_244 = arith.constant 0 : index
    %c0_245 = arith.constant 0 : index
    %269 = vector.load %arg15[%c0_244, %c0_245] : memref<8x16xf32, #tpu.memory_space<vmem>>, vector<8x16xf32>
    tpu.vector_store %arg15[%c0_244, %c0_245], %268 {strides = array<i32>} : memref<8x16xf32, #tpu.memory_space<vmem>>, vector<8x16xf32>,
    %c0_246 = arith.constant 0 : index
    %c0_247 = arith.constant 0 : index
    %270 = memref.load %arg1[%c0_246, %c0_247] : memref<1x1xf32, #tpu.memory_space<smem>>
    %271 = vector.broadcast %270 : f32 to vector<8x1xf32>
    %272 = arith.addf %261, %271 : vector<8x1xf32>
    %c0_248 = arith.constant 0 : index
    %c0_249 = arith.constant 0 : index
    %273 = vector.load %arg16[%c0_248, %c0_249] : memref<8x1xf32, #tpu.memory_space<vmem>>, vector<8x1xf32>
    tpu.vector_store %arg16[%c0_248, %c0_249], %272 {strides = array<i32>} : memref<8x1xf32, #tpu.memory_space<vmem>>, vector<8x1xf32>,
    return
  }
  func.func @transform_0(%arg0: i32) -> (i32, i32) {
    %c0_i32 = arith.constant 0 : i32
    %c0_i32_0 = arith.constant 0 : i32
    %c0_i32_1 = arith.constant 0 : i32
    return %c0_i32, %c0_i32_0 : i32, i32
  }
  func.func @transform_1(%arg0: i32) -> (i32, i32) {
    %c0_i32 = arith.constant 0 : i32
    %c0_i32_0 = arith.constant 0 : i32
    %c0_i32_1 = arith.constant 0 : i32
    return %c0_i32, %c0_i32_0 : i32, i32
  }
  func.func @transform_2(%arg0: i32) -> (i32, i32) {
    %c0_i32 = arith.constant 0 : i32
    %c0_i32_0 = arith.constant 0 : i32
    %c0_i32_1 = arith.constant 0 : i32
    return %c0_i32, %c0_i32_0 : i32, i32
  }
  func.func @transform_3(%arg0: i32) -> (i32, i32, i32) {
    %c0_i32 = arith.constant 0 : i32
    %c0_i32_0 = arith.constant 0 : i32
    %c0_i32_1 = arith.constant 0 : i32
    %c0_i32_2 = arith.constant 0 : i32
    return %c0_i32, %c0_i32_0, %c0_i32_1 : i32, i32, i32
  }
  func.func @transform_4(%arg0: i32) -> (i32, i32, i32) {
    %c0_i32 = arith.constant 0 : i32
    %c0_i32_0 = arith.constant 0 : i32
    %c0_i32_1 = arith.constant 0 : i32
    %c0_i32_2 = arith.constant 0 : i32
    return %c0_i32, %c0_i32_0, %c0_i32_1 : i32, i32, i32
  }
  func.func @transform_5(%arg0: i32) -> (i32, i32, i32, i32) {
    %c0_i32 = arith.constant 0 : i32
    %c0_i32_0 = arith.constant 0 : i32
    %c0_i32_1 = arith.constant 0 : i32
    %c0_i32_2 = arith.constant 0 : i32
    %c0_i32_3 = arith.constant 0 : i32
    return %c0_i32, %c0_i32_0, %c0_i32_1, %c0_i32_2 : i32, i32, i32, i32
  }
  func.func @transform_6(%arg0: i32) -> (i32, i32, i32, i32) {
    %c0_i32 = arith.constant 0 : i32
    %c0_i32_0 = arith.constant 0 : i32
    %c0_i32_1 = arith.constant 0 : i32
    %c0_i32_2 = arith.constant 0 : i32
    %c0_i32_3 = arith.constant 0 : i32
    return %c0_i32, %c0_i32_0, %c0_i32_1, %c0_i32_2 : i32, i32, i32, i32
  }
  func.func @transform_7(%arg0: i32) -> (i32, i32, i32, i32) {
    %c0_i32 = arith.constant 0 : i32
    %c0_i32_0 = arith.constant 0 : i32
    %c0_i32_1 = arith.constant 0 : i32
    %c0_i32_2 = arith.constant 0 : i32
    %c0_i32_3 = arith.constant 0 : i32
    return %c0_i32, %c0_i32_0, %c0_i32_1, %c0_i32_2 : i32, i32, i32, i32
  }
  func.func @transform_8(%arg0: i32) -> (i32, i32, i32, i32, i32) {
    %c0_i32 = arith.constant 0 : i32
    %c0_i32_0 = arith.constant 0 : i32
    %c0_i32_1 = arith.constant 0 : i32
    %c0_i32_2 = arith.constant 0 : i32
    %c0_i32_3 = arith.constant 0 : i32
    %c0_i32_4 = arith.constant 0 : i32
    return %c0_i32, %c0_i32_0, %c0_i32_1, %c0_i32_2, %c0_i32_3 : i32, i32, i32, i32, i32
  }
  func.func @transform_9(%arg0: i32) -> (i32, i32, i32, i32, i32) {
    %c0_i32 = arith.constant 0 : i32
    %c0_i32_0 = arith.constant 0 : i32
    %c0_i32_1 = arith.constant 0 : i32
    %c0_i32_2 = arith.constant 0 : i32
    %c0_i32_3 = arith.constant 0 : i32
    %c0_i32_4 = arith.constant 0 : i32
    return %c0_i32, %c0_i32_0, %c0_i32_1, %c0_i32_2, %c0_i32_3 : i32, i32, i32, i32, i32
  }
  func.func @transform_10(%arg0: i32) -> (i32, i32, i32, i32) {
    %c0_i32 = arith.constant 0 : i32
    %c0_i32_0 = arith.constant 0 : i32
    %c0_i32_1 = arith.constant 0 : i32
    %c0_i32_2 = arith.constant 0 : i32
    %c0_i32_3 = arith.constant 0 : i32
    return %c0_i32, %c0_i32_0, %c0_i32_1, %c0_i32_2 : i32, i32, i32, i32
  }
  func.func @transform_11(%arg0: i32) -> (i32, i32, i32, i32) {
    %c0_i32 = arith.constant 0 : i32
    %c0_i32_0 = arith.constant 0 : i32
    %c0_i32_1 = arith.constant 0 : i32
    %c0_i32_2 = arith.constant 0 : i32
    %c0_i32_3 = arith.constant 0 : i32
    return %c0_i32, %c0_i32_0, %c0_i32_1, %c0_i32_2 : i32, i32, i32, i32
  }
  func.func @transform_12(%arg0: i32) -> (i32, i32, i32) {
    %c0_i32 = arith.constant 0 : i32
    %c0_i32_0 = arith.constant 0 : i32
    %c0_i32_1 = arith.constant 0 : i32
    %c0_i32_2 = arith.constant 0 : i32
    return %c0_i32, %c0_i32_0, %c0_i32_1 : i32, i32, i32
  }
  func.func @transform_13(%arg0: i32) -> (i32, i32, i32) {
    %c0_i32 = arith.constant 0 : i32
    %c0_i32_0 = arith.constant 0 : i32
    %c0_i32_1 = arith.constant 0 : i32
    %c0_i32_2 = arith.constant 0 : i32
    return %c0_i32, %c0_i32_0, %c0_i32_1 : i32, i32, i32
  }
  func.func @transform_14(%arg0: i32) -> (i32, i32) {
    %c0_i32 = arith.constant 0 : i32
    %c0_i32_0 = arith.constant 0 : i32
    %c0_i32_1 = arith.constant 0 : i32
    return %c0_i32, %c0_i32_0 : i32, i32
  }
  func.func @transform_15(%arg0: i32) -> (i32, i32) {
    %c0_i32 = arith.constant 0 : i32
    %c0_i32_0 = arith.constant 0 : i32
    %c0_i32_1 = arith.constant 0 : i32
    return %c0_i32, %c0_i32_0 : i32, i32
  }
}

</mosaic_0001>

<llo_original>
// kernel: tpu_custom_call.1
$region0: #{tpu_custom_call.1}
  #allocation0 [shape = 'u32[]', space=smem, size = 0x4, offset = 0x4, fixed_abs, tag = 'smem constant byte address 0x4 - core index']
  #allocation1 [shape = 'u32[144,128]{1,0:T(1,128)}', space=vmem, size = 0x12000, scoped, tag = 'internal scratch']
  #allocation2 [shape = 'f32[1,1]{1,0:T(1,128)S(6)}', space=smem, size = 0x200, scoped, tag = 'scoped memory for tpu_custom_call.1']
  %s0 = inlined_call_operand.<no memory space> [shape: f32[1,1], index: 0, kind: input, shape index: {}]
  %s1 = inlined_call_operand.vmem [shape: f32[8,16], index: 1, kind: input, shape index: {}]
  %s2 = inlined_call_operand.vmem [shape: f32[8,8], index: 2, kind: input, shape index: {}]
  %s3 = inlined_call_operand.vmem [shape: f32[2,1,16], index: 3, kind: input, shape index: {}]
  %s4 = inlined_call_operand.vmem [shape: f32[2,1,16], index: 4, kind: input, shape index: {}]
  %s5 = inlined_call_operand.vmem [shape: f32[2,2,8,64], index: 5, kind: input, shape index: {}]
  %s6 = inlined_call_operand.vmem [shape: f32[2,2,8,64], index: 6, kind: input, shape index: {}]
  %s7 = inlined_call_operand.vmem [shape: f32[2,2,1,64], index: 7, kind: input, shape index: {}]
  %s8 = inlined_call_operand.hbm [shape: f32[2,2,2,64,64], index: 8, kind: input, shape index: {}]
  %s9 = inlined_call_operand.vmem [shape: f32[2,2,2,1,64], index: 9, kind: input, shape index: {}]
  %s10 = inlined_call_operand.vmem [shape: f32[2,2,64,16], index: 10, kind: input, shape index: {}]
  %s11 = inlined_call_operand.vmem [shape: f32[2,2,1,16], index: 11, kind: input, shape index: {}]
  %s12 = inlined_call_operand.vmem [shape: f32[2,8,16], index: 12, kind: input, shape index: {}]
  %s13 = inlined_call_operand.vmem [shape: f32[2,8,16], index: 13, kind: input, shape index: {}]
  %s14 = inlined_call_operand.hbm [shape: f32[8,16], index: 14, kind: output, shape index: {0}]
  %s15 = inlined_call_operand.vmem [shape: f32[8,1], index: 15, kind: output, shape index: {1}]
  %16 = xla_tuple %s14, %s15
  %s17 = sld [smem:[#allocation0]]
  $region78: #{tpu_custom_call.1} parent=0
    _
  %s19 = ssub.s32 1, %s17
  %s20 = scalar_select 0, %s19, %s17
  %21 = sst [smem:[#allocation2]] %s0
  $region1: #{tpu_custom_call.1} parent=0
    #allocation3 [shape = 'u8[262144]{0}', space=vmem, size = 0x40000, scoped, tag = 'input window, operand 8, single buffered']
    #allocation4 [shape = 's32[1]{0}', space=sflag, size = 0x4, scoped, tag = 'scoped memory for tpu_custom_call.1']
    #allocation5 [shape = 's32[1]{0}', space=sflag, size = 0x4, scoped, tag = 'scoped memory for tpu_custom_call.1']
    #allocation6 [shape = 'u8[4096]{0}', space=vmem, size = 0x1000, scoped, tag = 'output window, operand 0, single buffered']
    %22 = vsyncpa [#allocation4], 0
    %23 = vsyncpa [#allocation5], 0
    // Predicated region
    $region2: #{tpu_custom_call.1} parent=1 // pred_check
      _
    $region3: #{tpu_custom_call.1} parent=1 // pred_check_branch
      %25 = sbr.rel (0) target = $region5
    $region4: #{tpu_custom_call.1} parent=1 // pred_region
      _
    $region5: #{tpu_custom_call.1} parent=1 // pred_fallthru
      _
    // Predicated region
    $region6: #{tpu_custom_call.1} parent=1 // pred_check
      _
    $region7: #{tpu_custom_call.1} parent=1 // pred_check_branch
      %27 = sbr.rel (0) target = $region9
    $region8: #{tpu_custom_call.1} parent=1 // pred_region
      _
    $region9: #{tpu_custom_call.1} parent=1 // pred_fallthru
      _
    // Predicated region
    $region10: #{tpu_custom_call.1} parent=1 // pred_check
      _
    $region11: #{tpu_custom_call.1} parent=1 // pred_check_branch
      %29 = sbr.rel (0) target = $region13
    $region12: #{tpu_custom_call.1} parent=1 // pred_region
      _
    $region13: #{tpu_custom_call.1} parent=1 // pred_fallthru
      _
    // Predicated region
    $region14: #{tpu_custom_call.1} parent=1 // pred_check
      _
    $region15: #{tpu_custom_call.1} parent=1 // pred_check_branch
      %31 = sbr.rel (0) target = $region17
    $region16: #{tpu_custom_call.1} parent=1 // pred_region
      _
    $region17: #{tpu_custom_call.1} parent=1 // pred_fallthru
      _
    // Predicated region
    $region18: #{tpu_custom_call.1} parent=1 // pred_check
      _
    $region19: #{tpu_custom_call.1} parent=1 // pred_check_branch
      %33 = sbr.rel (0) target = $region21
    $region20: #{tpu_custom_call.1} parent=1 // pred_region
      _
    $region21: #{tpu_custom_call.1} parent=1 // pred_fallthru
      _
    // Predicated region
    $region22: #{tpu_custom_call.1} parent=1 // pred_check
      _
    $region23: #{tpu_custom_call.1} parent=1 // pred_check_branch
      %35 = sbr.rel (0) target = $region25
    $region24: #{tpu_custom_call.1} parent=1 // pred_region
      _
    $region25: #{tpu_custom_call.1} parent=1 // pred_fallthru
      _
    // Predicated region
    $region26: #{tpu_custom_call.1} parent=1 // pred_check
      _
    $region27: #{tpu_custom_call.1} parent=1 // pred_check_branch
      %37 = sbr.rel (0) target = $region29
    $region28: #{tpu_custom_call.1} parent=1 // pred_region
      _
    $region29: #{tpu_custom_call.1} parent=1 // pred_fallthru
      _
    // Predicated region
    $region30: #{tpu_custom_call.1} parent=1 // pred_check
      _
    $region31: #{tpu_custom_call.1} parent=1 // pred_check_branch
      %39 = sbr.rel (0) target = $region33
    $region32: #{tpu_custom_call.1} parent=1 // pred_region
      _
    $region33: #{tpu_custom_call.1} parent=1 // pred_fallthru
      _
    // Predicated region
    $region34: #{tpu_custom_call.1} parent=1 // pred_check
      _
    $region35: #{tpu_custom_call.1} parent=1 // pred_check_branch
      %41 = sbr.rel (0) target = $region37
    $region36: #{tpu_custom_call.1} parent=1 // pred_region
      %s43 = ssub.s32 8192, 8192
      %44 = vsyncadd [#allocation4], %s43
      %s45 = sshll.u32 [#allocation3], 4
      %s46 = int_to_ptr.vmem [resolvable:$true] %s45
      %51 = dma.hbm_to_vmem [thread:$0]  %s8, 8192, %s46, [#allocation4], 128, 128, 8
    $region37: #{tpu_custom_call.1} parent=1 // pred_fallthru
      _
    // Predicated region
    $region38: #{tpu_custom_call.1} parent=1 // pred_check
      _
    $region39: #{tpu_custom_call.1} parent=1 // pred_check_branch
      %53 = sbr.rel (0) target = $region41
    $region40: #{tpu_custom_call.1} parent=1 // pred_region
      _
    $region41: #{tpu_custom_call.1} parent=1 // pred_fallthru
      _
    // Predicated region
    $region42: #{tpu_custom_call.1} parent=1 // pred_check
      _
    $region43: #{tpu_custom_call.1} parent=1 // pred_check_branch
      %55 = sbr.rel (0) target = $region45
    $region44: #{tpu_custom_call.1} parent=1 // pred_region
      _
    $region45: #{tpu_custom_call.1} parent=1 // pred_fallthru
      _
    // Predicated region
    $region46: #{tpu_custom_call.1} parent=1 // pred_check
      _
    $region47: #{tpu_custom_call.1} parent=1 // pred_check_branch
      %57 = sbr.rel (0) target = $region49
    $region48: #{tpu_custom_call.1} parent=1 // pred_region
      _
    $region49: #{tpu_custom_call.1} parent=1 // pred_fallthru
      _
    // Predicated region
    $region50: #{tpu_custom_call.1} parent=1 // pred_check
      _
    $region51: #{tpu_custom_call.1} parent=1 // pred_check_branch
      %59 = sbr.rel (0) target = $region53
    $region52: #{tpu_custom_call.1} parent=1 // pred_region
      _
    $region53: #{tpu_custom_call.1} parent=1 // pred_fallthru
      _
    // Predicated region
    $region54: #{tpu_custom_call.1} parent=1 // pred_check
      _
    $region55: #{tpu_custom_call.1} parent=1 // pred_check_branch
      %61 = sbr.rel (0) target = $region57
    $region56: #{tpu_custom_call.1} parent=1 // pred_region
      _
    $region57: #{tpu_custom_call.1} parent=1 // pred_fallthru
      _
    // Predicated region
    $region58: #{tpu_custom_call.1} parent=1 // pred_check
      _
    $region59: #{tpu_custom_call.1} parent=1 // pred_check_branch
      %63 = sbr.rel (0) target = $region61
    $region60: #{tpu_custom_call.1} parent=1 // pred_region
      %64 = dma.done [#allocation4], 8192
    $region61: #{tpu_custom_call.1} parent=1 // pred_fallthru
      _
    %v65 = vld [vmem:[%s1] sm:$0xff]
    %v66 = vld [vmem:[%s2] sm:$0xff]
    %v67 = vld [vmem:[%s4] sm:$0x1]
    %v68 = vld [vmem:[%s3] sm:$0x1]
    %v70 = vlaneseq
    %v71 = vshrl.u32 %v70, 7
    %v72 = vsub.s32 0, %v71
    %v73 = vrot.slane %v68, %v72
    %v75 = vadd.f32 %v65, %v73
    %v77 = vlaneseq
    %v78 = vshrl.u32 %v77, 7
    %v79 = vsub.s32 0, %v78
    %v80 = vrot.slane %v67, %v79
    %v82 = vmul.f32 %v80, %v75
    %vm83 = vcmp.ge.f32.partialorder %v82, 0.0
    %v84 = vsel %vm83, 1.0, 0.9
    %v85 = vmul.f32 %v82, %v84
    %v86 = vld [vmem:[%s5] sm:$0xff]
    %v87 = vld [vmem:[%s6] sm:$0xff]
    %vm88 = vcmask 64512
    %v90 = vsel %vm88, %v66, 0
    %92 = vmatprep.subr.mxu0 0.0
    %93 = vmatpush1.msra.mxu0 %v87
    %94 = vmatprep.subr.mxu0 0.0
    %95 = vmatpush1.msra.mxu0 0.0
    %96 = vmatprep.subr.mxu0 0.0
    %97 = vmatpush1.msra.mxu0 0.0
    %98 = vmatprep.subr.mxu0 0.0
    %99 = vmatpush1.msra.mxu0 0.0
    %100 = vmatprep.subr.mxu0 0.0
    %101 = vmatpush1.msra.mxu0 0.0
    %102 = vmatprep.subr.mxu0 0.0
    %103 = vmatpush1.msra.mxu0 0.0
    %104 = vmatprep.subr.mxu0 0.0
    %105 = vmatpush1.msra.mxu0 0.0
    %106 = vmatprep.subr.mxu0 0.0
    %107 = vmatpush1.msra.mxu0 0.0
    %108 = vmatprep.subr.mxu0 0.0
    %109 = vmatpush1.msra.mxu0 0.0
    %110 = vmatprep.subr.mxu0 0.0
    %111 = vmatpush1.msra.mxu0 0.0
    %112 = vmatprep.subr.mxu0 0.0
    %113 = vmatpush1.msra.mxu0 0.0
    %114 = vmatprep.subr.mxu0 0.0
    %115 = vmatpush1.msra.mxu0 0.0
    %116 = vmatprep.subr.mxu0 0.0
    %117 = vmatpush1.msra.mxu0 0.0
    %118 = vmatprep.subr.mxu0 0.0
    %119 = vmatpush1.msra.mxu0 0.0
    %120 = vmatprep.subr.mxu0 0.0
    %121 = vmatpush1.msra.mxu0 0.0
    %122 = vmatprep.subr.mxu0 0.0
    %123 = vmatpush1.msra.mxu0 0.0
    %124 = vmatprep.subr.mxu0 0.0
    %125 = vmatpush1.msra.mxu0 0.0
    %126 = vmatprep.subr.mxu0 0.0
    %127 = vmatpush1.msra.mxu0 0.0
    %128 = vmatprep.subr.mxu0 0.0
    %129 = vmatpush1.msra.mxu0 0.0
    %130 = vmatprep.subr.mxu0 0.0
    %131 = vmatpush1.msra.mxu0 0.0
    %132 = vmatprep.subr.mxu0 0.0
    %133 = vmatpush1.msra.mxu0 0.0
    %134 = vmatprep.subr.mxu0 0.0
    %135 = vmatpush1.msra.mxu0 0.0
    %136 = vmatprep.subr.mxu0 0.0
    %137 = vmatpush1.msra.mxu0 0.0
    %138 = vmatprep.subr.mxu0 0.0
    %139 = vmatpush1.msra.mxu0 0.0
    %140 = vmatprep.subr.mxu0 0.0
    %141 = vmatpush1.msra.mxu0 0.0
    %142 = vmatprep.subr.mxu0 0.0
    %143 = vmatpush1.msra.mxu0 0.0
    %144 = vmatprep.subr.mxu0 0.0
    %145 = vmatpush1.msra.mxu0 0.0
    %146 = vmatprep.subr.mxu0 0.0
    %147 = vmatpush1.msra.mxu0 0.0
    %148 = vmatprep.subr.mxu0 0.0
    %149 = vmatpush1.msra.mxu0 0.0
    %150 = vmatprep.subr.mxu0 0.0
    %151 = vmatpush1.msra.mxu0 0.0
    %152 = vmatprep.subr.mxu0 0.0
    %153 = vmatpush1.msra.mxu0 0.0
    %154 = vmatprep.subr.mxu0 0.0
    %155 = vmatpush1.msra.mxu0 0.0
    %156 = vmatprep.mubr.f32.mxu0 0.0
    %157 = vmatmul.mubr.f32.gmra.mrb[0].mxu0 %v90
    %v158 = vpop.f32.mrb[0].mxu0
    %v159 = vadd.f32 0.0, %v158
    %v160 = vpop.f32.mrb[0].mxu0
    %161 = vdwg.mxu0
    %v163 = vsel %vm88, %v85, 0
    %165 = vmatprep.subr.mxu0 0.0
    %166 = vmatpush1.msra.mxu0 %v86
    %167 = vmatprep.subr.mxu0 0.0
    %168 = vmatpush1.msra.mxu0 0.0
    %169 = vmatprep.subr.mxu0 0.0
    %170 = vmatpush1.msra.mxu0 0.0
    %171 = vmatprep.subr.mxu0 0.0
    %172 = vmatpush1.msra.mxu0 0.0
    %173 = vmatprep.subr.mxu0 0.0
    %174 = vmatpush1.msra.mxu0 0.0
    %175 = vmatprep.subr.mxu0 0.0
    %176 = vmatpush1.msra.mxu0 0.0
    %177 = vmatprep.subr.mxu0 0.0
    %178 = vmatpush1.msra.mxu0 0.0
    %179 = vmatprep.subr.mxu0 0.0
    %180 = vmatpush1.msra.mxu0 0.0
    %181 = vmatprep.subr.mxu0 0.0
    %182 = vmatpush1.msra.mxu0 0.0
    %183 = vmatprep.subr.mxu0 0.0
    %184 = vmatpush1.msra.mxu0 0.0
    %185 = vmatprep.subr.mxu0 0.0
    %186 = vmatpush1.msra.mxu0 0.0
    %187 = vmatprep.subr.mxu0 0.0
    %188 = vmatpush1.msra.mxu0 0.0
    %189 = vmatprep.subr.mxu0 0.0
    %190 = vmatpush1.msra.mxu0 0.0
    %191 = vmatprep.subr.mxu0 0.0
    %192 = vmatpush1.msra.mxu0 0.0
    %193 = vmatprep.subr.mxu0 0.0
    %194 = vmatpush1.msra.mxu0 0.0
    %195 = vmatprep.subr.mxu0 0.0
    %196 = vmatpush1.msra.mxu0 0.0
    %197 = vmatprep.subr.mxu0 0.0
    %198 = vmatpush1.msra.mxu0 0.0
    %199 = vmatprep.subr.mxu0 0.0
    %200 = vmatpush1.msra.mxu0 0.0
    %201 = vmatprep.subr.mxu0 0.0
    %202 = vmatpush1.msra.mxu0 0.0
    %203 = vmatprep.subr.mxu0 0.0
    %204 = vmatpush1.msra.mxu0 0.0
    %205 = vmatprep.subr.mxu0 0.0
    %206 = vmatpush1.msra.mxu0 0.0
    %207 = vmatprep.subr.mxu0 0.0
    %208 = vmatpush1.msra.mxu0 0.0
    %209 = vmatprep.subr.mxu0 0.0
    %210 = vmatpush1.msra.mxu0 0.0
    %211 = vmatprep.subr.mxu0 0.0
    %212 = vmatpush1.msra.mxu0 0.0
    %213 = vmatprep.subr.mxu0 0.0
    %214 = vmatpush1.msra.mxu0 0.0
    %215 = vmatprep.subr.mxu0 0.0
    %216 = vmatpush1.msra.mxu0 0.0
    %217 = vmatprep.subr.mxu0 0.0
    %218 = vmatpush1.msra.mxu0 0.0
    %219 = vmatprep.subr.mxu0 0.0
    %220 = vmatpush1.msra.mxu0 0.0
    %221 = vmatprep.subr.mxu0 0.0
    %222 = vmatpush1.msra.mxu0 0.0
    %223 = vmatprep.subr.mxu0 0.0
    %224 = vmatpush1.msra.mxu0 0.0
    %225 = vmatprep.subr.mxu0 0.0
    %226 = vmatpush1.msra.mxu0 0.0
    %227 = vmatprep.subr.mxu0 0.0
    %228 = vmatpush1.msra.mxu0 0.0
    %229 = vmatprep.mubr.f32.mxu0 0.0
    %230 = vmatmul.mubr.f32.gmra.mrb[0].mxu0 %v163
    %v231 = vpop.f32.mrb[0].mxu0
    %v232 = vadd.f32 %v159, %v231
    %v233 = vpop.f32.mrb[0].mxu0
    %234 = vdwg.mxu0
    %v235 = vld [vmem:[%s7] sm:$0x1]
    %v237 = vlaneseq
    %v238 = vshrl.u32 %v237, 7
    %v239 = vsub.s32 0, %v238
    %v240 = vrot.slane %v235, %v239
    %v242 = vadd.f32 %v232, %v240
    %vm243 = vcmp.ge.f32.partialorder %v242, 0.0
    %v244 = vmul.f32 %v242, 0.01
    %v245 = vsel %vm243, %v242, %v244
    %v246 = vld [vmem:[#allocation3] sm:$0xff]
    %v247 = vld [vmem:[#allocation3 + $0x8] sm:$0xff]
    %v248 = vld [vmem:[#allocation3 + $0x10] sm:$0xff]
    %v249 = vld [vmem:[#allocation3 + $0x18] sm:$0xff]
    %v250 = vld [vmem:[#allocation3 + $0x20] sm:$0xff]
    %v251 = vld [vmem:[#allocation3 + $0x28] sm:$0xff]
    %v252 = vld [vmem:[#allocation3 + $0x30] sm:$0xff]
    %v253 = vld [vmem:[#allocation3 + $0x38] sm:$0xff]
    %v254 = vld [vmem:[%s9] sm:$0x1]
    %v256 = vlaneseq
    %v257 = vshrl.u32 %v256, 7
    %v258 = vsub.s32 0, %v257
    %v259 = vrot.slane %v254, %v258
    %vm261 = vcmask 523264
    %v263 = vsel %vm261, %v245, 0
    %265 = vmatprep.subr.mxu0 0.0
    %266 = vmatpush1.msra.mxu0 %v246
    %267 = vmatprep.subr.mxu0 0.0
    %268 = vmatpush1.msra.mxu0 %v247
    %269 = vmatprep.subr.mxu0 0.0
    %270 = vmatpush1.msra.mxu0 %v248
    %271 = vmatprep.subr.mxu0 0.0
    %272 = vmatpush1.msra.mxu0 %v249
    %273 = vmatprep.subr.mxu0 0.0
    %274 = vmatpush1.msra.mxu0 %v250
    %275 = vmatprep.subr.mxu0 0.0
    %276 = vmatpush1.msra.mxu0 %v251
    %277 = vmatprep.subr.mxu0 0.0
    %278 = vmatpush1.msra.mxu0 %v252
    %279 = vmatprep.subr.mxu0 0.0
    %280 = vmatpush1.msra.mxu0 %v253
    %281 = vmatprep.subr.mxu0 0.0
    %282 = vmatpush1.msra.mxu0 0.0
    %283 = vmatprep.subr.mxu0 0.0
    %284 = vmatpush1.msra.mxu0 0.0
    %285 = vmatprep.subr.mxu0 0.0
    %286 = vmatpush1.msra.mxu0 0.0
    %287 = vmatprep.subr.mxu0 0.0
    %288 = vmatpush1.msra.mxu0 0.0
    %289 = vmatprep.subr.mxu0 0.0
    %290 = vmatpush1.msra.mxu0 0.0
    %291 = vmatprep.subr.mxu0 0.0
    %292 = vmatpush1.msra.mxu0 0.0
    %293 = vmatprep.subr.mxu0 0.0
    %294 = vmatpush1.msra.mxu0 0.0
    %295 = vmatprep.subr.mxu0 0.0
    %296 = vmatpush1.msra.mxu0 0.0
    %297 = vmatprep.subr.mxu0 0.0
    %298 = vmatpush1.msra.mxu0 0.0
    %299 = vmatprep.subr.mxu0 0.0
    %300 = vmatpush1.msra.mxu0 0.0
    %301 = vmatprep.subr.mxu0 0.0
    %302 = vmatpush1.msra.mxu0 0.0
    %303 = vmatprep.subr.mxu0 0.0
    %304 = vmatpush1.msra.mxu0 0.0
    %305 = vmatprep.subr.mxu0 0.0
    %306 = vmatpush1.msra.mxu0 0.0
    %307 = vmatprep.subr.mxu0 0.0
    %308 = vmatpush1.msra.mxu0 0.0
    %309 = vmatprep.subr.mxu0 0.0
    %310 = vmatpush1.msra.mxu0 0.0
    %311 = vmatprep.subr.mxu0 0.0
    %312 = vmatpush1.msra.mxu0 0.0
    %313 = vmatprep.subr.mxu0 0.0
    %314 = vmatpush1.msra.mxu0 0.0
    %315 = vmatprep.subr.mxu0 0.0
    %316 = vmatpush1.msra.mxu0 0.0
    %317 = vmatprep.subr.mxu0 0.0
    %318 = vmatpush1.msra.mxu0 0.0
    %319 = vmatprep.subr.mxu0 0.0
    %320 = vmatpush1.msra.mxu0 0.0
    %321 = vmatprep.subr.mxu0 0.0
    %322 = vmatpush1.msra.mxu0 0.0
    %323 = vmatprep.subr.mxu0 0.0
    %324 = vmatpush1.msra.mxu0 0.0
    %325 = vmatprep.subr.mxu0 0.0
    %326 = vmatpush1.msra.mxu0 0.0
    %327 = vmatprep.subr.mxu0 0.0
    %328 = vmatpush1.msra.mxu0 0.0
    %329 = vmatprep.mubr.f32.mxu0 0.0
    %330 = vmatmul.mubr.f32.gmra.mrb[0].mxu0 %v263
    %v331 = vpop.f32.mrb[0].mxu0
    %v332 = vadd.f32 %v259, %v331
    %v333 = vpop.f32.mrb[0].mxu0
    %334 = vdwg.mxu0
    %vm335 = vcmp.ge.f32.partialorder %v332, 0.0
    %v336 = vmul.f32 %v332, 0.01
    %v337 = vsel %vm335, %v332, %v336
    %s338 = scalar_lea.vmem [#allocation3], 64
    %v339 = vld [vmem:[%s338] sm:$0xff]
    %v340 = vld [vmem:[%s338 + $0x8] sm:$0xff]
    %v341 = vld [vmem:[%s338 + $0x10] sm:$0xff]
    %v342 = vld [vmem:[%s338 + $0x18] sm:$0xff]
    %v343 = vld [vmem:[%s338 + $0x20] sm:$0xff]
    %v344 = vld [vmem:[%s338 + $0x28] sm:$0xff]
    %v345 = vld [vmem:[%s338 + $0x30] sm:$0xff]
    %v346 = vld [vmem:[%s338 + $0x38] sm:$0xff]
    %s347 = scalar_lea.vmem %s9, 1
    %v348 = vld [vmem:[%s347] sm:$0x1]
    %v350 = vlaneseq
    %v351 = vshrl.u32 %v350, 7
    %v352 = vsub.s32 0, %v351
    %v353 = vrot.slane %v348, %v352
    %v356 = vsel %vm261, %v337, 0
    %358 = vmatprep.subr.mxu0 0.0
    %359 = vmatpush1.msra.mxu0 %v339
    %360 = vmatprep.subr.mxu0 0.0
    %361 = vmatpush1.msra.mxu0 %v340
    %362 = vmatprep.subr.mxu0 0.0
    %363 = vmatpush1.msra.mxu0 %v341
    %364 = vmatprep.subr.mxu0 0.0
    %365 = vmatpush1.msra.mxu0 %v342
    %366 = vmatprep.subr.mxu0 0.0
    %367 = vmatpush1.msra.mxu0 %v343
    %368 = vmatprep.subr.mxu0 0.0
    %369 = vmatpush1.msra.mxu0 %v344
    %370 = vmatprep.subr.mxu0 0.0
    %371 = vmatpush1.msra.mxu0 %v345
    %372 = vmatprep.subr.mxu0 0.0
    %373 = vmatpush1.msra.mxu0 %v346
    %374 = vmatprep.subr.mxu0 0.0
    %375 = vmatpush1.msra.mxu0 0.0
    %376 = vmatprep.subr.mxu0 0.0
    %377 = vmatpush1.msra.mxu0 0.0
    %378 = vmatprep.subr.mxu0 0.0
    %379 = vmatpush1.msra.mxu0 0.0
    %380 = vmatprep.subr.mxu0 0.0
    %381 = vmatpush1.msra.mxu0 0.0
    %382 = vmatprep.subr.mxu0 0.0
    %383 = vmatpush1.msra.mxu0 0.0
    %384 = vmatprep.subr.mxu0 0.0
    %385 = vmatpush1.msra.mxu0 0.0
    %386 = vmatprep.subr.mxu0 0.0
    %387 = vmatpush1.msra.mxu0 0.0
    %388 = vmatprep.subr.mxu0 0.0
    %389 = vmatpush1.msra.mxu0 0.0
    %390 = vmatprep.subr.mxu0 0.0
    %391 = vmatpush1.msra.mxu0 0.0
    %392 = vmatprep.subr.mxu0 0.0
    %393 = vmatpush1.msra.mxu0 0.0
    %394 = vmatprep.subr.mxu0 0.0
    %395 = vmatpush1.msra.mxu0 0.0
    %396 = vmatprep.subr.mxu0 0.0
    %397 = vmatpush1.msra.mxu0 0.0
    %398 = vmatprep.subr.mxu0 0.0
    %399 = vmatpush1.msra.mxu0 0.0
    %400 = vmatprep.subr.mxu0 0.0
    %401 = vmatpush1.msra.mxu0 0.0
    %402 = vmatprep.subr.mxu0 0.0
    %403 = vmatpush1.msra.mxu0 0.0
    %404 = vmatprep.subr.mxu0 0.0
    %405 = vmatpush1.msra.mxu0 0.0
    %406 = vmatprep.subr.mxu0 0.0
    %407 = vmatpush1.msra.mxu0 0.0
    %408 = vmatprep.subr.mxu0 0.0
    %409 = vmatpush1.msra.mxu0 0.0
    %410 = vmatprep.subr.mxu0 0.0
    %411 = vmatpush1.msra.mxu0 0.0
    %412 = vmatprep.subr.mxu0 0.0
    %413 = vmatpush1.msra.mxu0 0.0
    %414 = vmatprep.subr.mxu0 0.0
    %415 = vmatpush1.msra.mxu0 0.0
    %416 = vmatprep.subr.mxu0 0.0
    %417 = vmatpush1.msra.mxu0 0.0
    %418 = vmatprep.subr.mxu0 0.0
    %419 = vmatpush1.msra.mxu0 0.0
    %420 = vmatprep.subr.mxu0 0.0
    %421 = vmatpush1.msra.mxu0 0.0
    %422 = vmatprep.mubr.f32.mxu0 0.0
    %423 = vmatmul.mubr.f32.gmra.mrb[0].mxu0 %v356
    %v424 = vpop.f32.mrb[0].mxu0
    %v425 = vadd.f32 %v353, %v424
    %v426 = vpop.f32.mrb[0].mxu0
    %427 = vdwg.mxu0
    %vm428 = vcmp.ge.f32.partialorder %v425, 0.0
    %v429 = vmul.f32 %v425, 0.01
    %v430 = vsel %vm428, %v425, %v429
    %v431 = vld [vmem:[%s10] sm:$0xff]
    %v432 = vld [vmem:[%s10 + $0x8] sm:$0xff]
    %v433 = vld [vmem:[%s10 + $0x10] sm:$0xff]
    %v434 = vld [vmem:[%s10 + $0x18] sm:$0xff]
    %v435 = vld [vmem:[%s10 + $0x20] sm:$0xff]
    %v436 = vld [vmem:[%s10 + $0x28] sm:$0xff]
    %v437 = vld [vmem:[%s10 + $0x30] sm:$0xff]
    %v438 = vld [vmem:[%s10 + $0x38] sm:$0xff]
    %v439 = vld [vmem:[%s11] sm:$0x1]
    %v441 = vlaneseq
    %v442 = vshrl.u32 %v441, 7
    %v443 = vsub.s32 0, %v442
    %v444 = vrot.slane %v439, %v443
    %v447 = vsel %vm261, %v430, 0
    %449 = vmatprep.subr.mxu0 0.0
    %450 = vmatpush1.msra.mxu0 %v431
    %451 = vmatprep.subr.mxu0 0.0
    %452 = vmatpush1.msra.mxu0 %v432
    %453 = vmatprep.subr.mxu0 0.0
    %454 = vmatpush1.msra.mxu0 %v433
    %455 = vmatprep.subr.mxu0 0.0
    %456 = vmatpush1.msra.mxu0 %v434
    %457 = vmatprep.subr.mxu0 0.0
    %458 = vmatpush1.msra.mxu0 %v435
    %459 = vmatprep.subr.mxu0 0.0
    %460 = vmatpush1.msra.mxu0 %v436
    %461 = vmatprep.subr.mxu0 0.0
    %462 = vmatpush1.msra.mxu0 %v437
    %463 = vmatprep.subr.mxu0 0.0
    %464 = vmatpush1.msra.mxu0 %v438
    %465 = vmatprep.subr.mxu0 0.0
    %466 = vmatpush1.msra.mxu0 0.0
    %467 = vmatprep.subr.mxu0 0.0
    %468 = vmatpush1.msra.mxu0 0.0
    %469 = vmatprep.subr.mxu0 0.0
    %470 = vmatpush1.msra.mxu0 0.0
    %471 = vmatprep.subr.mxu0 0.0
    %472 = vmatpush1.msra.mxu0 0.0
    %473 = vmatprep.subr.mxu0 0.0
    %474 = vmatpush1.msra.mxu0 0.0
    %475 = vmatprep.subr.mxu0 0.0
    %476 = vmatpush1.msra.mxu0 0.0
    %477 = vmatprep.subr.mxu0 0.0
    %478 = vmatpush1.msra.mxu0 0.0
    %479 = vmatprep.subr.mxu0 0.0
    %480 = vmatpush1.msra.mxu0 0.0
    %481 = vmatprep.subr.mxu0 0.0
    %482 = vmatpush1.msra.mxu0 0.0
    %483 = vmatprep.subr.mxu0 0.0
    %484 = vmatpush1.msra.mxu0 0.0
    %485 = vmatprep.subr.mxu0 0.0
    %486 = vmatpush1.msra.mxu0 0.0
    %487 = vmatprep.subr.mxu0 0.0
    %488 = vmatpush1.msra.mxu0 0.0
    %489 = vmatprep.subr.mxu0 0.0
    %490 = vmatpush1.msra.mxu0 0.0
    %491 = vmatprep.subr.mxu0 0.0
    %492 = vmatpush1.msra.mxu0 0.0
    %493 = vmatprep.subr.mxu0 0.0
    %494 = vmatpush1.msra.mxu0 0.0
    %495 = vmatprep.subr.mxu0 0.0
    %496 = vmatpush1.msra.mxu0 0.0
    %497 = vmatprep.subr.mxu0 0.0
    %498 = vmatpush1.msra.mxu0 0.0
    %499 = vmatprep.subr.mxu0 0.0
    %500 = vmatpush1.msra.mxu0 0.0
    %501 = vmatprep.subr.mxu0 0.0
    %502 = vmatpush1.msra.mxu0 0.0
    %503 = vmatprep.subr.mxu0 0.0
    %504 = vmatpush1.msra.mxu0 0.0
    %505 = vmatprep.subr.mxu0 0.0
    %506 = vmatpush1.msra.mxu0 0.0
    %507 = vmatprep.subr.mxu0 0.0
    %508 = vmatpush1.msra.mxu0 0.0
    %509 = vmatprep.subr.mxu0 0.0
    %510 = vmatpush1.msra.mxu0 0.0
    %511 = vmatprep.subr.mxu0 0.0
    %512 = vmatpush1.msra.mxu0 0.0
    %513 = vmatprep.mubr.f32.mxu0 0.0
    %514 = vmatmul.mubr.f32.gmra.mrb[0].mxu0 %v447
    %v515 = vpop.f32.mrb[0].mxu0
    %v516 = vadd.f32 %v444, %v515
    %v517 = vpop.f32.mrb[0].mxu0
    %518 = vdwg.mxu0
    %v519 = vmul.f32 %v516, 1.442695
    %v520 = vpow.pop %v519
    %522 = vrot.lane.b32.xlu0 %v520, 8
    %v523 = vpop.permute.xlu0 %522
    %v525 = vmul.f32 %v85, %v523
    %v526 = vadd.f32 %v525, %v516
    %v527 = vsel %vm88, %v516, 0.0
    %528 = vadd.xlane.f32.xlu0 %v527
    %v529 = vpop.xlane.xlu0 %528
    %v530 = vadd.f32 %v529, 0.0
    %s531 = scalar_lea.vmem %s5, 8
    %v532 = vld [vmem:[%s531] sm:$0xff]
    %s533 = scalar_lea.vmem %s6, 8
    %v534 = vld [vmem:[%s533] sm:$0xff]
    %535 = vmatprep.subr.mxu0 0.0
    %536 = vmatpush1.msra.mxu0 %v534
    %537 = vmatprep.subr.mxu0 0.0
    %538 = vmatpush1.msra.mxu0 0.0
    %539 = vmatprep.subr.mxu0 0.0
    %540 = vmatpush1.msra.mxu0 0.0
    %541 = vmatprep.subr.mxu0 0.0
    %542 = vmatpush1.msra.mxu0 0.0
    %543 = vmatprep.subr.mxu0 0.0
    %544 = vmatpush1.msra.mxu0 0.0
    %545 = vmatprep.subr.mxu0 0.0
    %546 = vmatpush1.msra.mxu0 0.0
    %547 = vmatprep.subr.mxu0 0.0
    %548 = vmatpush1.msra.mxu0 0.0
    %549 = vmatprep.subr.mxu0 0.0
    %550 = vmatpush1.msra.mxu0 0.0
    %551 = vmatprep.subr.mxu0 0.0
    %552 = vmatpush1.msra.mxu0 0.0
    %553 = vmatprep.subr.mxu0 0.0
    %554 = vmatpush1.msra.mxu0 0.0
    %555 = vmatprep.subr.mxu0 0.0
    %556 = vmatpush1.msra.mxu0 0.0
    %557 = vmatprep.subr.mxu0 0.0
    %558 = vmatpush1.msra.mxu0 0.0
    %559 = vmatprep.subr.mxu0 0.0
    %560 = vmatpush1.msra.mxu0 0.0
    %561 = vmatprep.subr.mxu0 0.0
    %562 = vmatpush1.msra.mxu0 0.0
    %563 = vmatprep.subr.mxu0 0.0
    %564 = vmatpush1.msra.mxu0 0.0
    %565 = vmatprep.subr.mxu0 0.0
    %566 = vmatpush1.msra.mxu0 0.0
    %567 = vmatprep.subr.mxu0 0.0
    %568 = vmatpush1.msra.mxu0 0.0
    %569 = vmatprep.subr.mxu0 0.0
    %570 = vmatpush1.msra.mxu0 0.0
    %571 = vmatprep.subr.mxu0 0.0
    %572 = vmatpush1.msra.mxu0 0.0
    %573 = vmatprep.subr.mxu0 0.0
    %574 = vmatpush1.msra.mxu0 0.0
    %575 = vmatprep.subr.mxu0 0.0
    %576 = vmatpush1.msra.mxu0 0.0
    %577 = vmatprep.subr.mxu0 0.0
    %578 = vmatpush1.msra.mxu0 0.0
    %579 = vmatprep.subr.mxu0 0.0
    %580 = vmatpush1.msra.mxu0 0.0
    %581 = vmatprep.subr.mxu0 0.0
    %582 = vmatpush1.msra.mxu0 0.0
    %583 = vmatprep.subr.mxu0 0.0
    %584 = vmatpush1.msra.mxu0 0.0
    %585 = vmatprep.subr.mxu0 0.0
    %586 = vmatpush1.msra.mxu0 0.0
    %587 = vmatprep.subr.mxu0 0.0
    %588 = vmatpush1.msra.mxu0 0.0
    %589 = vmatprep.subr.mxu0 0.0
    %590 = vmatpush1.msra.mxu0 0.0
    %591 = vmatprep.subr.mxu0 0.0
    %592 = vmatpush1.msra.mxu0 0.0
    %593 = vmatprep.subr.mxu0 0.0
    %594 = vmatpush1.msra.mxu0 0.0
    %595 = vmatprep.subr.mxu0 0.0
    %596 = vmatpush1.msra.mxu0 0.0
    %597 = vmatprep.subr.mxu0 0.0
    %598 = vmatpush1.msra.mxu0 0.0
    %599 = vmatprep.mubr.f32.mxu0 0.0
    %600 = vmatmul.mubr.f32.gmra.mrb[0].mxu0 %v90
    %v601 = vpop.f32.mrb[0].mxu0
    %v602 = vadd.f32 0.0, %v601
    %v603 = vpop.f32.mrb[0].mxu0
    %604 = vdwg.mxu0
    %606 = vrot.lane.b32.xlu0 %v526, 120
    %v607 = vpop.permute.xlu0 %606
    %v608 = vsel %vm88, %v607, 0
    %610 = vmatprep.subr.mxu0 0.0
    %611 = vmatpush1.msra.mxu0 %v532
    %612 = vmatprep.subr.mxu0 0.0
    %613 = vmatpush1.msra.mxu0 0.0
    %614 = vmatprep.subr.mxu0 0.0
    %615 = vmatpush1.msra.mxu0 0.0
    %616 = vmatprep.subr.mxu0 0.0
    %617 = vmatpush1.msra.mxu0 0.0
    %618 = vmatprep.subr.mxu0 0.0
    %619 = vmatpush1.msra.mxu0 0.0
    %620 = vmatprep.subr.mxu0 0.0
    %621 = vmatpush1.msra.mxu0 0.0
    %622 = vmatprep.subr.mxu0 0.0
    %623 = vmatpush1.msra.mxu0 0.0
    %624 = vmatprep.subr.mxu0 0.0
    %625 = vmatpush1.msra.mxu0 0.0
    %626 = vmatprep.subr.mxu0 0.0
    %627 = vmatpush1.msra.mxu0 0.0
    %628 = vmatprep.subr.mxu0 0.0
    %629 = vmatpush1.msra.mxu0 0.0
    %630 = vmatprep.subr.mxu0 0.0
    %631 = vmatpush1.msra.mxu0 0.0
    %632 = vmatprep.subr.mxu0 0.0
    %633 = vmatpush1.msra.mxu0 0.0
    %634 = vmatprep.subr.mxu0 0.0
    %635 = vmatpush1.msra.mxu0 0.0
    %636 = vmatprep.subr.mxu0 0.0
    %637 = vmatpush1.msra.mxu0 0.0
    %638 = vmatprep.subr.mxu0 0.0
    %639 = vmatpush1.msra.mxu0 0.0
    %640 = vmatprep.subr.mxu0 0.0
    %641 = vmatpush1.msra.mxu0 0.0
    %642 = vmatprep.subr.mxu0 0.0
    %643 = vmatpush1.msra.mxu0 0.0
    %644 = vmatprep.subr.mxu0 0.0
    %645 = vmatpush1.msra.mxu0 0.0
    %646 = vmatprep.subr.mxu0 0.0
    %647 = vmatpush1.msra.mxu0 0.0
    %648 = vmatprep.subr.mxu0 0.0
    %649 = vmatpush1.msra.mxu0 0.0
    %650 = vmatprep.subr.mxu0 0.0
    %651 = vmatpush1.msra.mxu0 0.0
    %652 = vmatprep.subr.mxu0 0.0
    %653 = vmatpush1.msra.mxu0 0.0
    %654 = vmatprep.subr.mxu0 0.0
    %655 = vmatpush1.msra.mxu0 0.0
    %656 = vmatprep.subr.mxu0 0.0
    %657 = vmatpush1.msra.mxu0 0.0
    %658 = vmatprep.subr.mxu0 0.0
    %659 = vmatpush1.msra.mxu0 0.0
    %660 = vmatprep.subr.mxu0 0.0
    %661 = vmatpush1.msra.mxu0 0.0
    %662 = vmatprep.subr.mxu0 0.0
    %663 = vmatpush1.msra.mxu0 0.0
    %664 = vmatprep.subr.mxu0 0.0
    %665 = vmatpush1.msra.mxu0 0.0
    %666 = vmatprep.subr.mxu0 0.0
    %667 = vmatpush1.msra.mxu0 0.0
    %668 = vmatprep.subr.mxu0 0.0
    %669 = vmatpush1.msra.mxu0 0.0
    %670 = vmatprep.subr.mxu0 0.0
    %671 = vmatpush1.msra.mxu0 0.0
    %672 = vmatprep.subr.mxu0 0.0
    %673 = vmatpush1.msra.mxu0 0.0
    %674 = vmatprep.mubr.f32.mxu0 0.0
    %675 = vmatmul.mubr.f32.gmra.mrb[0].mxu0 %v608
    %v676 = vpop.f32.mrb[0].mxu0
    %v677 = vadd.f32 %v602, %v676
    %v678 = vpop.f32.mrb[0].mxu0
    %679 = vdwg.mxu0
    %s680 = scalar_lea.vmem %s7, 1
    %v681 = vld [vmem:[%s680] sm:$0x1]
    %v683 = vlaneseq
    %v684 = vshrl.u32 %v683, 7
    %v685 = vsub.s32 0, %v684
    %v686 = vrot.slane %v681, %v685
    %v688 = vadd.f32 %v677, %v686
    %vm689 = vcmp.ge.f32.partialorder %v688, 0.0
    %v690 = vmul.f32 %v688, 0.01
    %v691 = vsel %vm689, %v688, %v690
    %s692 = scalar_lea.vmem [#allocation3], 128
    %v693 = vld [vmem:[%s692] sm:$0xff]
    %v694 = vld [vmem:[%s692 + $0x8] sm:$0xff]
    %v695 = vld [vmem:[%s692 + $0x10] sm:$0xff]
    %v696 = vld [vmem:[%s692 + $0x18] sm:$0xff]
    %v697 = vld [vmem:[%s692 + $0x20] sm:$0xff]
    %v698 = vld [vmem:[%s692 + $0x28] sm:$0xff]
    %v699 = vld [vmem:[%s692 + $0x30] sm:$0xff]
    %v700 = vld [vmem:[%s692 + $0x38] sm:$0xff]
    %s701 = scalar_lea.vmem %s9, 2
    %v702 = vld [vmem:[%s701] sm:$0x1]
    %v704 = vlaneseq
    %v705 = vshrl.u32 %v704, 7
    %v706 = vsub.s32 0, %v705
    %v707 = vrot.slane %v702, %v706
    %v710 = vsel %vm261, %v691, 0
    %712 = vmatprep.subr.mxu0 0.0
    %713 = vmatpush1.msra.mxu0 %v693
    %714 = vmatprep.subr.mxu0 0.0
    %715 = vmatpush1.msra.mxu0 %v694
    %716 = vmatprep.subr.mxu0 0.0
    %717 = vmatpush1.msra.mxu0 %v695
    %718 = vmatprep.subr.mxu0 0.0
    %719 = vmatpush1.msra.mxu0 %v696
    %720 = vmatprep.subr.mxu0 0.0
    %721 = vmatpush1.msra.mxu0 %v697
    %722 = vmatprep.subr.mxu0 0.0
    %723 = vmatpush1.msra.mxu0 %v698
    %724 = vmatprep.subr.mxu0 0.0
    %725 = vmatpush1.msra.mxu0 %v699
    %726 = vmatprep.subr.mxu0 0.0
    %727 = vmatpush1.msra.mxu0 %v700
    %728 = vmatprep.subr.mxu0 0.0
    %729 = vmatpush1.msra.mxu0 0.0
    %730 = vmatprep.subr.mxu0 0.0
    %731 = vmatpush1.msra.mxu0 0.0
    %732 = vmatprep.subr.mxu0 0.0
    %733 = vmatpush1.msra.mxu0 0.0
    %734 = vmatprep.subr.mxu0 0.0
    %735 = vmatpush1.msra.mxu0 0.0
    %736 = vmatprep.subr.mxu0 0.0
    %737 = vmatpush1.msra.mxu0 0.0
    %738 = vmatprep.subr.mxu0 0.0
    %739 = vmatpush1.msra.mxu0 0.0
    %740 = vmatprep.subr.mxu0 0.0
    %741 = vmatpush1.msra.mxu0 0.0
    %742 = vmatprep.subr.mxu0 0.0
    %743 = vmatpush1.msra.mxu0 0.0
    %744 = vmatprep.subr.mxu0 0.0
    %745 = vmatpush1.msra.mxu0 0.0
    %746 = vmatprep.subr.mxu0 0.0
    %747 = vmatpush1.msra.mxu0 0.0
    %748 = vmatprep.subr.mxu0 0.0
    %749 = vmatpush1.msra.mxu0 0.0
    %750 = vmatprep.subr.mxu0 0.0
    %751 = vmatpush1.msra.mxu0 0.0
    %752 = vmatprep.subr.mxu0 0.0
    %753 = vmatpush1.msra.mxu0 0.0
    %754 = vmatprep.subr.mxu0 0.0
    %755 = vmatpush1.msra.mxu0 0.0
    %756 = vmatprep.subr.mxu0 0.0
    %757 = vmatpush1.msra.mxu0 0.0
    %758 = vmatprep.subr.mxu0 0.0
    %759 = vmatpush1.msra.mxu0 0.0
    %760 = vmatprep.subr.mxu0 0.0
    %761 = vmatpush1.msra.mxu0 0.0
    %762 = vmatprep.subr.mxu0 0.0
    %763 = vmatpush1.msra.mxu0 0.0
    %764 = vmatprep.subr.mxu0 0.0
    %765 = vmatpush1.msra.mxu0 0.0
    %766 = vmatprep.subr.mxu0 0.0
    %767 = vmatpush1.msra.mxu0 0.0
    %768 = vmatprep.subr.mxu0 0.0
    %769 = vmatpush1.msra.mxu0 0.0
    %770 = vmatprep.subr.mxu0 0.0
    %771 = vmatpush1.msra.mxu0 0.0
    %772 = vmatprep.subr.mxu0 0.0
    %773 = vmatpush1.msra.mxu0 0.0
    %774 = vmatprep.subr.mxu0 0.0
    %775 = vmatpush1.msra.mxu0 0.0
    %776 = vmatprep.mubr.f32.mxu0 0.0
    %777 = vmatmul.mubr.f32.gmra.mrb[0].mxu0 %v710
    %v778 = vpop.f32.mrb[0].mxu0
    %v779 = vadd.f32 %v707, %v778
    %v780 = vpop.f32.mrb[0].mxu0
    %781 = vdwg.mxu0
    %vm782 = vcmp.ge.f32.partialorder %v779, 0.0
    %v783 = vmul.f32 %v779, 0.01
    %v784 = vsel %vm782, %v779, %v783
    %s785 = scalar_lea.vmem [#allocation3], 192
    %v786 = vld [vmem:[%s785] sm:$0xff]
    %v787 = vld [vmem:[%s785 + $0x8] sm:$0xff]
    %v788 = vld [vmem:[%s785 + $0x10] sm:$0xff]
    %v789 = vld [vmem:[%s785 + $0x18] sm:$0xff]
    %v790 = vld [vmem:[%s785 + $0x20] sm:$0xff]
    %v791 = vld [vmem:[%s785 + $0x28] sm:$0xff]
    %v792 = vld [vmem:[%s785 + $0x30] sm:$0xff]
    %v793 = vld [vmem:[%s785 + $0x38] sm:$0xff]
    %s794 = scalar_lea.vmem %s9, 3
    %v795 = vld [vmem:[%s794] sm:$0x1]
    %v797 = vlaneseq
    %v798 = vshrl.u32 %v797, 7
    %v799 = vsub.s32 0, %v798
    %v800 = vrot.slane %v795, %v799
    %v803 = vsel %vm261, %v784, 0
    %805 = vmatprep.subr.mxu0 0.0
    %806 = vmatpush1.msra.mxu0 %v786
    %807 = vmatprep.subr.mxu0 0.0
    %808 = vmatpush1.msra.mxu0 %v787
    %809 = vmatprep.subr.mxu0 0.0
    %810 = vmatpush1.msra.mxu0 %v788
    %811 = vmatprep.subr.mxu0 0.0
    %812 = vmatpush1.msra.mxu0 %v789
    %813 = vmatprep.subr.mxu0 0.0
    %814 = vmatpush1.msra.mxu0 %v790
    %815 = vmatprep.subr.mxu0 0.0
    %816 = vmatpush1.msra.mxu0 %v791
    %817 = vmatprep.subr.mxu0 0.0
    %818 = vmatpush1.msra.mxu0 %v792
    %819 = vmatprep.subr.mxu0 0.0
    %820 = vmatpush1.msra.mxu0 %v793
    %821 = vmatprep.subr.mxu0 0.0
    %822 = vmatpush1.msra.mxu0 0.0
    %823 = vmatprep.subr.mxu0 0.0
    %824 = vmatpush1.msra.mxu0 0.0
    %825 = vmatprep.subr.mxu0 0.0
    %826 = vmatpush1.msra.mxu0 0.0
    %827 = vmatprep.subr.mxu0 0.0
    %828 = vmatpush1.msra.mxu0 0.0
    %829 = vmatprep.subr.mxu0 0.0
    %830 = vmatpush1.msra.mxu0 0.0
    %831 = vmatprep.subr.mxu0 0.0
    %832 = vmatpush1.msra.mxu0 0.0
    %833 = vmatprep.subr.mxu0 0.0
    %834 = vmatpush1.msra.mxu0 0.0
    %835 = vmatprep.subr.mxu0 0.0
    %836 = vmatpush1.msra.mxu0 0.0
    %837 = vmatprep.subr.mxu0 0.0
    %838 = vmatpush1.msra.mxu0 0.0
    %839 = vmatprep.subr.mxu0 0.0
    %840 = vmatpush1.msra.mxu0 0.0
    %841 = vmatprep.subr.mxu0 0.0
    %842 = vmatpush1.msra.mxu0 0.0
    %843 = vmatprep.subr.mxu0 0.0
    %844 = vmatpush1.msra.mxu0 0.0
    %845 = vmatprep.subr.mxu0 0.0
    %846 = vmatpush1.msra.mxu0 0.0
    %847 = vmatprep.subr.mxu0 0.0
    %848 = vmatpush1.msra.mxu0 0.0
    %849 = vmatprep.subr.mxu0 0.0
    %850 = vmatpush1.msra.mxu0 0.0
    %851 = vmatprep.subr.mxu0 0.0
    %852 = vmatpush1.msra.mxu0 0.0
    %853 = vmatprep.subr.mxu0 0.0
    %854 = vmatpush1.msra.mxu0 0.0
    %855 = vmatprep.subr.mxu0 0.0
    %856 = vmatpush1.msra.mxu0 0.0
    %857 = vmatprep.subr.mxu0 0.0
    %858 = vmatpush1.msra.mxu0 0.0
    %859 = vmatprep.subr.mxu0 0.0
    %860 = vmatpush1.msra.mxu0 0.0
    %861 = vmatprep.subr.mxu0 0.0
    %862 = vmatpush1.msra.mxu0 0.0
    %863 = vmatprep.subr.mxu0 0.0
    %864 = vmatpush1.msra.mxu0 0.0
    %865 = vmatprep.subr.mxu0 0.0
    %866 = vmatpush1.msra.mxu0 0.0
    %867 = vmatprep.subr.mxu0 0.0
    %868 = vmatpush1.msra.mxu0 0.0
    %869 = vmatprep.mubr.f32.mxu0 0.0
    %870 = vmatmul.mubr.f32.gmra.mrb[0].mxu0 %v803
    %v871 = vpop.f32.mrb[0].mxu0
    %v872 = vadd.f32 %v800, %v871
    %v873 = vpop.f32.mrb[0].mxu0
    %874 = vdwg.mxu0
    %vm875 = vcmp.ge.f32.partialorder %v872, 0.0
    %v876 = vmul.f32 %v872, 0.01
    %v877 = vsel %vm875, %v872, %v876
    %s878 = scalar_lea.vmem %s10, 64
    %v879 = vld [vmem:[%s878] sm:$0xff]
    %v880 = vld [vmem:[%s878 + $0x8] sm:$0xff]
    %v881 = vld [vmem:[%s878 + $0x10] sm:$0xff]
    %v882 = vld [vmem:[%s878 + $0x18] sm:$0xff]
    %v883 = vld [vmem:[%s878 + $0x20] sm:$0xff]
    %v884 = vld [vmem:[%s878 + $0x28] sm:$0xff]
    %v885 = vld [vmem:[%s878 + $0x30] sm:$0xff]
    %v886 = vld [vmem:[%s878 + $0x38] sm:$0xff]
    %s887 = scalar_lea.vmem %s11, 1
    %v888 = vld [vmem:[%s887] sm:$0x1]
    %v890 = vlaneseq
    %v891 = vshrl.u32 %v890, 7
    %v892 = vsub.s32 0, %v891
    %v893 = vrot.slane %v888, %v892
    %v896 = vsel %vm261, %v877, 0
    %898 = vmatprep.subr.mxu0 0.0
    %899 = vmatpush1.msra.mxu0 %v879
    %900 = vmatprep.subr.mxu0 0.0
    %901 = vmatpush1.msra.mxu0 %v880
    %902 = vmatprep.subr.mxu0 0.0
    %903 = vmatpush1.msra.mxu0 %v881
    %904 = vmatprep.subr.mxu0 0.0
    %905 = vmatpush1.msra.mxu0 %v882
    %906 = vmatprep.subr.mxu0 0.0
    %907 = vmatpush1.msra.mxu0 %v883
    %908 = vmatprep.subr.mxu0 0.0
    %909 = vmatpush1.msra.mxu0 %v884
    %910 = vmatprep.subr.mxu0 0.0
    %911 = vmatpush1.msra.mxu0 %v885
    %912 = vmatprep.subr.mxu0 0.0
    %913 = vmatpush1.msra.mxu0 %v886
    %914 = vmatprep.subr.mxu0 0.0
    %915 = vmatpush1.msra.mxu0 0.0
    %916 = vmatprep.subr.mxu0 0.0
    %917 = vmatpush1.msra.mxu0 0.0
    %918 = vmatprep.subr.mxu0 0.0
    %919 = vmatpush1.msra.mxu0 0.0
    %920 = vmatprep.subr.mxu0 0.0
    %921 = vmatpush1.msra.mxu0 0.0
    %922 = vmatprep.subr.mxu0 0.0
    %923 = vmatpush1.msra.mxu0 0.0
    %924 = vmatprep.subr.mxu0 0.0
    %925 = vmatpush1.msra.mxu0 0.0
    %926 = vmatprep.subr.mxu0 0.0
    %927 = vmatpush1.msra.mxu0 0.0
    %928 = vmatprep.subr.mxu0 0.0
    %929 = vmatpush1.msra.mxu0 0.0
    %930 = vmatprep.subr.mxu0 0.0
    %931 = vmatpush1.msra.mxu0 0.0
    %932 = vmatprep.subr.mxu0 0.0
    %933 = vmatpush1.msra.mxu0 0.0
    %934 = vmatprep.subr.mxu0 0.0
    %935 = vmatpush1.msra.mxu0 0.0
    %936 = vmatprep.subr.mxu0 0.0
    %937 = vmatpush1.msra.mxu0 0.0
    %938 = vmatprep.subr.mxu0 0.0
    %939 = vmatpush1.msra.mxu0 0.0
    %940 = vmatprep.subr.mxu0 0.0
    %941 = vmatpush1.msra.mxu0 0.0
    %942 = vmatprep.subr.mxu0 0.0
    %943 = vmatpush1.msra.mxu0 0.0
    %944 = vmatprep.subr.mxu0 0.0
    %945 = vmatpush1.msra.mxu0 0.0
    %946 = vmatprep.subr.mxu0 0.0
    %947 = vmatpush1.msra.mxu0 0.0
    %948 = vmatprep.subr.mxu0 0.0
    %949 = vmatpush1.msra.mxu0 0.0
    %950 = vmatprep.subr.mxu0 0.0
    %951 = vmatpush1.msra.mxu0 0.0
    %952 = vmatprep.subr.mxu0 0.0
    %953 = vmatpush1.msra.mxu0 0.0
    %954 = vmatprep.subr.mxu0 0.0
    %955 = vmatpush1.msra.mxu0 0.0
    %956 = vmatprep.subr.mxu0 0.0
    %957 = vmatpush1.msra.mxu0 0.0
    %958 = vmatprep.subr.mxu0 0.0
    %959 = vmatpush1.msra.mxu0 0.0
    %960 = vmatprep.subr.mxu0 0.0
    %961 = vmatpush1.msra.mxu0 0.0
    %962 = vmatprep.mubr.f32.mxu0 0.0
    %963 = vmatmul.mubr.f32.gmra.mrb[0].mxu0 %v896
    %v964 = vpop.f32.mrb[0].mxu0
    %v965 = vadd.f32 %v893, %v964
    %v966 = vpop.f32.mrb[0].mxu0
    %967 = vdwg.mxu0
    %v968 = vmul.f32 %v965, 1.442695
    %v969 = vpow.pop %v968
    %v970 = vmul.f32 %v85, %v969
    %972 = vrot.lane.b32.xlu0 %v965, 120
    %v973 = vpop.permute.xlu0 %972
    %v975 = vadd.f32 %v970, %v973
    %v976 = vsel %vm88, %v965, 0.0
    %977 = vadd.xlane.f32.xlu0 %v976
    %v978 = vpop.xlane.xlu0 %977
    %v979 = vadd.f32 %v530, %v978
    %v980 = vld [vmem:[%s12] sm:$0xff]
    %v981 = vld [vmem:[%s13] sm:$0xff]
    %982 = vmatprep.subr.mxu0 0.0
    %983 = vmatpush1.msra.mxu0 %v981
    %984 = vmatprep.subr.mxu0 0.0
    %985 = vmatpush1.msra.mxu0 0.0
    %986 = vmatprep.subr.mxu0 0.0
    %987 = vmatpush1.msra.mxu0 0.0
    %988 = vmatprep.subr.mxu0 0.0
    %989 = vmatpush1.msra.mxu0 0.0
    %990 = vmatprep.subr.mxu0 0.0
    %991 = vmatpush1.msra.mxu0 0.0
    %992 = vmatprep.subr.mxu0 0.0
    %993 = vmatpush1.msra.mxu0 0.0
    %994 = vmatprep.subr.mxu0 0.0
    %995 = vmatpush1.msra.mxu0 0.0
    %996 = vmatprep.subr.mxu0 0.0
    %997 = vmatpush1.msra.mxu0 0.0
    %998 = vmatprep.subr.mxu0 0.0
    %999 = vmatpush1.msra.mxu0 0.0
    %1000 = vmatprep.subr.mxu0 0.0
    %1001 = vmatpush1.msra.mxu0 0.0
    %1002 = vmatprep.subr.mxu0 0.0
    %1003 = vmatpush1.msra.mxu0 0.0
    %1004 = vmatprep.subr.mxu0 0.0
    %1005 = vmatpush1.msra.mxu0 0.0
    %1006 = vmatprep.subr.mxu0 0.0
    %1007 = vmatpush1.msra.mxu0 0.0
    %1008 = vmatprep.subr.mxu0 0.0
    %1009 = vmatpush1.msra.mxu0 0.0
    %1010 = vmatprep.subr.mxu0 0.0
    %1011 = vmatpush1.msra.mxu0 0.0
    %1012 = vmatprep.subr.mxu0 0.0
    %1013 = vmatpush1.msra.mxu0 0.0
    %1014 = vmatprep.subr.mxu0 0.0
    %1015 = vmatpush1.msra.mxu0 0.0
    %1016 = vmatprep.subr.mxu0 0.0
    %1017 = vmatpush1.msra.mxu0 0.0
    %1018 = vmatprep.subr.mxu0 0.0
    %1019 = vmatpush1.msra.mxu0 0.0
    %1020 = vmatprep.subr.mxu0 0.0
    %1021 = vmatpush1.msra.mxu0 0.0
    %1022 = vmatprep.subr.mxu0 0.0
    %1023 = vmatpush1.msra.mxu0 0.0
    %1024 = vmatprep.subr.mxu0 0.0
    %1025 = vmatpush1.msra.mxu0 0.0
    %1026 = vmatprep.subr.mxu0 0.0
    %1027 = vmatpush1.msra.mxu0 0.0
    %1028 = vmatprep.subr.mxu0 0.0
    %1029 = vmatpush1.msra.mxu0 0.0
    %1030 = vmatprep.subr.mxu0 0.0
    %1031 = vmatpush1.msra.mxu0 0.0
    %1032 = vmatprep.subr.mxu0 0.0
    %1033 = vmatpush1.msra.mxu0 0.0
    %1034 = vmatprep.subr.mxu0 0.0
    %1035 = vmatpush1.msra.mxu0 0.0
    %1036 = vmatprep.subr.mxu0 0.0
    %1037 = vmatpush1.msra.mxu0 0.0
    %1038 = vmatprep.subr.mxu0 0.0
    %1039 = vmatpush1.msra.mxu0 0.0
    %1040 = vmatprep.subr.mxu0 0.0
    %1041 = vmatpush1.msra.mxu0 0.0
    %1042 = vmatprep.subr.mxu0 0.0
    %1043 = vmatpush1.msra.mxu0 0.0
    %1044 = vmatprep.subr.mxu0 0.0
    %1045 = vmatpush1.msra.mxu0 0.0
    %1046 = vmatprep.mubr.f32.mxu0 0.0
    %1047 = vmatmul.mubr.f32.gmra.mrb[0].mxu0 %v608
    %v1048 = vpop.f32.mrb[0].mxu0
    %v1049 = vadd.f32 0.0, %v1048
    %v1050 = vpop.f32.mrb[0].mxu0
    %1051 = vdwg.mxu0
    %v1053 = vsel %vm88, %v975, 0
    %1055 = vmatprep.subr.mxu0 0.0
    %1056 = vmatpush1.msra.mxu0 %v980
    %1057 = vmatprep.subr.mxu0 0.0
    %1058 = vmatpush1.msra.mxu0 0.0
    %1059 = vmatprep.subr.mxu0 0.0
    %1060 = vmatpush1.msra.mxu0 0.0
    %1061 = vmatprep.subr.mxu0 0.0
    %1062 = vmatpush1.msra.mxu0 0.0
    %1063 = vmatprep.subr.mxu0 0.0
    %1064 = vmatpush1.msra.mxu0 0.0
    %1065 = vmatprep.subr.mxu0 0.0
    %1066 = vmatpush1.msra.mxu0 0.0
    %1067 = vmatprep.subr.mxu0 0.0
    %1068 = vmatpush1.msra.mxu0 0.0
    %1069 = vmatprep.subr.mxu0 0.0
    %1070 = vmatpush1.msra.mxu0 0.0
    %1071 = vmatprep.subr.mxu0 0.0
    %1072 = vmatpush1.msra.mxu0 0.0
    %1073 = vmatprep.subr.mxu0 0.0
    %1074 = vmatpush1.msra.mxu0 0.0
    %1075 = vmatprep.subr.mxu0 0.0
    %1076 = vmatpush1.msra.mxu0 0.0
    %1077 = vmatprep.subr.mxu0 0.0
    %1078 = vmatpush1.msra.mxu0 0.0
    %1079 = vmatprep.subr.mxu0 0.0
    %1080 = vmatpush1.msra.mxu0 0.0
    %1081 = vmatprep.subr.mxu0 0.0
    %1082 = vmatpush1.msra.mxu0 0.0
    %1083 = vmatprep.subr.mxu0 0.0
    %1084 = vmatpush1.msra.mxu0 0.0
    %1085 = vmatprep.subr.mxu0 0.0
    %1086 = vmatpush1.msra.mxu0 0.0
    %1087 = vmatprep.subr.mxu0 0.0
    %1088 = vmatpush1.msra.mxu0 0.0
    %1089 = vmatprep.subr.mxu0 0.0
    %1090 = vmatpush1.msra.mxu0 0.0
    %1091 = vmatprep.subr.mxu0 0.0
    %1092 = vmatpush1.msra.mxu0 0.0
    %1093 = vmatprep.subr.mxu0 0.0
    %1094 = vmatpush1.msra.mxu0 0.0
    %1095 = vmatprep.subr.mxu0 0.0
    %1096 = vmatpush1.msra.mxu0 0.0
    %1097 = vmatprep.subr.mxu0 0.0
    %1098 = vmatpush1.msra.mxu0 0.0
    %1099 = vmatprep.subr.mxu0 0.0
    %1100 = vmatpush1.msra.mxu0 0.0
    %1101 = vmatprep.subr.mxu0 0.0
    %1102 = vmatpush1.msra.mxu0 0.0
    %1103 = vmatprep.subr.mxu0 0.0
    %1104 = vmatpush1.msra.mxu0 0.0
    %1105 = vmatprep.subr.mxu0 0.0
    %1106 = vmatpush1.msra.mxu0 0.0
    %1107 = vmatprep.subr.mxu0 0.0
    %1108 = vmatpush1.msra.mxu0 0.0
    %1109 = vmatprep.subr.mxu0 0.0
    %1110 = vmatpush1.msra.mxu0 0.0
    %1111 = vmatprep.subr.mxu0 0.0
    %1112 = vmatpush1.msra.mxu0 0.0
    %1113 = vmatprep.subr.mxu0 0.0
    %1114 = vmatpush1.msra.mxu0 0.0
    %1115 = vmatprep.subr.mxu0 0.0
    %1116 = vmatpush1.msra.mxu0 0.0
    %1117 = vmatprep.subr.mxu0 0.0
    %1118 = vmatpush1.msra.mxu0 0.0
    %1119 = vmatprep.mubr.f32.mxu0 0.0
    %1120 = vmatmul.mubr.f32.gmra.mrb[0].mxu0 %v1053
    %v1121 = vpop.f32.mrb[0].mxu0
    %v1122 = vadd.f32 %v1049, %v1121
    %v1123 = vpop.f32.mrb[0].mxu0
    %1124 = vdwg.mxu0
    %s1125 = scalar_lea.vmem %s4, 1
    %v1126 = vld [vmem:[%s1125] sm:$0x1]
    %s1127 = scalar_lea.vmem %s3, 1
    %v1128 = vld [vmem:[%s1127] sm:$0x1]
    %v1130 = vlaneseq
    %v1131 = vshrl.u32 %v1130, 7
    %v1132 = vsub.s32 0, %v1131
    %v1133 = vrot.slane %v1128, %v1132
    %v1135 = vadd.f32 %v1122, %v1133
    %v1137 = vlaneseq
    %v1138 = vshrl.u32 %v1137, 7
    %v1139 = vsub.s32 0, %v1138
    %v1140 = vrot.slane %v1126, %v1139
    %v1142 = vmul.f32 %v1140, %v1135
    %vm1143 = vcmp.ge.f32.partialorder %v1142, 0.0
    %v1144 = vsel %vm1143, 1.0, 0.9
    %v1145 = vmul.f32 %v1142, %v1144
    %s1146 = scalar_lea.vmem %s5, 16
    %v1147 = vld [vmem:[%s1146] sm:$0xff]
    %s1148 = scalar_lea.vmem %s6, 16
    %v1149 = vld [vmem:[%s1148] sm:$0xff]
    %1150 = vmatprep.subr.mxu0 0.0
    %1151 = vmatpush1.msra.mxu0 %v1149
    %1152 = vmatprep.subr.mxu0 0.0
    %1153 = vmatpush1.msra.mxu0 0.0
    %1154 = vmatprep.subr.mxu0 0.0
    %1155 = vmatpush1.msra.mxu0 0.0
    %1156 = vmatprep.subr.mxu0 0.0
    %1157 = vmatpush1.msra.mxu0 0.0
    %1158 = vmatprep.subr.mxu0 0.0
    %1159 = vmatpush1.msra.mxu0 0.0
    %1160 = vmatprep.subr.mxu0 0.0
    %1161 = vmatpush1.msra.mxu0 0.0
    %1162 = vmatprep.subr.mxu0 0.0
    %1163 = vmatpush1.msra.mxu0 0.0
    %1164 = vmatprep.subr.mxu0 0.0
    %1165 = vmatpush1.msra.mxu0 0.0
    %1166 = vmatprep.subr.mxu0 0.0
    %1167 = vmatpush1.msra.mxu0 0.0
    %1168 = vmatprep.subr.mxu0 0.0
    %1169 = vmatpush1.msra.mxu0 0.0
    %1170 = vmatprep.subr.mxu0 0.0
    %1171 = vmatpush1.msra.mxu0 0.0
    %1172 = vmatprep.subr.mxu0 0.0
    %1173 = vmatpush1.msra.mxu0 0.0
    %1174 = vmatprep.subr.mxu0 0.0
    %1175 = vmatpush1.msra.mxu0 0.0
    %1176 = vmatprep.subr.mxu0 0.0
    %1177 = vmatpush1.msra.mxu0 0.0
    %1178 = vmatprep.subr.mxu0 0.0
    %1179 = vmatpush1.msra.mxu0 0.0
    %1180 = vmatprep.subr.mxu0 0.0
    %1181 = vmatpush1.msra.mxu0 0.0
    %1182 = vmatprep.subr.mxu0 0.0
    %1183 = vmatpush1.msra.mxu0 0.0
    %1184 = vmatprep.subr.mxu0 0.0
    %1185 = vmatpush1.msra.mxu0 0.0
    %1186 = vmatprep.subr.mxu0 0.0
    %1187 = vmatpush1.msra.mxu0 0.0
    %1188 = vmatprep.subr.mxu0 0.0
    %1189 = vmatpush1.msra.mxu0 0.0
    %1190 = vmatprep.subr.mxu0 0.0
    %1191 = vmatpush1.msra.mxu0 0.0
    %1192 = vmatprep.subr.mxu0 0.0
    %1193 = vmatpush1.msra.mxu0 0.0
    %1194 = vmatprep.subr.mxu0 0.0
    %1195 = vmatpush1.msra.mxu0 0.0
    %1196 = vmatprep.subr.mxu0 0.0
    %1197 = vmatpush1.msra.mxu0 0.0
    %1198 = vmatprep.subr.mxu0 0.0
    %1199 = vmatpush1.msra.mxu0 0.0
    %1200 = vmatprep.subr.mxu0 0.0
    %1201 = vmatpush1.msra.mxu0 0.0
    %1202 = vmatprep.subr.mxu0 0.0
    %1203 = vmatpush1.msra.mxu0 0.0
    %1204 = vmatprep.subr.mxu0 0.0
    %1205 = vmatpush1.msra.mxu0 0.0
    %1206 = vmatprep.subr.mxu0 0.0
    %1207 = vmatpush1.msra.mxu0 0.0
    %1208 = vmatprep.subr.mxu0 0.0
    %1209 = vmatpush1.msra.mxu0 0.0
    %1210 = vmatprep.subr.mxu0 0.0
    %1211 = vmatpush1.msra.mxu0 0.0
    %1212 = vmatprep.subr.mxu0 0.0
    %1213 = vmatpush1.msra.mxu0 0.0
    %1214 = vmatprep.mubr.f32.mxu0 0.0
    %1215 = vmatmul.mubr.f32.gmra.mrb[0].mxu0 %v90
    %v1216 = vpop.f32.mrb[0].mxu0
    %v1217 = vadd.f32 0.0, %v1216
    %v1218 = vpop.f32.mrb[0].mxu0
    %1219 = vdwg.mxu0
    %v1221 = vsel %vm88, %v1145, 0
    %1223 = vmatprep.subr.mxu0 0.0
    %1224 = vmatpush1.msra.mxu0 %v1147
    %1225 = vmatprep.subr.mxu0 0.0
    %1226 = vmatpush1.msra.mxu0 0.0
    %1227 = vmatprep.subr.mxu0 0.0
    %1228 = vmatpush1.msra.mxu0 0.0
    %1229 = vmatprep.subr.mxu0 0.0
    %1230 = vmatpush1.msra.mxu0 0.0
    %1231 = vmatprep.subr.mxu0 0.0
    %1232 = vmatpush1.msra.mxu0 0.0
    %1233 = vmatprep.subr.mxu0 0.0
    %1234 = vmatpush1.msra.mxu0 0.0
    %1235 = vmatprep.subr.mxu0 0.0
    %1236 = vmatpush1.msra.mxu0 0.0
    %1237 = vmatprep.subr.mxu0 0.0
    %1238 = vmatpush1.msra.mxu0 0.0
    %1239 = vmatprep.subr.mxu0 0.0
    %1240 = vmatpush1.msra.mxu0 0.0
    %1241 = vmatprep.subr.mxu0 0.0
    %1242 = vmatpush1.msra.mxu0 0.0
    %1243 = vmatprep.subr.mxu0 0.0
    %1244 = vmatpush1.msra.mxu0 0.0
    %1245 = vmatprep.subr.mxu0 0.0
    %1246 = vmatpush1.msra.mxu0 0.0
    %1247 = vmatprep.subr.mxu0 0.0
    %1248 = vmatpush1.msra.mxu0 0.0
    %1249 = vmatprep.subr.mxu0 0.0
    %1250 = vmatpush1.msra.mxu0 0.0
    %1251 = vmatprep.subr.mxu0 0.0
    %1252 = vmatpush1.msra.mxu0 0.0
    %1253 = vmatprep.subr.mxu0 0.0
    %1254 = vmatpush1.msra.mxu0 0.0
    %1255 = vmatprep.subr.mxu0 0.0
    %1256 = vmatpush1.msra.mxu0 0.0
    %1257 = vmatprep.subr.mxu0 0.0
    %1258 = vmatpush1.msra.mxu0 0.0
    %1259 = vmatprep.subr.mxu0 0.0
    %1260 = vmatpush1.msra.mxu0 0.0
    %1261 = vmatprep.subr.mxu0 0.0
    %1262 = vmatpush1.msra.mxu0 0.0
    %1263 = vmatprep.subr.mxu0 0.0
    %1264 = vmatpush1.msra.mxu0 0.0
    %1265 = vmatprep.subr.mxu0 0.0
    %1266 = vmatpush1.msra.mxu0 0.0
    %1267 = vmatprep.subr.mxu0 0.0
    %1268 = vmatpush1.msra.mxu0 0.0
    %1269 = vmatprep.subr.mxu0 0.0
    %1270 = vmatpush1.msra.mxu0 0.0
    %1271 = vmatprep.subr.mxu0 0.0
    %1272 = vmatpush1.msra.mxu0 0.0
    %1273 = vmatprep.subr.mxu0 0.0
    %1274 = vmatpush1.msra.mxu0 0.0
    %1275 = vmatprep.subr.mxu0 0.0
    %1276 = vmatpush1.msra.mxu0 0.0
    %1277 = vmatprep.subr.mxu0 0.0
    %1278 = vmatpush1.msra.mxu0 0.0
    %1279 = vmatprep.subr.mxu0 0.0
    %1280 = vmatpush1.msra.mxu0 0.0
    %1281 = vmatprep.subr.mxu0 0.0
    %1282 = vmatpush1.msra.mxu0 0.0
    %1283 = vmatprep.subr.mxu0 0.0
    %1284 = vmatpush1.msra.mxu0 0.0
    %1285 = vmatprep.subr.mxu0 0.0
    %1286 = vmatpush1.msra.mxu0 0.0
    %1287 = vmatprep.mubr.f32.mxu0 0.0
    %1288 = vmatmul.mubr.f32.gmra.mrb[0].mxu0 %v1221
    %v1289 = vpop.f32.mrb[0].mxu0
    %v1290 = vadd.f32 %v1217, %v1289
    %v1291 = vpop.f32.mrb[0].mxu0
    %1292 = vdwg.mxu0
    %s1293 = scalar_lea.vmem %s7, 2
    %v1294 = vld [vmem:[%s1293] sm:$0x1]
    %v1296 = vlaneseq
    %v1297 = vshrl.u32 %v1296, 7
    %v1298 = vsub.s32 0, %v1297
    %v1299 = vrot.slane %v1294, %v1298
    %v1301 = vadd.f32 %v1290, %v1299
    %vm1302 = vcmp.ge.f32.partialorder %v1301, 0.0
    %v1303 = vmul.f32 %v1301, 0.01
    %v1304 = vsel %vm1302, %v1301, %v1303
    %s1305 = scalar_lea.vmem [#allocation3], 256
    %v1306 = vld [vmem:[%s1305] sm:$0xff]
    %v1307 = vld [vmem:[%s1305 + $0x8] sm:$0xff]
    %v1308 = vld [vmem:[%s1305 + $0x10] sm:$0xff]
    %v1309 = vld [vmem:[%s1305 + $0x18] sm:$0xff]
    %v1310 = vld [vmem:[%s1305 + $0x20] sm:$0xff]
    %v1311 = vld [vmem:[%s1305 + $0x28] sm:$0xff]
    %v1312 = vld [vmem:[%s1305 + $0x30] sm:$0xff]
    %v1313 = vld [vmem:[%s1305 + $0x38] sm:$0xff]
    %s1314 = scalar_lea.vmem %s9, 4
    %v1315 = vld [vmem:[%s1314] sm:$0x1]
    %v1317 = vlaneseq
    %v1318 = vshrl.u32 %v1317, 7
    %v1319 = vsub.s32 0, %v1318
    %v1320 = vrot.slane %v1315, %v1319
    %v1323 = vsel %vm261, %v1304, 0
    %1325 = vmatprep.subr.mxu0 0.0
    %1326 = vmatpush1.msra.mxu0 %v1306
    %1327 = vmatprep.subr.mxu0 0.0
    %1328 = vmatpush1.msra.mxu0 %v1307
    %1329 = vmatprep.subr.mxu0 0.0
    %1330 = vmatpush1.msra.mxu0 %v1308
    %1331 = vmatprep.subr.mxu0 0.0
    %1332 = vmatpush1.msra.mxu0 %v1309
    %1333 = vmatprep.subr.mxu0 0.0
    %1334 = vmatpush1.msra.mxu0 %v1310
    %1335 = vmatprep.subr.mxu0 0.0
    %1336 = vmatpush1.msra.mxu0 %v1311
    %1337 = vmatprep.subr.mxu0 0.0
    %1338 = vmatpush1.msra.mxu0 %v1312
    %1339 = vmatprep.subr.mxu0 0.0
    %1340 = vmatpush1.msra.mxu0 %v1313
    %1341 = vmatprep.subr.mxu0 0.0
    %1342 = vmatpush1.msra.mxu0 0.0
    %1343 = vmatprep.subr.mxu0 0.0
    %1344 = vmatpush1.msra.mxu0 0.0
    %1345 = vmatprep.subr.mxu0 0.0
    %1346 = vmatpush1.msra.mxu0 0.0
    %1347 = vmatprep.subr.mxu0 0.0
    %1348 = vmatpush1.msra.mxu0 0.0
    %1349 = vmatprep.subr.mxu0 0.0
    %1350 = vmatpush1.msra.mxu0 0.0
    %1351 = vmatprep.subr.mxu0 0.0
    %1352 = vmatpush1.msra.mxu0 0.0
    %1353 = vmatprep.subr.mxu0 0.0
    %1354 = vmatpush1.msra.mxu0 0.0
    %1355 = vmatprep.subr.mxu0 0.0
    %1356 = vmatpush1.msra.mxu0 0.0
    %1357 = vmatprep.subr.mxu0 0.0
    %1358 = vmatpush1.msra.mxu0 0.0
    %1359 = vmatprep.subr.mxu0 0.0
    %1360 = vmatpush1.msra.mxu0 0.0
    %1361 = vmatprep.subr.mxu0 0.0
    %1362 = vmatpush1.msra.mxu0 0.0
    %1363 = vmatprep.subr.mxu0 0.0
    %1364 = vmatpush1.msra.mxu0 0.0
    %1365 = vmatprep.subr.mxu0 0.0
    %1366 = vmatpush1.msra.mxu0 0.0
    %1367 = vmatprep.subr.mxu0 0.0
    %1368 = vmatpush1.msra.mxu0 0.0
    %1369 = vmatprep.subr.mxu0 0.0
    %1370 = vmatpush1.msra.mxu0 0.0
    %1371 = vmatprep.subr.mxu0 0.0
    %1372 = vmatpush1.msra.mxu0 0.0
    %1373 = vmatprep.subr.mxu0 0.0
    %1374 = vmatpush1.msra.mxu0 0.0
    %1375 = vmatprep.subr.mxu0 0.0
    %1376 = vmatpush1.msra.mxu0 0.0
    %1377 = vmatprep.subr.mxu0 0.0
    %1378 = vmatpush1.msra.mxu0 0.0
    %1379 = vmatprep.subr.mxu0 0.0
    %1380 = vmatpush1.msra.mxu0 0.0
    %1381 = vmatprep.subr.mxu0 0.0
    %1382 = vmatpush1.msra.mxu0 0.0
    %1383 = vmatprep.subr.mxu0 0.0
    %1384 = vmatpush1.msra.mxu0 0.0
    %1385 = vmatprep.subr.mxu0 0.0
    %1386 = vmatpush1.msra.mxu0 0.0
    %1387 = vmatprep.subr.mxu0 0.0
    %1388 = vmatpush1.msra.mxu0 0.0
    %1389 = vmatprep.mubr.f32.mxu0 0.0
    %1390 = vmatmul.mubr.f32.gmra.mrb[0].mxu0 %v1323
    %v1391 = vpop.f32.mrb[0].mxu0
    %v1392 = vadd.f32 %v1320, %v1391
    %v1393 = vpop.f32.mrb[0].mxu0
    %1394 = vdwg.mxu0
    %vm1395 = vcmp.ge.f32.partialorder %v1392, 0.0
    %v1396 = vmul.f32 %v1392, 0.01
    %v1397 = vsel %vm1395, %v1392, %v1396
    %s1398 = scalar_lea.vmem [#allocation3], 320
    %v1399 = vld [vmem:[%s1398] sm:$0xff]
    %v1400 = vld [vmem:[%s1398 + $0x8] sm:$0xff]
    %v1401 = vld [vmem:[%s1398 + $0x10] sm:$0xff]
    %v1402 = vld [vmem:[%s1398 + $0x18] sm:$0xff]
    %v1403 = vld [vmem:[%s1398 + $0x20] sm:$0xff]
    %v1404 = vld [vmem:[%s1398 + $0x28] sm:$0xff]
    %v1405 = vld [vmem:[%s1398 + $0x30] sm:$0xff]
    %v1406 = vld [vmem:[%s1398 + $0x38] sm:$0xff]
    %s1407 = scalar_lea.vmem %s9, 5
    %v1408 = vld [vmem:[%s1407] sm:$0x1]
    %v1410 = vlaneseq
    %v1411 = vshrl.u32 %v1410, 7
    %v1412 = vsub.s32 0, %v1411
    %v1413 = vrot.slane %v1408, %v1412
    %v1416 = vsel %vm261, %v1397, 0
    %1418 = vmatprep.subr.mxu0 0.0
    %1419 = vmatpush1.msra.mxu0 %v1399
    %1420 = vmatprep.subr.mxu0 0.0
    %1421 = vmatpush1.msra.mxu0 %v1400
    %1422 = vmatprep.subr.mxu0 0.0
    %1423 = vmatpush1.msra.mxu0 %v1401
    %1424 = vmatprep.subr.mxu0 0.0
    %1425 = vmatpush1.msra.mxu0 %v1402
    %1426 = vmatprep.subr.mxu0 0.0
    %1427 = vmatpush1.msra.mxu0 %v1403
    %1428 = vmatprep.subr.mxu0 0.0
    %1429 = vmatpush1.msra.mxu0 %v1404
    %1430 = vmatprep.subr.mxu0 0.0
    %1431 = vmatpush1.msra.mxu0 %v1405
    %1432 = vmatprep.subr.mxu0 0.0
    %1433 = vmatpush1.msra.mxu0 %v1406
    %1434 = vmatprep.subr.mxu0 0.0
    %1435 = vmatpush1.msra.mxu0 0.0
    %1436 = vmatprep.subr.mxu0 0.0
    %1437 = vmatpush1.msra.mxu0 0.0
    %1438 = vmatprep.subr.mxu0 0.0
    %1439 = vmatpush1.msra.mxu0 0.0
    %1440 = vmatprep.subr.mxu0 0.0
    %1441 = vmatpush1.msra.mxu0 0.0
    %1442 = vmatprep.subr.mxu0 0.0
    %1443 = vmatpush1.msra.mxu0 0.0
    %1444 = vmatprep.subr.mxu0 0.0
    %1445 = vmatpush1.msra.mxu0 0.0
    %1446 = vmatprep.subr.mxu0 0.0
    %1447 = vmatpush1.msra.mxu0 0.0
    %1448 = vmatprep.subr.mxu0 0.0
    %1449 = vmatpush1.msra.mxu0 0.0
    %1450 = vmatprep.subr.mxu0 0.0
    %1451 = vmatpush1.msra.mxu0 0.0
    %1452 = vmatprep.subr.mxu0 0.0
    %1453 = vmatpush1.msra.mxu0 0.0
    %1454 = vmatprep.subr.mxu0 0.0
    %1455 = vmatpush1.msra.mxu0 0.0
    %1456 = vmatprep.subr.mxu0 0.0
    %1457 = vmatpush1.msra.mxu0 0.0
    %1458 = vmatprep.subr.mxu0 0.0
    %1459 = vmatpush1.msra.mxu0 0.0
    %1460 = vmatprep.subr.mxu0 0.0
    %1461 = vmatpush1.msra.mxu0 0.0
    %1462 = vmatprep.subr.mxu0 0.0
    %1463 = vmatpush1.msra.mxu0 0.0
    %1464 = vmatprep.subr.mxu0 0.0
    %1465 = vmatpush1.msra.mxu0 0.0
    %1466 = vmatprep.subr.mxu0 0.0
    %1467 = vmatpush1.msra.mxu0 0.0
    %1468 = vmatprep.subr.mxu0 0.0
    %1469 = vmatpush1.msra.mxu0 0.0
    %1470 = vmatprep.subr.mxu0 0.0
    %1471 = vmatpush1.msra.mxu0 0.0
    %1472 = vmatprep.subr.mxu0 0.0
    %1473 = vmatpush1.msra.mxu0 0.0
    %1474 = vmatprep.subr.mxu0 0.0
    %1475 = vmatpush1.msra.mxu0 0.0
    %1476 = vmatprep.subr.mxu0 0.0
    %1477 = vmatpush1.msra.mxu0 0.0
    %1478 = vmatprep.subr.mxu0 0.0
    %1479 = vmatpush1.msra.mxu0 0.0
    %1480 = vmatprep.subr.mxu0 0.0
    %1481 = vmatpush1.msra.mxu0 0.0
    %1482 = vmatprep.mubr.f32.mxu0 0.0
    %1483 = vmatmul.mubr.f32.gmra.mrb[0].mxu0 %v1416
    %v1484 = vpop.f32.mrb[0].mxu0
    %v1485 = vadd.f32 %v1413, %v1484
    %v1486 = vpop.f32.mrb[0].mxu0
    %1487 = vdwg.mxu0
    %vm1488 = vcmp.ge.f32.partialorder %v1485, 0.0
    %v1489 = vmul.f32 %v1485, 0.01
    %v1490 = vsel %vm1488, %v1485, %v1489
    %s1491 = scalar_lea.vmem %s10, 128
    %v1492 = vld [vmem:[%s1491] sm:$0xff]
    %v1493 = vld [vmem:[%s1491 + $0x8] sm:$0xff]
    %v1494 = vld [vmem:[%s1491 + $0x10] sm:$0xff]
    %v1495 = vld [vmem:[%s1491 + $0x18] sm:$0xff]
    %v1496 = vld [vmem:[%s1491 + $0x20] sm:$0xff]
    %v1497 = vld [vmem:[%s1491 + $0x28] sm:$0xff]
    %v1498 = vld [vmem:[%s1491 + $0x30] sm:$0xff]
    %v1499 = vld [vmem:[%s1491 + $0x38] sm:$0xff]
    %s1500 = scalar_lea.vmem %s11, 2
    %v1501 = vld [vmem:[%s1500] sm:$0x1]
    %v1503 = vlaneseq
    %v1504 = vshrl.u32 %v1503, 7
    %v1505 = vsub.s32 0, %v1504
    %v1506 = vrot.slane %v1501, %v1505
    %v1509 = vsel %vm261, %v1490, 0
    %1511 = vmatprep.subr.mxu0 0.0
    %1512 = vmatpush1.msra.mxu0 %v1492
    %1513 = vmatprep.subr.mxu0 0.0
    %1514 = vmatpush1.msra.mxu0 %v1493
    %1515 = vmatprep.subr.mxu0 0.0
    %1516 = vmatpush1.msra.mxu0 %v1494
    %1517 = vmatprep.subr.mxu0 0.0
    %1518 = vmatpush1.msra.mxu0 %v1495
    %1519 = vmatprep.subr.mxu0 0.0
    %1520 = vmatpush1.msra.mxu0 %v1496
    %1521 = vmatprep.subr.mxu0 0.0
    %1522 = vmatpush1.msra.mxu0 %v1497
    %1523 = vmatprep.subr.mxu0 0.0
    %1524 = vmatpush1.msra.mxu0 %v1498
    %1525 = vmatprep.subr.mxu0 0.0
    %1526 = vmatpush1.msra.mxu0 %v1499
    %1527 = vmatprep.subr.mxu0 0.0
    %1528 = vmatpush1.msra.mxu0 0.0
    %1529 = vmatprep.subr.mxu0 0.0
    %1530 = vmatpush1.msra.mxu0 0.0
    %1531 = vmatprep.subr.mxu0 0.0
    %1532 = vmatpush1.msra.mxu0 0.0
    %1533 = vmatprep.subr.mxu0 0.0
    %1534 = vmatpush1.msra.mxu0 0.0
    %1535 = vmatprep.subr.mxu0 0.0
    %1536 = vmatpush1.msra.mxu0 0.0
    %1537 = vmatprep.subr.mxu0 0.0
    %1538 = vmatpush1.msra.mxu0 0.0
    %1539 = vmatprep.subr.mxu0 0.0
    %1540 = vmatpush1.msra.mxu0 0.0
    %1541 = vmatprep.subr.mxu0 0.0
    %1542 = vmatpush1.msra.mxu0 0.0
    %1543 = vmatprep.subr.mxu0 0.0
    %1544 = vmatpush1.msra.mxu0 0.0
    %1545 = vmatprep.subr.mxu0 0.0
    %1546 = vmatpush1.msra.mxu0 0.0
    %1547 = vmatprep.subr.mxu0 0.0
    %1548 = vmatpush1.msra.mxu0 0.0
    %1549 = vmatprep.subr.mxu0 0.0
    %1550 = vmatpush1.msra.mxu0 0.0
    %1551 = vmatprep.subr.mxu0 0.0
    %1552 = vmatpush1.msra.mxu0 0.0
    %1553 = vmatprep.subr.mxu0 0.0
    %1554 = vmatpush1.msra.mxu0 0.0
    %1555 = vmatprep.subr.mxu0 0.0
    %1556 = vmatpush1.msra.mxu0 0.0
    %1557 = vmatprep.subr.mxu0 0.0
    %1558 = vmatpush1.msra.mxu0 0.0
    %1559 = vmatprep.subr.mxu0 0.0
    %1560 = vmatpush1.msra.mxu0 0.0
    %1561 = vmatprep.subr.mxu0 0.0
    %1562 = vmatpush1.msra.mxu0 0.0
    %1563 = vmatprep.subr.mxu0 0.0
    %1564 = vmatpush1.msra.mxu0 0.0
    %1565 = vmatprep.subr.mxu0 0.0
    %1566 = vmatpush1.msra.mxu0 0.0
    %1567 = vmatprep.subr.mxu0 0.0
    %1568 = vmatpush1.msra.mxu0 0.0
    %1569 = vmatprep.subr.mxu0 0.0
    %1570 = vmatpush1.msra.mxu0 0.0
    %1571 = vmatprep.subr.mxu0 0.0
    %1572 = vmatpush1.msra.mxu0 0.0
    %1573 = vmatprep.subr.mxu0 0.0
    %1574 = vmatpush1.msra.mxu0 0.0
    %1575 = vmatprep.mubr.f32.mxu0 0.0
    %1576 = vmatmul.mubr.f32.gmra.mrb[0].mxu0 %v1509
    %v1577 = vpop.f32.mrb[0].mxu0
    %v1578 = vadd.f32 %v1506, %v1577
    %v1579 = vpop.f32.mrb[0].mxu0
    %1580 = vdwg.mxu0
    %v1581 = vmul.f32 %v1578, 1.442695
    %v1582 = vpow.pop %v1581
    %1584 = vrot.lane.b32.xlu0 %v1582, 8
    %v1585 = vpop.permute.xlu0 %1584
    %v1587 = vmul.f32 %v1145, %v1585
    %v1588 = vadd.f32 %v1587, %v1578
    %v1589 = vsel %vm88, %v1578, 0.0
    %1590 = vadd.xlane.f32.xlu0 %v1589
    %v1591 = vpop.xlane.xlu0 %1590
    %v1592 = vadd.f32 %v979, %v1591
    %s1593 = scalar_lea.vmem %s5, 24
    %v1594 = vld [vmem:[%s1593] sm:$0xff]
    %s1595 = scalar_lea.vmem %s6, 24
    %v1596 = vld [vmem:[%s1595] sm:$0xff]
    %1597 = vmatprep.subr.mxu0 0.0
    %1598 = vmatpush1.msra.mxu0 %v1596
    %1599 = vmatprep.subr.mxu0 0.0
    %1600 = vmatpush1.msra.mxu0 0.0
    %1601 = vmatprep.subr.mxu0 0.0
    %1602 = vmatpush1.msra.mxu0 0.0
    %1603 = vmatprep.subr.mxu0 0.0
    %1604 = vmatpush1.msra.mxu0 0.0
    %1605 = vmatprep.subr.mxu0 0.0
    %1606 = vmatpush1.msra.mxu0 0.0
    %1607 = vmatprep.subr.mxu0 0.0
    %1608 = vmatpush1.msra.mxu0 0.0
    %1609 = vmatprep.subr.mxu0 0.0
    %1610 = vmatpush1.msra.mxu0 0.0
    %1611 = vmatprep.subr.mxu0 0.0
    %1612 = vmatpush1.msra.mxu0 0.0
    %1613 = vmatprep.subr.mxu0 0.0
    %1614 = vmatpush1.msra.mxu0 0.0
    %1615 = vmatprep.subr.mxu0 0.0
    %1616 = vmatpush1.msra.mxu0 0.0
    %1617 = vmatprep.subr.mxu0 0.0
    %1618 = vmatpush1.msra.mxu0 0.0
    %1619 = vmatprep.subr.mxu0 0.0
    %1620 = vmatpush1.msra.mxu0 0.0
    %1621 = vmatprep.subr.mxu0 0.0
    %1622 = vmatpush1.msra.mxu0 0.0
    %1623 = vmatprep.subr.mxu0 0.0
    %1624 = vmatpush1.msra.mxu0 0.0
    %1625 = vmatprep.subr.mxu0 0.0
    %1626 = vmatpush1.msra.mxu0 0.0
    %1627 = vmatprep.subr.mxu0 0.0
    %1628 = vmatpush1.msra.mxu0 0.0
    %1629 = vmatprep.subr.mxu0 0.0
    %1630 = vmatpush1.msra.mxu0 0.0
    %1631 = vmatprep.subr.mxu0 0.0
    %1632 = vmatpush1.msra.mxu0 0.0
    %1633 = vmatprep.subr.mxu0 0.0
    %1634 = vmatpush1.msra.mxu0 0.0
    %1635 = vmatprep.subr.mxu0 0.0
    %1636 = vmatpush1.msra.mxu0 0.0
    %1637 = vmatprep.subr.mxu0 0.0
    %1638 = vmatpush1.msra.mxu0 0.0
    %1639 = vmatprep.subr.mxu0 0.0
    %1640 = vmatpush1.msra.mxu0 0.0
    %1641 = vmatprep.subr.mxu0 0.0
    %1642 = vmatpush1.msra.mxu0 0.0
    %1643 = vmatprep.subr.mxu0 0.0
    %1644 = vmatpush1.msra.mxu0 0.0
    %1645 = vmatprep.subr.mxu0 0.0
    %1646 = vmatpush1.msra.mxu0 0.0
    %1647 = vmatprep.subr.mxu0 0.0
    %1648 = vmatpush1.msra.mxu0 0.0
    %1649 = vmatprep.subr.mxu0 0.0
    %1650 = vmatpush1.msra.mxu0 0.0
    %1651 = vmatprep.subr.mxu0 0.0
    %1652 = vmatpush1.msra.mxu0 0.0
    %1653 = vmatprep.subr.mxu0 0.0
    %1654 = vmatpush1.msra.mxu0 0.0
    %1655 = vmatprep.subr.mxu0 0.0
    %1656 = vmatpush1.msra.mxu0 0.0
    %1657 = vmatprep.subr.mxu0 0.0
    %1658 = vmatpush1.msra.mxu0 0.0
    %1659 = vmatprep.subr.mxu0 0.0
    %1660 = vmatpush1.msra.mxu0 0.0
    %1661 = vmatprep.mubr.f32.mxu0 0.0
    %1662 = vmatmul.mubr.f32.gmra.mrb[0].mxu0 %v90
    %v1663 = vpop.f32.mrb[0].mxu0
    %v1664 = vadd.f32 0.0, %v1663
    %v1665 = vpop.f32.mrb[0].mxu0
    %1666 = vdwg.mxu0
    %1668 = vrot.lane.b32.xlu0 %v1588, 120
    %v1669 = vpop.permute.xlu0 %1668
    %v1670 = vsel %vm88, %v1669, 0
    %1672 = vmatprep.subr.mxu0 0.0
    %1673 = vmatpush1.msra.mxu0 %v1594
    %1674 = vmatprep.subr.mxu0 0.0
    %1675 = vmatpush1.msra.mxu0 0.0
    %1676 = vmatprep.subr.mxu0 0.0
    %1677 = vmatpush1.msra.mxu0 0.0
    %1678 = vmatprep.subr.mxu0 0.0
    %1679 = vmatpush1.msra.mxu0 0.0
    %1680 = vmatprep.subr.mxu0 0.0
    %1681 = vmatpush1.msra.mxu0 0.0
    %1682 = vmatprep.subr.mxu0 0.0
    %1683 = vmatpush1.msra.mxu0 0.0
    %1684 = vmatprep.subr.mxu0 0.0
    %1685 = vmatpush1.msra.mxu0 0.0
    %1686 = vmatprep.subr.mxu0 0.0
    %1687 = vmatpush1.msra.mxu0 0.0
    %1688 = vmatprep.subr.mxu0 0.0
    %1689 = vmatpush1.msra.mxu0 0.0
    %1690 = vmatprep.subr.mxu0 0.0
    %1691 = vmatpush1.msra.mxu0 0.0
    %1692 = vmatprep.subr.mxu0 0.0
    %1693 = vmatpush1.msra.mxu0 0.0
    %1694 = vmatprep.subr.mxu0 0.0
    %1695 = vmatpush1.msra.mxu0 0.0
    %1696 = vmatprep.subr.mxu0 0.0
    %1697 = vmatpush1.msra.mxu0 0.0
    %1698 = vmatprep.subr.mxu0 0.0
    %1699 = vmatpush1.msra.mxu0 0.0
    %1700 = vmatprep.subr.mxu0 0.0
    %1701 = vmatpush1.msra.mxu0 0.0
    %1702 = vmatprep.subr.mxu0 0.0
    %1703 = vmatpush1.msra.mxu0 0.0
    %1704 = vmatprep.subr.mxu0 0.0
    %1705 = vmatpush1.msra.mxu0 0.0
    %1706 = vmatprep.subr.mxu0 0.0
    %1707 = vmatpush1.msra.mxu0 0.0
    %1708 = vmatprep.subr.mxu0 0.0
    %1709 = vmatpush1.msra.mxu0 0.0
    %1710 = vmatprep.subr.mxu0 0.0
    %1711 = vmatpush1.msra.mxu0 0.0
    %1712 = vmatprep.subr.mxu0 0.0
    %1713 = vmatpush1.msra.mxu0 0.0
    %1714 = vmatprep.subr.mxu0 0.0
    %1715 = vmatpush1.msra.mxu0 0.0
    %1716 = vmatprep.subr.mxu0 0.0
    %1717 = vmatpush1.msra.mxu0 0.0
    %1718 = vmatprep.subr.mxu0 0.0
    %1719 = vmatpush1.msra.mxu0 0.0
    %1720 = vmatprep.subr.mxu0 0.0
    %1721 = vmatpush1.msra.mxu0 0.0
    %1722 = vmatprep.subr.mxu0 0.0
    %1723 = vmatpush1.msra.mxu0 0.0
    %1724 = vmatprep.subr.mxu0 0.0
    %1725 = vmatpush1.msra.mxu0 0.0
    %1726 = vmatprep.subr.mxu0 0.0
    %1727 = vmatpush1.msra.mxu0 0.0
    %1728 = vmatprep.subr.mxu0 0.0
    %1729 = vmatpush1.msra.mxu0 0.0
    %1730 = vmatprep.subr.mxu0 0.0
    %1731 = vmatpush1.msra.mxu0 0.0
    %1732 = vmatprep.subr.mxu0 0.0
    %1733 = vmatpush1.msra.mxu0 0.0
    %1734 = vmatprep.subr.mxu0 0.0
    %1735 = vmatpush1.msra.mxu0 0.0
    %1736 = vmatprep.mubr.f32.mxu0 0.0
    %1737 = vmatmul.mubr.f32.gmra.mrb[0].mxu0 %v1670
    %v1738 = vpop.f32.mrb[0].mxu0
    %v1739 = vadd.f32 %v1664, %v1738
    %v1740 = vpop.f32.mrb[0].mxu0
    %1741 = vdwg.mxu0
    %s1742 = scalar_lea.vmem %s7, 3
    %v1743 = vld [vmem:[%s1742] sm:$0x1]
    %v1745 = vlaneseq
    %v1746 = vshrl.u32 %v1745, 7
    %v1747 = vsub.s32 0, %v1746
    %v1748 = vrot.slane %v1743, %v1747
    %v1750 = vadd.f32 %v1739, %v1748
    %vm1751 = vcmp.ge.f32.partialorder %v1750, 0.0
    %v1752 = vmul.f32 %v1750, 0.01
    %v1753 = vsel %vm1751, %v1750, %v1752
    %s1754 = scalar_lea.vmem [#allocation3], 384
    %v1755 = vld [vmem:[%s1754] sm:$0xff]
    %v1756 = vld [vmem:[%s1754 + $0x8] sm:$0xff]
    %v1757 = vld [vmem:[%s1754 + $0x10] sm:$0xff]
    %v1758 = vld [vmem:[%s1754 + $0x18] sm:$0xff]
    %v1759 = vld [vmem:[%s1754 + $0x20] sm:$0xff]
    %v1760 = vld [vmem:[%s1754 + $0x28] sm:$0xff]
    %v1761 = vld [vmem:[%s1754 + $0x30] sm:$0xff]
    %v1762 = vld [vmem:[%s1754 + $0x38] sm:$0xff]
    %s1763 = scalar_lea.vmem %s9, 6
    %v1764 = vld [vmem:[%s1763] sm:$0x1]
    %v1766 = vlaneseq
    %v1767 = vshrl.u32 %v1766, 7
    %v1768 = vsub.s32 0, %v1767
    %v1769 = vrot.slane %v1764, %v1768
    %v1772 = vsel %vm261, %v1753, 0
    %1774 = vmatprep.subr.mxu0 0.0
    %1775 = vmatpush1.msra.mxu0 %v1755
    %1776 = vmatprep.subr.mxu0 0.0
    %1777 = vmatpush1.msra.mxu0 %v1756
    %1778 = vmatprep.subr.mxu0 0.0
    %1779 = vmatpush1.msra.mxu0 %v1757
    %1780 = vmatprep.subr.mxu0 0.0
    %1781 = vmatpush1.msra.mxu0 %v1758
    %1782 = vmatprep.subr.mxu0 0.0
    %1783 = vmatpush1.msra.mxu0 %v1759
    %1784 = vmatprep.subr.mxu0 0.0
    %1785 = vmatpush1.msra.mxu0 %v1760
    %1786 = vmatprep.subr.mxu0 0.0
    %1787 = vmatpush1.msra.mxu0 %v1761
    %1788 = vmatprep.subr.mxu0 0.0
    %1789 = vmatpush1.msra.mxu0 %v1762
    %1790 = vmatprep.subr.mxu0 0.0
    %1791 = vmatpush1.msra.mxu0 0.0
    %1792 = vmatprep.subr.mxu0 0.0
    %1793 = vmatpush1.msra.mxu0 0.0
    %1794 = vmatprep.subr.mxu0 0.0
    %1795 = vmatpush1.msra.mxu0 0.0
    %1796 = vmatprep.subr.mxu0 0.0
    %1797 = vmatpush1.msra.mxu0 0.0
    %1798 = vmatprep.subr.mxu0 0.0
    %1799 = vmatpush1.msra.mxu0 0.0
    %1800 = vmatprep.subr.mxu0 0.0
    %1801 = vmatpush1.msra.mxu0 0.0
    %1802 = vmatprep.subr.mxu0 0.0
    %1803 = vmatpush1.msra.mxu0 0.0
    %1804 = vmatprep.subr.mxu0 0.0
    %1805 = vmatpush1.msra.mxu0 0.0
    %1806 = vmatprep.subr.mxu0 0.0
    %1807 = vmatpush1.msra.mxu0 0.0
    %1808 = vmatprep.subr.mxu0 0.0
    %1809 = vmatpush1.msra.mxu0 0.0
    %1810 = vmatprep.subr.mxu0 0.0
    %1811 = vmatpush1.msra.mxu0 0.0
    %1812 = vmatprep.subr.mxu0 0.0
    %1813 = vmatpush1.msra.mxu0 0.0
    %1814 = vmatprep.subr.mxu0 0.0
    %1815 = vmatpush1.msra.mxu0 0.0
    %1816 = vmatprep.subr.mxu0 0.0
    %1817 = vmatpush1.msra.mxu0 0.0
    %1818 = vmatprep.subr.mxu0 0.0
    %1819 = vmatpush1.msra.mxu0 0.0
    %1820 = vmatprep.subr.mxu0 0.0
    %1821 = vmatpush1.msra.mxu0 0.0
    %1822 = vmatprep.subr.mxu0 0.0
    %1823 = vmatpush1.msra.mxu0 0.0
    %1824 = vmatprep.subr.mxu0 0.0
    %1825 = vmatpush1.msra.mxu0 0.0
    %1826 = vmatprep.subr.mxu0 0.0
    %1827 = vmatpush1.msra.mxu0 0.0
    %1828 = vmatprep.subr.mxu0 0.0
    %1829 = vmatpush1.msra.mxu0 0.0
    %1830 = vmatprep.subr.mxu0 0.0
    %1831 = vmatpush1.msra.mxu0 0.0
    %1832 = vmatprep.subr.mxu0 0.0
    %1833 = vmatpush1.msra.mxu0 0.0
    %1834 = vmatprep.subr.mxu0 0.0
    %1835 = vmatpush1.msra.mxu0 0.0
    %1836 = vmatprep.subr.mxu0 0.0
    %1837 = vmatpush1.msra.mxu0 0.0
    %1838 = vmatprep.mubr.f32.mxu0 0.0
    %1839 = vmatmul.mubr.f32.gmra.mrb[0].mxu0 %v1772
    %v1840 = vpop.f32.mrb[0].mxu0
    %v1841 = vadd.f32 %v1769, %v1840
    %v1842 = vpop.f32.mrb[0].mxu0
    %1843 = vdwg.mxu0
    %vm1844 = vcmp.ge.f32.partialorder %v1841, 0.0
    %v1845 = vmul.f32 %v1841, 0.01
    %v1846 = vsel %vm1844, %v1841, %v1845
    %s1847 = scalar_lea.vmem [#allocation3], 448
    %v1848 = vld [vmem:[%s1847] sm:$0xff]
    %v1849 = vld [vmem:[%s1847 + $0x8] sm:$0xff]
    %v1850 = vld [vmem:[%s1847 + $0x10] sm:$0xff]
    %v1851 = vld [vmem:[%s1847 + $0x18] sm:$0xff]
    %v1852 = vld [vmem:[%s1847 + $0x20] sm:$0xff]
    %v1853 = vld [vmem:[%s1847 + $0x28] sm:$0xff]
    %v1854 = vld [vmem:[%s1847 + $0x30] sm:$0xff]
    %v1855 = vld [vmem:[%s1847 + $0x38] sm:$0xff]
    %s1856 = scalar_lea.vmem %s9, 7
    %v1857 = vld [vmem:[%s1856] sm:$0x1]
    %v1859 = vlaneseq
    %v1860 = vshrl.u32 %v1859, 7
    %v1861 = vsub.s32 0, %v1860
    %v1862 = vrot.slane %v1857, %v1861
    %v1865 = vsel %vm261, %v1846, 0
    %1867 = vmatprep.subr.mxu0 0.0
    %1868 = vmatpush1.msra.mxu0 %v1848
    %1869 = vmatprep.subr.mxu0 0.0
    %1870 = vmatpush1.msra.mxu0 %v1849
    %1871 = vmatprep.subr.mxu0 0.0
    %1872 = vmatpush1.msra.mxu0 %v1850
    %1873 = vmatprep.subr.mxu0 0.0
    %1874 = vmatpush1.msra.mxu0 %v1851
    %1875 = vmatprep.subr.mxu0 0.0
    %1876 = vmatpush1.msra.mxu0 %v1852
    %1877 = vmatprep.subr.mxu0 0.0
    %1878 = vmatpush1.msra.mxu0 %v1853
    %1879 = vmatprep.subr.mxu0 0.0
    %1880 = vmatpush1.msra.mxu0 %v1854
    %1881 = vmatprep.subr.mxu0 0.0
    %1882 = vmatpush1.msra.mxu0 %v1855
    %1883 = vmatprep.subr.mxu0 0.0
    %1884 = vmatpush1.msra.mxu0 0.0
    %1885 = vmatprep.subr.mxu0 0.0
    %1886 = vmatpush1.msra.mxu0 0.0
    %1887 = vmatprep.subr.mxu0 0.0
    %1888 = vmatpush1.msra.mxu0 0.0
    %1889 = vmatprep.subr.mxu0 0.0
    %1890 = vmatpush1.msra.mxu0 0.0
    %1891 = vmatprep.subr.mxu0 0.0
    %1892 = vmatpush1.msra.mxu0 0.0
    %1893 = vmatprep.subr.mxu0 0.0
    %1894 = vmatpush1.msra.mxu0 0.0
    %1895 = vmatprep.subr.mxu0 0.0
    %1896 = vmatpush1.msra.mxu0 0.0
    %1897 = vmatprep.subr.mxu0 0.0
    %1898 = vmatpush1.msra.mxu0 0.0
    %1899 = vmatprep.subr.mxu0 0.0
    %1900 = vmatpush1.msra.mxu0 0.0
    %1901 = vmatprep.subr.mxu0 0.0
    %1902 = vmatpush1.msra.mxu0 0.0
    %1903 = vmatprep.subr.mxu0 0.0
    %1904 = vmatpush1.msra.mxu0 0.0
    %1905 = vmatprep.subr.mxu0 0.0
    %1906 = vmatpush1.msra.mxu0 0.0
    %1907 = vmatprep.subr.mxu0 0.0
    %1908 = vmatpush1.msra.mxu0 0.0
    %1909 = vmatprep.subr.mxu0 0.0
    %1910 = vmatpush1.msra.mxu0 0.0
    %1911 = vmatprep.subr.mxu0 0.0
    %1912 = vmatpush1.msra.mxu0 0.0
    %1913 = vmatprep.subr.mxu0 0.0
    %1914 = vmatpush1.msra.mxu0 0.0
    %1915 = vmatprep.subr.mxu0 0.0
    %1916 = vmatpush1.msra.mxu0 0.0
    %1917 = vmatprep.subr.mxu0 0.0
    %1918 = vmatpush1.msra.mxu0 0.0
    %1919 = vmatprep.subr.mxu0 0.0
    %1920 = vmatpush1.msra.mxu0 0.0
    %1921 = vmatprep.subr.mxu0 0.0
    %1922 = vmatpush1.msra.mxu0 0.0
    %1923 = vmatprep.subr.mxu0 0.0
    %1924 = vmatpush1.msra.mxu0 0.0
    %1925 = vmatprep.subr.mxu0 0.0
    %1926 = vmatpush1.msra.mxu0 0.0
    %1927 = vmatprep.subr.mxu0 0.0
    %1928 = vmatpush1.msra.mxu0 0.0
    %1929 = vmatprep.subr.mxu0 0.0
    %1930 = vmatpush1.msra.mxu0 0.0
    %1931 = vmatprep.mubr.f32.mxu0 0.0
    %1932 = vmatmul.mubr.f32.gmra.mrb[0].mxu0 %v1865
    %v1933 = vpop.f32.mrb[0].mxu0
    %v1934 = vadd.f32 %v1862, %v1933
    %v1935 = vpop.f32.mrb[0].mxu0
    %1936 = vdwg.mxu0
    %vm1937 = vcmp.ge.f32.partialorder %v1934, 0.0
    %v1938 = vmul.f32 %v1934, 0.01
    %v1939 = vsel %vm1937, %v1934, %v1938
    %s1940 = scalar_lea.vmem %s10, 192
    %v1941 = vld [vmem:[%s1940] sm:$0xff]
    %v1942 = vld [vmem:[%s1940 + $0x8] sm:$0xff]
    %v1943 = vld [vmem:[%s1940 + $0x10] sm:$0xff]
    %v1944 = vld [vmem:[%s1940 + $0x18] sm:$0xff]
    %v1945 = vld [vmem:[%s1940 + $0x20] sm:$0xff]
    %v1946 = vld [vmem:[%s1940 + $0x28] sm:$0xff]
    %v1947 = vld [vmem:[%s1940 + $0x30] sm:$0xff]
    %v1948 = vld [vmem:[%s1940 + $0x38] sm:$0xff]
    %s1949 = scalar_lea.vmem %s11, 3
    %v1950 = vld [vmem:[%s1949] sm:$0x1]
    %v1952 = vlaneseq
    %v1953 = vshrl.u32 %v1952, 7
    %v1954 = vsub.s32 0, %v1953
    %v1955 = vrot.slane %v1950, %v1954
    %v1958 = vsel %vm261, %v1939, 0
    %1960 = vmatprep.subr.mxu0 0.0
    %1961 = vmatpush1.msra.mxu0 %v1941
    %1962 = vmatprep.subr.mxu0 0.0
    %1963 = vmatpush1.msra.mxu0 %v1942
    %1964 = vmatprep.subr.mxu0 0.0
    %1965 = vmatpush1.msra.mxu0 %v1943
    %1966 = vmatprep.subr.mxu0 0.0
    %1967 = vmatpush1.msra.mxu0 %v1944
    %1968 = vmatprep.subr.mxu0 0.0
    %1969 = vmatpush1.msra.mxu0 %v1945
    %1970 = vmatprep.subr.mxu0 0.0
    %1971 = vmatpush1.msra.mxu0 %v1946
    %1972 = vmatprep.subr.mxu0 0.0
    %1973 = vmatpush1.msra.mxu0 %v1947
    %1974 = vmatprep.subr.mxu0 0.0
    %1975 = vmatpush1.msra.mxu0 %v1948
    %1976 = vmatprep.subr.mxu0 0.0
    %1977 = vmatpush1.msra.mxu0 0.0
    %1978 = vmatprep.subr.mxu0 0.0
    %1979 = vmatpush1.msra.mxu0 0.0
    %1980 = vmatprep.subr.mxu0 0.0
    %1981 = vmatpush1.msra.mxu0 0.0
    %1982 = vmatprep.subr.mxu0 0.0
    %1983 = vmatpush1.msra.mxu0 0.0
    %1984 = vmatprep.subr.mxu0 0.0
    %1985 = vmatpush1.msra.mxu0 0.0
    %1986 = vmatprep.subr.mxu0 0.0
    %1987 = vmatpush1.msra.mxu0 0.0
    %1988 = vmatprep.subr.mxu0 0.0
    %1989 = vmatpush1.msra.mxu0 0.0
    %1990 = vmatprep.subr.mxu0 0.0
    %1991 = vmatpush1.msra.mxu0 0.0
    %1992 = vmatprep.subr.mxu0 0.0
    %1993 = vmatpush1.msra.mxu0 0.0
    %1994 = vmatprep.subr.mxu0 0.0
    %1995 = vmatpush1.msra.mxu0 0.0
    %1996 = vmatprep.subr.mxu0 0.0
    %1997 = vmatpush1.msra.mxu0 0.0
    %1998 = vmatprep.subr.mxu0 0.0
    %1999 = vmatpush1.msra.mxu0 0.0
    %2000 = vmatprep.subr.mxu0 0.0
    %2001 = vmatpush1.msra.mxu0 0.0
    %2002 = vmatprep.subr.mxu0 0.0
    %2003 = vmatpush1.msra.mxu0 0.0
    %2004 = vmatprep.subr.mxu0 0.0
    %2005 = vmatpush1.msra.mxu0 0.0
    %2006 = vmatprep.subr.mxu0 0.0
    %2007 = vmatpush1.msra.mxu0 0.0
    %2008 = vmatprep.subr.mxu0 0.0
    %2009 = vmatpush1.msra.mxu0 0.0
    %2010 = vmatprep.subr.mxu0 0.0
    %2011 = vmatpush1.msra.mxu0 0.0
    %2012 = vmatprep.subr.mxu0 0.0
    %2013 = vmatpush1.msra.mxu0 0.0
    %2014 = vmatprep.subr.mxu0 0.0
    %2015 = vmatpush1.msra.mxu0 0.0
    %2016 = vmatprep.subr.mxu0 0.0
    %2017 = vmatpush1.msra.mxu0 0.0
    %2018 = vmatprep.subr.mxu0 0.0
    %2019 = vmatpush1.msra.mxu0 0.0
    %2020 = vmatprep.subr.mxu0 0.0
    %2021 = vmatpush1.msra.mxu0 0.0
    %2022 = vmatprep.subr.mxu0 0.0
    %2023 = vmatpush1.msra.mxu0 0.0
    %2024 = vmatprep.mubr.f32.mxu0 0.0
    %2025 = vmatmul.mubr.f32.gmra.mrb[0].mxu0 %v1958
    %v2026 = vpop.f32.mrb[0].mxu0
    %v2027 = vadd.f32 %v1955, %v2026
    %v2028 = vpop.f32.mrb[0].mxu0
    %2029 = vdwg.mxu0
    %v2030 = vmul.f32 %v2027, 1.442695
    %v2031 = vpow.pop %v2030
    %v2032 = vmul.f32 %v1145, %v2031
    %2034 = vrot.lane.b32.xlu0 %v2027, 120
    %v2035 = vpop.permute.xlu0 %2034
    %v2037 = vadd.f32 %v2032, %v2035
    %v2038 = vsel %vm88, %v2027, 0.0
    %2039 = vadd.xlane.f32.xlu0 %v2038
    %v2040 = vpop.xlane.xlu0 %2039
    %v2041 = vadd.f32 %v1592, %v2040
    %s2042 = scalar_lea.vmem %s12, 8
    %v2043 = vld [vmem:[%s2042] sm:$0xff]
    %s2044 = scalar_lea.vmem %s13, 8
    %v2045 = vld [vmem:[%s2044] sm:$0xff]
    %2046 = vmatprep.subr.mxu0 0.0
    %2047 = vmatpush1.msra.mxu0 %v2045
    %2048 = vmatprep.subr.mxu0 0.0
    %2049 = vmatpush1.msra.mxu0 0.0
    %2050 = vmatprep.subr.mxu0 0.0
    %2051 = vmatpush1.msra.mxu0 0.0
    %2052 = vmatprep.subr.mxu0 0.0
    %2053 = vmatpush1.msra.mxu0 0.0
    %2054 = vmatprep.subr.mxu0 0.0
    %2055 = vmatpush1.msra.mxu0 0.0
    %2056 = vmatprep.subr.mxu0 0.0
    %2057 = vmatpush1.msra.mxu0 0.0
    %2058 = vmatprep.subr.mxu0 0.0
    %2059 = vmatpush1.msra.mxu0 0.0
    %2060 = vmatprep.subr.mxu0 0.0
    %2061 = vmatpush1.msra.mxu0 0.0
    %2062 = vmatprep.subr.mxu0 0.0
    %2063 = vmatpush1.msra.mxu0 0.0
    %2064 = vmatprep.subr.mxu0 0.0
    %2065 = vmatpush1.msra.mxu0 0.0
    %2066 = vmatprep.subr.mxu0 0.0
    %2067 = vmatpush1.msra.mxu0 0.0
    %2068 = vmatprep.subr.mxu0 0.0
    %2069 = vmatpush1.msra.mxu0 0.0
    %2070 = vmatprep.subr.mxu0 0.0
    %2071 = vmatpush1.msra.mxu0 0.0
    %2072 = vmatprep.subr.mxu0 0.0
    %2073 = vmatpush1.msra.mxu0 0.0
    %2074 = vmatprep.subr.mxu0 0.0
    %2075 = vmatpush1.msra.mxu0 0.0
    %2076 = vmatprep.subr.mxu0 0.0
    %2077 = vmatpush1.msra.mxu0 0.0
    %2078 = vmatprep.subr.mxu0 0.0
    %2079 = vmatpush1.msra.mxu0 0.0
    %2080 = vmatprep.subr.mxu0 0.0
    %2081 = vmatpush1.msra.mxu0 0.0
    %2082 = vmatprep.subr.mxu0 0.0
    %2083 = vmatpush1.msra.mxu0 0.0
    %2084 = vmatprep.subr.mxu0 0.0
    %2085 = vmatpush1.msra.mxu0 0.0
    %2086 = vmatprep.subr.mxu0 0.0
    %2087 = vmatpush1.msra.mxu0 0.0
    %2088 = vmatprep.subr.mxu0 0.0
    %2089 = vmatpush1.msra.mxu0 0.0
    %2090 = vmatprep.subr.mxu0 0.0
    %2091 = vmatpush1.msra.mxu0 0.0
    %2092 = vmatprep.subr.mxu0 0.0
    %2093 = vmatpush1.msra.mxu0 0.0
    %2094 = vmatprep.subr.mxu0 0.0
    %2095 = vmatpush1.msra.mxu0 0.0
    %2096 = vmatprep.subr.mxu0 0.0
    %2097 = vmatpush1.msra.mxu0 0.0
    %2098 = vmatprep.subr.mxu0 0.0
    %2099 = vmatpush1.msra.mxu0 0.0
    %2100 = vmatprep.subr.mxu0 0.0
    %2101 = vmatpush1.msra.mxu0 0.0
    %2102 = vmatprep.subr.mxu0 0.0
    %2103 = vmatpush1.msra.mxu0 0.0
    %2104 = vmatprep.subr.mxu0 0.0
    %2105 = vmatpush1.msra.mxu0 0.0
    %2106 = vmatprep.subr.mxu0 0.0
    %2107 = vmatpush1.msra.mxu0 0.0
    %2108 = vmatprep.subr.mxu0 0.0
    %2109 = vmatpush1.msra.mxu0 0.0
    %2110 = vmatprep.mubr.f32.mxu0 0.0
    %2111 = vmatmul.mubr.f32.gmra.mrb[0].mxu0 %v1670
    %v2112 = vpop.f32.mrb[0].mxu0
    %v2113 = vadd.f32 0.0, %v2112
    %v2114 = vpop.f32.mrb[0].mxu0
    %2115 = vdwg.mxu0
    %v2117 = vsel %vm88, %v2037, 0
    %2119 = vmatprep.subr.mxu0 0.0
    %2120 = vmatpush1.msra.mxu0 %v2043
    %2121 = vmatprep.subr.mxu0 0.0
    %2122 = vmatpush1.msra.mxu0 0.0
    %2123 = vmatprep.subr.mxu0 0.0
    %2124 = vmatpush1.msra.mxu0 0.0
    %2125 = vmatprep.subr.mxu0 0.0
    %2126 = vmatpush1.msra.mxu0 0.0
    %2127 = vmatprep.subr.mxu0 0.0
    %2128 = vmatpush1.msra.mxu0 0.0
    %2129 = vmatprep.subr.mxu0 0.0
    %2130 = vmatpush1.msra.mxu0 0.0
    %2131 = vmatprep.subr.mxu0 0.0
    %2132 = vmatpush1.msra.mxu0 0.0
    %2133 = vmatprep.subr.mxu0 0.0
    %2134 = vmatpush1.msra.mxu0 0.0
    %2135 = vmatprep.subr.mxu0 0.0
    %2136 = vmatpush1.msra.mxu0 0.0
    %2137 = vmatprep.subr.mxu0 0.0
    %2138 = vmatpush1.msra.mxu0 0.0
    %2139 = vmatprep.subr.mxu0 0.0
    %2140 = vmatpush1.msra.mxu0 0.0
    %2141 = vmatprep.subr.mxu0 0.0
    %2142 = vmatpush1.msra.mxu0 0.0
    %2143 = vmatprep.subr.mxu0 0.0
    %2144 = vmatpush1.msra.mxu0 0.0
    %2145 = vmatprep.subr.mxu0 0.0
    %2146 = vmatpush1.msra.mxu0 0.0
    %2147 = vmatprep.subr.mxu0 0.0
    %2148 = vmatpush1.msra.mxu0 0.0
    %2149 = vmatprep.subr.mxu0 0.0
    %2150 = vmatpush1.msra.mxu0 0.0
    %2151 = vmatprep.subr.mxu0 0.0
    %2152 = vmatpush1.msra.mxu0 0.0
    %2153 = vmatprep.subr.mxu0 0.0
    %2154 = vmatpush1.msra.mxu0 0.0
    %2155 = vmatprep.subr.mxu0 0.0
    %2156 = vmatpush1.msra.mxu0 0.0
    %2157 = vmatprep.subr.mxu0 0.0
    %2158 = vmatpush1.msra.mxu0 0.0
    %2159 = vmatprep.subr.mxu0 0.0
    %2160 = vmatpush1.msra.mxu0 0.0
    %2161 = vmatprep.subr.mxu0 0.0
    %2162 = vmatpush1.msra.mxu0 0.0
    %2163 = vmatprep.subr.mxu0 0.0
    %2164 = vmatpush1.msra.mxu0 0.0
    %2165 = vmatprep.subr.mxu0 0.0
    %2166 = vmatpush1.msra.mxu0 0.0
    %2167 = vmatprep.subr.mxu0 0.0
    %2168 = vmatpush1.msra.mxu0 0.0
    %2169 = vmatprep.subr.mxu0 0.0
    %2170 = vmatpush1.msra.mxu0 0.0
    %2171 = vmatprep.subr.mxu0 0.0
    %2172 = vmatpush1.msra.mxu0 0.0
    %2173 = vmatprep.subr.mxu0 0.0
    %2174 = vmatpush1.msra.mxu0 0.0
    %2175 = vmatprep.subr.mxu0 0.0
    %2176 = vmatpush1.msra.mxu0 0.0
    %2177 = vmatprep.subr.mxu0 0.0
    %2178 = vmatpush1.msra.mxu0 0.0
    %2179 = vmatprep.subr.mxu0 0.0
    %2180 = vmatpush1.msra.mxu0 0.0
    %2181 = vmatprep.subr.mxu0 0.0
    %2182 = vmatpush1.msra.mxu0 0.0
    %2183 = vmatprep.mubr.f32.mxu0 0.0
    %2184 = vmatmul.mubr.f32.gmra.mrb[0].mxu0 %v2117
    %v2185 = vpop.f32.mrb[0].mxu0
    %v2186 = vadd.f32 %v2113, %v2185
    %v2187 = vpop.f32.mrb[0].mxu0
    %2188 = vdwg.mxu0
    %vm2189 = vcmask 130048
    %2190 = vst.msk [vmem:[#allocation6] sm:$0xff] %vm2189, %v2186
    %s2191 = sld [smem:[#allocation2]]
    %v2192 = vstv %s2191
    %v2193 = vadd.f32 %v2041, %v2192
    %vm2194 = vcmask 7168
    %2195 = vst.msk [vmem:[%s15] sm:$0xff] %vm2194, %v2193
    // Predicated region
    $region62: #{tpu_custom_call.1} parent=1 // pred_check
      _
    $region63: #{tpu_custom_call.1} parent=1 // pred_check_branch
      %2197 = sbr.rel (0) target = $region65
    $region64: #{tpu_custom_call.1} parent=1 // pred_region
      %s2199 = ssub.s32 128, 128
      %2200 = vsyncadd [#allocation5], %s2199
      %s2202 = sshll.u32 [#allocation6], 4
      %s2203 = int_to_ptr.vmem [resolvable:$true] %s2202
      %2205 = dma.vmem_to_hbm [thread:$0]  %s2203, 128, %s14, [#allocation5]
    $region65: #{tpu_custom_call.1} parent=1 // pred_fallthru
      _
    // Predicated region
    $region66: #{tpu_custom_call.1} parent=1 // pred_check
      _
    $region67: #{tpu_custom_call.1} parent=1 // pred_check_branch
      %2207 = sbr.rel (0) target = $region69
    $region68: #{tpu_custom_call.1} parent=1 // pred_region
      _
    $region69: #{tpu_custom_call.1} parent=1 // pred_fallthru
      _
    // Predicated region
    $region70: #{tpu_custom_call.1} parent=1 // pred_check
      _
    $region71: #{tpu_custom_call.1} parent=1 // pred_check_branch
      %2209 = sbr.rel (0) target = $region73
    $region72: #{tpu_custom_call.1} parent=1 // pred_region
      %2210 = dma.done [#allocation5], 128
    $region73: #{tpu_custom_call.1} parent=1 // pred_fallthru
      _
    // Predicated region
    $region74: #{tpu_custom_call.1} parent=1 // pred_check
      _
    $region75: #{tpu_custom_call.1} parent=1 // pred_check_branch
      %2212 = sbr.rel (0) target = $region77
    $region76: #{tpu_custom_call.1} parent=1 // pred_region
      _
    $region77: #{tpu_custom_call.1} parent=1 // pred_fallthru
      _
    %2213 = vsyncpa [#allocation4], 1
    %2214 = vsyncpa [#allocation5], 1

</llo_original>
